<compile_context>
chip_gen: v7x
topology: tpu7x:2x2x1
jax: 0.10.0
libtpu: 0.0.40
codegen_flags: <defaults>
</compile_context>

<pallas_src>
import functools
import math

import jax
import jax.numpy as jnp
from jax.experimental import pallas as pl
from jax.experimental.pallas import tpu as pltpu

MATMUL_TILE = 1024   # pixel (lane) tile for the conv matmul kernels
EW_TILE = 2048       # pixel (lane) tile for the fused elementwise kernels
LEAKY_SLOPE = 0.2
BN_EPS = 1e-5


# ------------------------------ Pallas kernels ------------------------------

def _conv_matmul_kernel(p_ref, w_ref, b_ref, *out_refs, seg_channels, total_cols, tile):
    """acc[c, m] = sum_k w[c, k] * patches[k, m] + b[c]  (f32 accumulation on MXU).

    Also emits per-tile per-channel sum and sum-of-squares (for fused BatchNorm
    batch statistics).  The combined channel block is split into per-conv
    segment outputs (weights of convs sharing the input are concatenated)."""
    y_refs = out_refs[:-1]
    stats_ref = out_refs[-1]

    acc = jnp.dot(w_ref[...], p_ref[...], preferred_element_type=jnp.float32)
    acc = acc + b_ref[...]                                   # bias (Ctot, 1) broadcast
    ctot = acc.shape[0]

    # Mask pixels past the end of the array (ragged last tile) out of the stats.
    col0 = pl.program_id(0) * tile
    cid = jax.lax.broadcasted_iota(jnp.int32, (1, tile), 1) + col0
    ym = jnp.where(cid < total_cols, acc, 0.0)
    s1 = jnp.sum(ym, axis=1, keepdims=True)                  # (Ctot, 1)
    s2 = jnp.sum(ym * ym, axis=1, keepdims=True)
    s = jnp.concatenate([s1, s2], axis=0)                    # (2*Ctot, 1)
    stats_ref[...] = jnp.broadcast_to(s[None], (1, 2 * ctot, 128))

    off = 0
    for c, y_ref in zip(seg_channels, y_refs):
        y_ref[...] = acc[off:off + c, :]
        off += c


def _bn_act_kernel(y_ref, sc_ref, sh_ref, o_ref, *, act):
    y = y_ref[...] * sc_ref[...] + sh_ref[...]
    if act:
        y = jnp.where(y > 0, y, LEAKY_SLOPE * y)
    o_ref[...] = y


def _res_tail_kernel(y2_ref, y3_ref, sc2_ref, sh2_ref, sc3_ref, sh3_ref, o_ref, *, act):
    a = y2_ref[...] * sc2_ref[...] + sh2_ref[...]
    b = y3_ref[...] * sc3_ref[...] + sh3_ref[...]
    if act:
        a = jnp.where(a > 0, a, LEAKY_SLOPE * a)
        b = jnp.where(b > 0, b, LEAKY_SLOPE * b)
    o_ref[...] = a + b


def _res_tail_reparam_kernel(y2_ref, y3_ref, mu_ref, eps_ref,
                             sc2_ref, sh2_ref, sc3_ref, sh3_ref,
                             std_ref, z_ref):
    # std branch of the latent (act=False) fused with the reparameterization.
    std = (y2_ref[...] * sc2_ref[...] + sh2_ref[...]) + \
          (y3_ref[...] * sc3_ref[...] + sh3_ref[...])
    std_ref[...] = std
    z_ref[...] = mu_ref[...] + eps_ref[...] * jnp.exp(std)


# --------------------------- generic Pallas callers --------------------------

def _ew_call(kernel, col_inputs, vec_inputs, num_out):
    """Fused elementwise call over (C, M) channels-first activations.

    col_inputs: (C, M) arrays tiled along the lane (pixel) axis.
    vec_inputs: (C, 1) per-channel scale/shift columns, broadcast inside."""
    C, M = col_inputs[0].shape
    tile = min(EW_TILE, M)
    grid_n = (M + tile - 1) // tile
    in_specs = ([pl.BlockSpec((a.shape[0], tile), lambda i: (0, i)) for a in col_inputs]
                + [pl.BlockSpec((v.shape[0], 1), lambda i: (0, 0)) for v in vec_inputs])
    out_shape = tuple(jax.ShapeDtypeStruct((C, M), jnp.float32) for _ in range(num_out))
    out_specs = tuple(pl.BlockSpec((C, tile), lambda i: (0, i)) for _ in range(num_out))
    return pl.pallas_call(
        kernel,
        grid=(grid_n,),
        in_specs=in_specs,
        out_specs=out_specs,
        out_shape=out_shape,
        compiler_params=pltpu.CompilerParams(dimension_semantics=("parallel",)),
    )(*col_inputs, *vec_inputs)


def conv_group(x_cf, convs, stride):
    """x_cf: (Cin, N, D, H, W) float32 channels-first activation.
    convs: list of (w, b) with w (3,3,3,Cin,Cout), b (Cout,).  All convs in the
    group share the same input and stride, so one im2col + one MXU matmul serves
    all of them (weights concatenated along the output-channel axis).
    Returns one dict per conv: raw conv output (Cout, M) plus fused BN sums."""
    sd, sh, sw = stride
    Cin, N, D, H, W = x_cf.shape
    Do = (D + 2 - 3) // sd + 1
    Ho = (H + 2 - 3) // sh + 1
    Wo = (W + 2 - 3) // sw + 1
    M = N * Do * Ho * Wo
    K = 27 * Cin

    # im2col (tap-major, then input channel), bf16, built ONCE for the group.
    xp = jnp.pad(x_cf.astype(jnp.bfloat16),
                 ((0, 0), (0, 0), (1, 1), (1, 1), (1, 1)))
    cols = []
    for kd in range(3):
        for kh in range(3):
            for kw in range(3):
                cols.append(
                    xp[:, :,
                       kd: kd + (Do - 1) * sd + 1: sd,
                       kh: kh + (Ho - 1) * sh + 1: sh,
                       kw: kw + (Wo - 1) * sw + 1: sw])
    patches = jnp.stack(cols, axis=0).reshape(K, M)          # (27*Cin, M) bf16

    seg_channels = tuple(int(w.shape[-1]) for w, _ in convs)
    ctot = sum(seg_channels)
    wmat = jnp.concatenate(
        [w.reshape(27, Cin, c).transpose(2, 0, 1).reshape(c, K)
         for (w, _), c in zip(convs, seg_channels)], axis=0).astype(jnp.bfloat16)
    bias = jnp.concatenate([b for _, b in convs]).astype(jnp.float32).reshape(ctot, 1)

    tile = min(MATMUL_TILE, M)
    grid_n = (M + tile - 1) // tile

    in_specs = [
        pl.BlockSpec((K, tile), lambda i: (0, i)),
        pl.BlockSpec((ctot, K), lambda i: (0, 0)),
        pl.BlockSpec((ctot, 1), lambda i: (0, 0)),
    ]
    out_shape = tuple(jax.ShapeDtypeStruct((c, M), jnp.float32) for c in seg_channels) \
        + (jax.ShapeDtypeStruct((grid_n, 2 * ctot, 128), jnp.float32),)
    out_specs = tuple(pl.BlockSpec((c, tile), lambda i: (0, i)) for c in seg_channels) \
        + (pl.BlockSpec((1, 2 * ctot, 128), lambda i: (i, 0, 0)),)

    kernel = functools.partial(_conv_matmul_kernel, seg_channels=seg_channels,
                               total_cols=M, tile=tile)
    outs = pl.pallas_call(
        kernel,
        grid=(grid_n,),
        in_specs=in_specs,
        out_specs=out_specs,
        out_shape=out_shape,
        compiler_params=pltpu.CompilerParams(dimension_semantics=("parallel",)),
    )(patches, wmat, bias)

    ys, stats = outs[:-1], outs[-1]
    stat_sums = jnp.sum(stats[:, :, 0], axis=0)              # (2*Ctot,)
    results, off = [], 0
    for c, y in zip(seg_channels, ys):
        results.append(dict(y=y, C=c, M=M, dims=(N, Do, Ho, Wo),
                            s1=stat_sums[off:off + c],
                            s2=stat_sums[ctot + off: ctot + off + c]))
        off += c
    return results


# ------------------------------ layer wrappers -------------------------------

def _bn_scale_shift(res, gamma, beta):
    """Training-mode BatchNorm (biased batch variance) folded into scale/shift."""
    mean = res['s1'] / res['M']
    var = jnp.maximum(res['s2'] / res['M'] - mean * mean, 0.0)
    scale = gamma * jax.lax.rsqrt(var + BN_EPS)
    shift = beta - mean * scale
    return (scale.reshape(-1, 1).astype(jnp.float32),
            shift.reshape(-1, 1).astype(jnp.float32))


def conv_bn_act(x_cf, conv_p, bn_p, stride, act):
    (res,) = conv_group(x_cf, [conv_p], stride)
    sc, sh = _bn_scale_shift(res, *bn_p)
    (out,) = _ew_call(functools.partial(_bn_act_kernel, act=act), [res['y']], [sc, sh], 1)
    N, Do, Ho, Wo = res['dims']
    return out.reshape(res['C'], N, Do, Ho, Wo)


def _resblock_rest(p, r1, r3, act, reparam=None):
    """Finish a ResBlockDown given the fused conv1/conv3 matmul results r1, r3:
    bn1+LeakyReLU -> conv2 -> fused (bn2 [+act]) + (bn3 [+act]) + residual add.
    With reparam=(mu_cf, eps_cf) the reparameterization is fused into the tail."""
    sc1, sh1 = _bn_scale_shift(r1, *p['bn1'])
    (c1,) = _ew_call(functools.partial(_bn_act_kernel, act=True), [r1['y']], [sc1, sh1], 1)
    N, Do, Ho, Wo = r1['dims']
    (r2,) = conv_group(c1.reshape(r1['C'], N, Do, Ho, Wo), [p['conv2']], (1, 1, 1))

    sc2, sh2 = _bn_scale_shift(r2, *p['bn2'])
    sc3, sh3 = _bn_scale_shift(r3, *p['bn3'])
    vecs = [sc2, sh2, sc3, sh3]

    if reparam is None:
        (out,) = _ew_call(functools.partial(_res_tail_kernel, act=act),
                          [r2['y'], r3['y']], vecs, 1)
        return out, r2
    mu_cf, eps_cf = reparam
    std, z = _ew_call(_res_tail_reparam_kernel,
                      [r2['y'], r3['y'], mu_cf, eps_cf], vecs, 2)
    return (std, z), r2


# ------------------------------ model structure ------------------------------

def encoder_forward(params, x, eps):
    """x: (N, C, D, H, W) NCDHW; eps: (N, 2*gf, D, H//4, W//4) NCDHW noise.
    Returns (z, mu, std) in NCDHW, matching Encoder.forward."""
    x_cf = jnp.transpose(x, (1, 0, 2, 3, 4))                 # -> (C, N, D, H, W)
    h = conv_bn_act(x_cf, params['conv1'], params['bn0'], (1, 1, 1), True)

    # res1: its conv1 and conv3 share input h and stride -> one fused matmul.
    r1c1, r1c3 = conv_group(h, [params['res1']['conv1'], params['res1']['conv3']],
                            (1, 2, 2))
    z_flat, zmeta = _resblock_rest(params['res1'], r1c1, r1c3, act=True)
    Nz, Dz, Hz, Wz = zmeta['dims']
    z1 = z_flat.reshape(zmeta['C'], Nz, Dz, Hz, Wz)

    # TODO(synk): the reference forward -> encode_1 uses the undefined attribute
    # `self.res2` and res2_stdev expects 2*gf input channels; the only
    # channel-consistent branch pair is res3_mu / res3_stdev, used here.
    # All four strided convs of res3_mu / res3_stdev consume the same z:
    # run them as ONE fused matmul.
    mc1, mc3, sdc1, sdc3 = conv_group(
        z1,
        [params['res3_mu']['conv1'], params['res3_mu']['conv3'],
         params['res3_stdev']['conv1'], params['res3_stdev']['conv3']],
        (1, 2, 2))

    mu_flat, mmeta = _resblock_rest(params['res3_mu'], mc1, mc3, act=True)

    Cl = mmeta['C']
    Nl, Dl, Hl, Wl = mmeta['dims']
    eps_cf = jnp.transpose(eps, (1, 0, 2, 3, 4)).reshape(Cl, Nl * Dl * Hl * Wl)
    (std_flat, zz_flat), _ = _resblock_rest(params['res3_stdev'], sdc1, sdc3,
                                            act=False, reparam=(mu_flat, eps_cf))

    def to_ncdhw(t):
        return jnp.transpose(t.reshape(Cl, Nl, Dl, Hl, Wl), (1, 0, 2, 3, 4))

    return to_ncdhw(zz_flat), to_ncdhw(mu_flat), to_ncdhw(std_flat)


# ------------------------------ parameter init -------------------------------

def init_conv(key, cin, cout):
    k = 1.0 / math.sqrt(cin * 27)
    kw, kb = jax.random.split(key)
    w = jax.random.uniform(kw, (3, 3, 3, cin, cout), minval=-k, maxval=k,
                           dtype=jnp.float32)
    b = jax.random.uniform(kb, (cout,), minval=-k, maxval=k, dtype=jnp.float32)
    return w, b


def init_bn(c):
    return jnp.ones((c,), jnp.float32), jnp.zeros((c,), jnp.float32)


def init_encoder(key, n_channels, gf):
    keys = iter(jax.random.split(key, 16))

    def resblock(fin, fout):
        return dict(
            conv1=init_conv(next(keys), fin, fin), bn1=init_bn(fin),
            conv2=init_conv(next(keys), fin, fout), bn2=init_bn(fout),
            conv3=init_conv(next(keys), fin, fout), bn3=init_bn(fout),
        )

    return dict(
        conv1=init_conv(next(keys), n_channels, gf), bn0=init_bn(gf),
        res1=resblock(gf, gf),
        res2_mu=resblock(2 * gf, 2 * gf),      # defined in __init__, not on forward path
        res2_stdev=resblock(2 * gf, 2 * gf),
        res3_mu=resblock(gf, 2 * gf),
        res3_stdev=resblock(gf, 2 * gf),
    )


# ----------------------------------- main ------------------------------------

if __name__ == "__main__":
    key = jax.random.PRNGKey(0)
    n_channels, gf_dim = 1, 8
    N, D, H, W = 2, 4, 16, 16

    kparam, kx, keps = jax.random.split(key, 3)
    params = init_encoder(kparam, n_channels, gf_dim)
    x = jax.random.normal(kx, (N, n_channels, D, H, W), dtype=jnp.float32)
    # eps matches the latent shape after two (1,2,2) downsamples (NCDHW).
    eps = jax.random.normal(keps, (N, 2 * gf_dim, D, H // 4, W // 4),
                            dtype=jnp.float32)

    fwd = jax.jit(encoder_forward)
    z, mu, std = fwd(params, x, eps)
    jax.block_until_ready((z, mu, std))

    assert z.shape == (N, 2 * gf_dim, D, H // 4, W // 4), z.shape
    assert mu.shape == z.shape and std.shape == z.shape
    assert jnp.all(jnp.isfinite(z)) and jnp.all(jnp.isfinite(mu)) and jnp.all(jnp.isfinite(std))
    print("KERNEL_OK")
</pallas_src>

<mosaic_0001>
module attributes {stable_mosaic.version = 11 : i64} {
  func.func @_conv_matmul_kernel(%arg0: i32, %arg1: memref<27x1024xbf16, #tpu.memory_space<vmem>>, %arg2: memref<8x27xbf16, #tpu.memory_space<vmem>>, %arg3: memref<8x1xf32, #tpu.memory_space<vmem>>, %arg4: memref<8x1024xf32, #tpu.memory_space<vmem>>, %arg5: memref<1x16x128xf32, #tpu.memory_space<vmem>>) attributes {dimension_semantics = [#tpu.dimension_semantics<parallel>], iteration_bounds = array<i64: 2>, scalar_prefetch = 0 : i64, scratch_operands = 0 : i64, tpu.core_type = #tpu.core_type<tc>, window_params = [{transform_indices = @transform_0, window_bounds = array<i64: 27, 1024>}, {pipeline_mode = #tpu.pipeline_mode<synchronous>, transform_indices = @transform_1, window_bounds = array<i64: 8, 27>}, {pipeline_mode = #tpu.pipeline_mode<synchronous>, transform_indices = @transform_2, window_bounds = array<i64: 8, 1>}, {transform_indices = @transform_3, window_bounds = array<i64: 8, 1024>}, {transform_indices = @transform_4, window_bounds = array<i64: 1, 16, 128>}]} {
    %c0 = arith.constant 0 : index
    %c0_0 = arith.constant 0 : index
    %0 = vector.load %arg2[%c0, %c0_0] : memref<8x27xbf16, #tpu.memory_space<vmem>>, vector<8x27xbf16>
    %c0_1 = arith.constant 0 : index
    %c0_2 = arith.constant 0 : index
    %1 = vector.load %arg1[%c0_1, %c0_2] : memref<27x1024xbf16, #tpu.memory_space<vmem>>, vector<27x1024xbf16>
    %cst = arith.constant dense<0.000000e+00> : vector<8x1024xf32>
    %2 = tpu.matmul %0, %1, %cst {dimension_numbers = #tpu.dot_dimension_numbers<[1], [0], [0], [1], [0, 0, 1, 1], [], []>} : vector<8x27xbf16>, vector<27x1024xbf16>, vector<8x1024xf32> -> vector<8x1024xf32>
    %c0_3 = arith.constant 0 : index
    %c0_4 = arith.constant 0 : index
    %3 = vector.load %arg3[%c0_3, %c0_4] : memref<8x1xf32, #tpu.memory_space<vmem>>, vector<8x1xf32>
    %4 = vector.broadcast %3 : vector<8x1xf32> to vector<8x1024xf32>
    %5 = arith.addf %2, %4 : vector<8x1024xf32>
    %c1024_i32 = arith.constant 1024 : i32
    %6 = arith.muli %arg0, %c1024_i32 : i32
    %7 = tpu.iota {dimensions = array<i32: 1>} : vector<1x1024xi32>
    %8 = vector.broadcast %6 : i32 to vector<1x1024xi32>
    %9 = arith.addi %7, %8 : vector<1x1024xi32>
    %c2048_i32 = arith.constant 2048 : i32
    %10 = vector.broadcast %c2048_i32 : i32 to vector<1x1024xi32>
    %11 = arith.cmpi slt, %9, %10 : vector<1x1024xi32>
    %cst_5 = arith.constant 0.000000e+00 : f32
    %12 = vector.shape_cast %11 : vector<1x1024xi1> to vector<1x1024xi1>
    %13 = vector.broadcast %12 : vector<1x1024xi1> to vector<8x1024xi1>
    %14 = vector.broadcast %cst_5 : f32 to vector<8x1024xf32>
    %15 = arith.select %13, %5, %14 : vector<8x1024xi1>, vector<8x1024xf32>
    %cst_6 = arith.constant dense<0.000000e+00> : vector<8xf32>
    %16 = vector.multi_reduction <add>, %15, %cst_6 [1] : vector<8x1024xf32> to vector<8xf32>
    %17 = vector.shape_cast %16 : vector<8xf32> to vector<8x1xf32>
    %18 = arith.mulf %15, %15 : vector<8x1024xf32>
    %cst_7 = arith.constant dense<0.000000e+00> : vector<8xf32>
    %19 = vector.multi_reduction <add>, %18, %cst_7 [1] : vector<8x1024xf32> to vector<8xf32>
    %20 = vector.shape_cast %19 : vector<8xf32> to vector<8x1xf32>
    %21 = tpu.concatenate %17, %20 in 0 : vector<8x1xf32>, vector<8x1xf32> -> vector<16x1xf32>
    %22 = vector.shape_cast %21 : vector<16x1xf32> to vector<1x16x1xf32>
    %23 = vector.shape_cast %22 : vector<1x16x1xf32> to vector<1x16x1xf32>
    %24 = vector.broadcast %23 : vector<1x16x1xf32> to vector<1x16x128xf32>
    %c0_8 = arith.constant 0 : index
    %c0_9 = arith.constant 0 : index
    %c0_10 = arith.constant 0 : index
    %25 = vector.load %arg5[%c0_8, %c0_9, %c0_10] : memref<1x16x128xf32, #tpu.memory_space<vmem>>, vector<1x16x128xf32>
    tpu.vector_store %arg5[%c0_8, %c0_9, %c0_10], %24 {strides = array<i32>} : memref<1x16x128xf32, #tpu.memory_space<vmem>>, vector<1x16x128xf32>,
    %c0_11 = arith.constant 0 : index
    %c0_12 = arith.constant 0 : index
    %26 = vector.load %arg4[%c0_11, %c0_12] : memref<8x1024xf32, #tpu.memory_space<vmem>>, vector<8x1024xf32>
    tpu.vector_store %arg4[%c0_11, %c0_12], %5 {strides = array<i32>} : memref<8x1024xf32, #tpu.memory_space<vmem>>, vector<8x1024xf32>,
    return
  }
  func.func @transform_0(%arg0: i32) -> (i32, i32) {
    %c0_i32 = arith.constant 0 : i32
    %c0_i32_0 = arith.constant 0 : i32
    return %c0_i32, %arg0 : i32, i32
  }
  func.func @transform_1(%arg0: i32) -> (i32, i32) {
    %c0_i32 = arith.constant 0 : i32
    %c0_i32_0 = arith.constant 0 : i32
    %c0_i32_1 = arith.constant 0 : i32
    return %c0_i32, %c0_i32_0 : i32, i32
  }
  func.func @transform_2(%arg0: i32) -> (i32, i32) {
    %c0_i32 = arith.constant 0 : i32
    %c0_i32_0 = arith.constant 0 : i32
    %c0_i32_1 = arith.constant 0 : i32
    return %c0_i32, %c0_i32_0 : i32, i32
  }
  func.func @transform_3(%arg0: i32) -> (i32, i32) {
    %c0_i32 = arith.constant 0 : i32
    %c0_i32_0 = arith.constant 0 : i32
    return %c0_i32, %arg0 : i32, i32
  }
  func.func @transform_4(%arg0: i32) -> (i32, i32, i32) {
    %c0_i32 = arith.constant 0 : i32
    %c0_i32_0 = arith.constant 0 : i32
    %c0_i32_1 = arith.constant 0 : i32
    return %arg0, %c0_i32, %c0_i32_0 : i32, i32, i32
  }
}

module attributes {stable_mosaic.version = 11 : i64} {
  func.func @_bn_act_kernel(%arg0: i32, %arg1: memref<8x2048xf32, #tpu.memory_space<vmem>>, %arg2: memref<8x1xf32, #tpu.memory_space<vmem>>, %arg3: memref<8x1xf32, #tpu.memory_space<vmem>>, %arg4: memref<8x2048xf32, #tpu.memory_space<vmem>>) attributes {dimension_semantics = [#tpu.dimension_semantics<parallel>], iteration_bounds = array<i64: 1>, scalar_prefetch = 0 : i64, scratch_operands = 0 : i64, tpu.core_type = #tpu.core_type<tc>, window_params = [{transform_indices = @transform_0, window_bounds = array<i64: 8, 2048>}, {pipeline_mode = #tpu.pipeline_mode<synchronous>, transform_indices = @transform_1, window_bounds = array<i64: 8, 1>}, {pipeline_mode = #tpu.pipeline_mode<synchronous>, transform_indices = @transform_2, window_bounds = array<i64: 8, 1>}, {transform_indices = @transform_3, window_bounds = array<i64: 8, 2048>}]} {
    %c0 = arith.constant 0 : index
    %c0_0 = arith.constant 0 : index
    %0 = vector.load %arg1[%c0, %c0_0] : memref<8x2048xf32, #tpu.memory_space<vmem>>, vector<8x2048xf32>
    %c0_1 = arith.constant 0 : index
    %c0_2 = arith.constant 0 : index
    %1 = vector.load %arg2[%c0_1, %c0_2] : memref<8x1xf32, #tpu.memory_space<vmem>>, vector<8x1xf32>
    %2 = vector.broadcast %1 : vector<8x1xf32> to vector<8x2048xf32>
    %3 = arith.mulf %0, %2 : vector<8x2048xf32>
    %c0_3 = arith.constant 0 : index
    %c0_4 = arith.constant 0 : index
    %4 = vector.load %arg3[%c0_3, %c0_4] : memref<8x1xf32, #tpu.memory_space<vmem>>, vector<8x1xf32>
    %5 = vector.broadcast %4 : vector<8x1xf32> to vector<8x2048xf32>
    %6 = arith.addf %3, %5 : vector<8x2048xf32>
    %cst = arith.constant 0.000000e+00 : f32
    %7 = vector.broadcast %cst : f32 to vector<8x2048xf32>
    %8 = arith.cmpf ogt, %6, %7 : vector<8x2048xf32>
    %cst_5 = arith.constant 2.000000e-01 : f32
    %9 = vector.broadcast %cst_5 : f32 to vector<8x2048xf32>
    %10 = arith.mulf %9, %6 : vector<8x2048xf32>
    %11 = arith.select %8, %6, %10 : vector<8x2048xi1>, vector<8x2048xf32>
    %c0_6 = arith.constant 0 : index
    %c0_7 = arith.constant 0 : index
    %12 = vector.load %arg4[%c0_6, %c0_7] : memref<8x2048xf32, #tpu.memory_space<vmem>>, vector<8x2048xf32>
    tpu.vector_store %arg4[%c0_6, %c0_7], %11 {strides = array<i32>} : memref<8x2048xf32, #tpu.memory_space<vmem>>, vector<8x2048xf32>,
    return
  }
  func.func @transform_0(%arg0: i32) -> (i32, i32) {
    %c0_i32 = arith.constant 0 : i32
    %c0_i32_0 = arith.constant 0 : i32
    return %c0_i32, %arg0 : i32, i32
  }
  func.func @transform_1(%arg0: i32) -> (i32, i32) {
    %c0_i32 = arith.constant 0 : i32
    %c0_i32_0 = arith.constant 0 : i32
    %c0_i32_1 = arith.constant 0 : i32
    return %c0_i32, %c0_i32_0 : i32, i32
  }
  func.func @transform_2(%arg0: i32) -> (i32, i32) {
    %c0_i32 = arith.constant 0 : i32
    %c0_i32_0 = arith.constant 0 : i32
    %c0_i32_1 = arith.constant 0 : i32
    return %c0_i32, %c0_i32_0 : i32, i32
  }
  func.func @transform_3(%arg0: i32) -> (i32, i32) {
    %c0_i32 = arith.constant 0 : i32
    %c0_i32_0 = arith.constant 0 : i32
    return %c0_i32, %arg0 : i32, i32
  }
}

module attributes {stable_mosaic.version = 11 : i64} {
  func.func @_conv_matmul_kernel(%arg0: i32, %arg1: memref<216x512xbf16, #tpu.memory_space<vmem>>, %arg2: memref<16x216xbf16, #tpu.memory_space<vmem>>, %arg3: memref<16x1xf32, #tpu.memory_space<vmem>>, %arg4: memref<8x512xf32, #tpu.memory_space<vmem>>, %arg5: memref<8x512xf32, #tpu.memory_space<vmem>>, %arg6: memref<1x32x128xf32, #tpu.memory_space<vmem>>) attributes {dimension_semantics = [#tpu.dimension_semantics<parallel>], iteration_bounds = array<i64: 1>, scalar_prefetch = 0 : i64, scratch_operands = 0 : i64, tpu.core_type = #tpu.core_type<tc>, window_params = [{transform_indices = @transform_0, window_bounds = array<i64: 216, 512>}, {pipeline_mode = #tpu.pipeline_mode<synchronous>, transform_indices = @transform_1, window_bounds = array<i64: 16, 216>}, {pipeline_mode = #tpu.pipeline_mode<synchronous>, transform_indices = @transform_2, window_bounds = array<i64: 16, 1>}, {transform_indices = @transform_3, window_bounds = array<i64: 8, 512>}, {transform_indices = @transform_4, window_bounds = array<i64: 8, 512>}, {transform_indices = @transform_5, window_bounds = array<i64: 1, 32, 128>}]} {
    %c0 = arith.constant 0 : index
    %c0_0 = arith.constant 0 : index
    %0 = vector.load %arg2[%c0, %c0_0] : memref<16x216xbf16, #tpu.memory_space<vmem>>, vector<16x216xbf16>
    %c0_1 = arith.constant 0 : index
    %c0_2 = arith.constant 0 : index
    %1 = vector.load %arg1[%c0_1, %c0_2] : memref<216x512xbf16, #tpu.memory_space<vmem>>, vector<216x512xbf16>
    %cst = arith.constant dense<0.000000e+00> : vector<16x512xf32>
    %2 = tpu.matmul %0, %1, %cst {dimension_numbers = #tpu.dot_dimension_numbers<[1], [0], [0], [1], [0, 0, 1, 1], [], []>} : vector<16x216xbf16>, vector<216x512xbf16>, vector<16x512xf32> -> vector<16x512xf32>
    %c0_3 = arith.constant 0 : index
    %c0_4 = arith.constant 0 : index
    %3 = vector.load %arg3[%c0_3, %c0_4] : memref<16x1xf32, #tpu.memory_space<vmem>>, vector<16x1xf32>
    %4 = vector.broadcast %3 : vector<16x1xf32> to vector<16x512xf32>
    %5 = arith.addf %2, %4 : vector<16x512xf32>
    %c512_i32 = arith.constant 512 : i32
    %6 = arith.muli %arg0, %c512_i32 : i32
    %7 = tpu.iota {dimensions = array<i32: 1>} : vector<1x512xi32>
    %8 = vector.broadcast %6 : i32 to vector<1x512xi32>
    %9 = arith.addi %7, %8 : vector<1x512xi32>
    %c512_i32_5 = arith.constant 512 : i32
    %10 = vector.broadcast %c512_i32_5 : i32 to vector<1x512xi32>
    %11 = arith.cmpi slt, %9, %10 : vector<1x512xi32>
    %cst_6 = arith.constant 0.000000e+00 : f32
    %12 = vector.shape_cast %11 : vector<1x512xi1> to vector<1x512xi1>
    %13 = vector.broadcast %12 : vector<1x512xi1> to vector<16x512xi1>
    %14 = vector.broadcast %cst_6 : f32 to vector<16x512xf32>
    %15 = arith.select %13, %5, %14 : vector<16x512xi1>, vector<16x512xf32>
    %cst_7 = arith.constant dense<0.000000e+00> : vector<16xf32>
    %16 = vector.multi_reduction <add>, %15, %cst_7 [1] : vector<16x512xf32> to vector<16xf32>
    %17 = vector.shape_cast %16 : vector<16xf32> to vector<16x1xf32>
    %18 = arith.mulf %15, %15 : vector<16x512xf32>
    %cst_8 = arith.constant dense<0.000000e+00> : vector<16xf32>
    %19 = vector.multi_reduction <add>, %18, %cst_8 [1] : vector<16x512xf32> to vector<16xf32>
    %20 = vector.shape_cast %19 : vector<16xf32> to vector<16x1xf32>
    %21 = tpu.concatenate %17, %20 in 0 : vector<16x1xf32>, vector<16x1xf32> -> vector<32x1xf32>
    %22 = vector.shape_cast %21 : vector<32x1xf32> to vector<1x32x1xf32>
    %23 = vector.shape_cast %22 : vector<1x32x1xf32> to vector<1x32x1xf32>
    %24 = vector.broadcast %23 : vector<1x32x1xf32> to vector<1x32x128xf32>
    %c0_9 = arith.constant 0 : index
    %c0_10 = arith.constant 0 : index
    %c0_11 = arith.constant 0 : index
    %25 = vector.load %arg6[%c0_9, %c0_10, %c0_11] : memref<1x32x128xf32, #tpu.memory_space<vmem>>, vector<1x32x128xf32>
    tpu.vector_store %arg6[%c0_9, %c0_10, %c0_11], %24 {strides = array<i32>} : memref<1x32x128xf32, #tpu.memory_space<vmem>>, vector<1x32x128xf32>,
    %26 = vector.extract_strided_slice %5 {offsets = [0, 0], sizes = [8, 512], strides = [1, 1]} : vector<16x512xf32> to vector<8x512xf32>
    %c0_12 = arith.constant 0 : index
    %c0_13 = arith.constant 0 : index
    %27 = vector.load %arg4[%c0_12, %c0_13] : memref<8x512xf32, #tpu.memory_space<vmem>>, vector<8x512xf32>
    tpu.vector_store %arg4[%c0_12, %c0_13], %26 {strides = array<i32>} : memref<8x512xf32, #tpu.memory_space<vmem>>, vector<8x512xf32>,
    %28 = vector.extract_strided_slice %5 {offsets = [8, 0], sizes = [8, 512], strides = [1, 1]} : vector<16x512xf32> to vector<8x512xf32>
    %c0_14 = arith.constant 0 : index
    %c0_15 = arith.constant 0 : index
    %29 = vector.load %arg5[%c0_14, %c0_15] : memref<8x512xf32, #tpu.memory_space<vmem>>, vector<8x512xf32>
    tpu.vector_store %arg5[%c0_14, %c0_15], %28 {strides = array<i32>} : memref<8x512xf32, #tpu.memory_space<vmem>>, vector<8x512xf32>,
    return
  }
  func.func @transform_0(%arg0: i32) -> (i32, i32) {
    %c0_i32 = arith.constant 0 : i32
    %c0_i32_0 = arith.constant 0 : i32
    return %c0_i32, %arg0 : i32, i32
  }
  func.func @transform_1(%arg0: i32) -> (i32, i32) {
    %c0_i32 = arith.constant 0 : i32
    %c0_i32_0 = arith.constant 0 : i32
    %c0_i32_1 = arith.constant 0 : i32
    return %c0_i32, %c0_i32_0 : i32, i32
  }
  func.func @transform_2(%arg0: i32) -> (i32, i32) {
    %c0_i32 = arith.constant 0 : i32
    %c0_i32_0 = arith.constant 0 : i32
    %c0_i32_1 = arith.constant 0 : i32
    return %c0_i32, %c0_i32_0 : i32, i32
  }
  func.func @transform_3(%arg0: i32) -> (i32, i32) {
    %c0_i32 = arith.constant 0 : i32
    %c0_i32_0 = arith.constant 0 : i32
    return %c0_i32, %arg0 : i32, i32
  }
  func.func @transform_4(%arg0: i32) -> (i32, i32) {
    %c0_i32 = arith.constant 0 : i32
    %c0_i32_0 = arith.constant 0 : i32
    return %c0_i32, %arg0 : i32, i32
  }
  func.func @transform_5(%arg0: i32) -> (i32, i32, i32) {
    %c0_i32 = arith.constant 0 : i32
    %c0_i32_0 = arith.constant 0 : i32
    %c0_i32_1 = arith.constant 0 : i32
    return %arg0, %c0_i32, %c0_i32_0 : i32, i32, i32
  }
}

module attributes {stable_mosaic.version = 11 : i64} {
  func.func @_bn_act_kernel(%arg0: i32, %arg1: memref<8x512xf32, #tpu.memory_space<vmem>>, %arg2: memref<8x1xf32, #tpu.memory_space<vmem>>, %arg3: memref<8x1xf32, #tpu.memory_space<vmem>>, %arg4: memref<8x512xf32, #tpu.memory_space<vmem>>) attributes {dimension_semantics = [#tpu.dimension_semantics<parallel>], iteration_bounds = array<i64: 1>, scalar_prefetch = 0 : i64, scratch_operands = 0 : i64, tpu.core_type = #tpu.core_type<tc>, window_params = [{transform_indices = @transform_0, window_bounds = array<i64: 8, 512>}, {pipeline_mode = #tpu.pipeline_mode<synchronous>, transform_indices = @transform_1, window_bounds = array<i64: 8, 1>}, {pipeline_mode = #tpu.pipeline_mode<synchronous>, transform_indices = @transform_2, window_bounds = array<i64: 8, 1>}, {transform_indices = @transform_3, window_bounds = array<i64: 8, 512>}]} {
    %c0 = arith.constant 0 : index
    %c0_0 = arith.constant 0 : index
    %0 = vector.load %arg1[%c0, %c0_0] : memref<8x512xf32, #tpu.memory_space<vmem>>, vector<8x512xf32>
    %c0_1 = arith.constant 0 : index
    %c0_2 = arith.constant 0 : index
    %1 = vector.load %arg2[%c0_1, %c0_2] : memref<8x1xf32, #tpu.memory_space<vmem>>, vector<8x1xf32>
    %2 = vector.broadcast %1 : vector<8x1xf32> to vector<8x512xf32>
    %3 = arith.mulf %0, %2 : vector<8x512xf32>
    %c0_3 = arith.constant 0 : index
    %c0_4 = arith.constant 0 : index
    %4 = vector.load %arg3[%c0_3, %c0_4] : memref<8x1xf32, #tpu.memory_space<vmem>>, vector<8x1xf32>
    %5 = vector.broadcast %4 : vector<8x1xf32> to vector<8x512xf32>
    %6 = arith.addf %3, %5 : vector<8x512xf32>
    %cst = arith.constant 0.000000e+00 : f32
    %7 = vector.broadcast %cst : f32 to vector<8x512xf32>
    %8 = arith.cmpf ogt, %6, %7 : vector<8x512xf32>
    %cst_5 = arith.constant 2.000000e-01 : f32
    %9 = vector.broadcast %cst_5 : f32 to vector<8x512xf32>
    %10 = arith.mulf %9, %6 : vector<8x512xf32>
    %11 = arith.select %8, %6, %10 : vector<8x512xi1>, vector<8x512xf32>
    %c0_6 = arith.constant 0 : index
    %c0_7 = arith.constant 0 : index
    %12 = vector.load %arg4[%c0_6, %c0_7] : memref<8x512xf32, #tpu.memory_space<vmem>>, vector<8x512xf32>
    tpu.vector_store %arg4[%c0_6, %c0_7], %11 {strides = array<i32>} : memref<8x512xf32, #tpu.memory_space<vmem>>, vector<8x512xf32>,
    return
  }
  func.func @transform_0(%arg0: i32) -> (i32, i32) {
    %c0_i32 = arith.constant 0 : i32
    %c0_i32_0 = arith.constant 0 : i32
    return %c0_i32, %arg0 : i32, i32
  }
  func.func @transform_1(%arg0: i32) -> (i32, i32) {
    %c0_i32 = arith.constant 0 : i32
    %c0_i32_0 = arith.constant 0 : i32
    %c0_i32_1 = arith.constant 0 : i32
    return %c0_i32, %c0_i32_0 : i32, i32
  }
  func.func @transform_2(%arg0: i32) -> (i32, i32) {
    %c0_i32 = arith.constant 0 : i32
    %c0_i32_0 = arith.constant 0 : i32
    %c0_i32_1 = arith.constant 0 : i32
    return %c0_i32, %c0_i32_0 : i32, i32
  }
  func.func @transform_3(%arg0: i32) -> (i32, i32) {
    %c0_i32 = arith.constant 0 : i32
    %c0_i32_0 = arith.constant 0 : i32
    return %c0_i32, %arg0 : i32, i32
  }
}

module attributes {stable_mosaic.version = 11 : i64} {
  func.func @_conv_matmul_kernel(%arg0: i32, %arg1: memref<216x512xbf16, #tpu.memory_space<vmem>>, %arg2: memref<8x216xbf16, #tpu.memory_space<vmem>>, %arg3: memref<8x1xf32, #tpu.memory_space<vmem>>, %arg4: memref<8x512xf32, #tpu.memory_space<vmem>>, %arg5: memref<1x16x128xf32, #tpu.memory_space<vmem>>) attributes {dimension_semantics = [#tpu.dimension_semantics<parallel>], iteration_bounds = array<i64: 1>, scalar_prefetch = 0 : i64, scratch_operands = 0 : i64, tpu.core_type = #tpu.core_type<tc>, window_params = [{transform_indices = @transform_0, window_bounds = array<i64: 216, 512>}, {pipeline_mode = #tpu.pipeline_mode<synchronous>, transform_indices = @transform_1, window_bounds = array<i64: 8, 216>}, {pipeline_mode = #tpu.pipeline_mode<synchronous>, transform_indices = @transform_2, window_bounds = array<i64: 8, 1>}, {transform_indices = @transform_3, window_bounds = array<i64: 8, 512>}, {transform_indices = @transform_4, window_bounds = array<i64: 1, 16, 128>}]} {
    %c0 = arith.constant 0 : index
    %c0_0 = arith.constant 0 : index
    %0 = vector.load %arg2[%c0, %c0_0] : memref<8x216xbf16, #tpu.memory_space<vmem>>, vector<8x216xbf16>
    %c0_1 = arith.constant 0 : index
    %c0_2 = arith.constant 0 : index
    %1 = vector.load %arg1[%c0_1, %c0_2] : memref<216x512xbf16, #tpu.memory_space<vmem>>, vector<216x512xbf16>
    %cst = arith.constant dense<0.000000e+00> : vector<8x512xf32>
    %2 = tpu.matmul %0, %1, %cst {dimension_numbers = #tpu.dot_dimension_numbers<[1], [0], [0], [1], [0, 0, 1, 1], [], []>} : vector<8x216xbf16>, vector<216x512xbf16>, vector<8x512xf32> -> vector<8x512xf32>
    %c0_3 = arith.constant 0 : index
    %c0_4 = arith.constant 0 : index
    %3 = vector.load %arg3[%c0_3, %c0_4] : memref<8x1xf32, #tpu.memory_space<vmem>>, vector<8x1xf32>
    %4 = vector.broadcast %3 : vector<8x1xf32> to vector<8x512xf32>
    %5 = arith.addf %2, %4 : vector<8x512xf32>
    %c512_i32 = arith.constant 512 : i32
    %6 = arith.muli %arg0, %c512_i32 : i32
    %7 = tpu.iota {dimensions = array<i32: 1>} : vector<1x512xi32>
    %8 = vector.broadcast %6 : i32 to vector<1x512xi32>
    %9 = arith.addi %7, %8 : vector<1x512xi32>
    %c512_i32_5 = arith.constant 512 : i32
    %10 = vector.broadcast %c512_i32_5 : i32 to vector<1x512xi32>
    %11 = arith.cmpi slt, %9, %10 : vector<1x512xi32>
    %cst_6 = arith.constant 0.000000e+00 : f32
    %12 = vector.shape_cast %11 : vector<1x512xi1> to vector<1x512xi1>
    %13 = vector.broadcast %12 : vector<1x512xi1> to vector<8x512xi1>
    %14 = vector.broadcast %cst_6 : f32 to vector<8x512xf32>
    %15 = arith.select %13, %5, %14 : vector<8x512xi1>, vector<8x512xf32>
    %cst_7 = arith.constant dense<0.000000e+00> : vector<8xf32>
    %16 = vector.multi_reduction <add>, %15, %cst_7 [1] : vector<8x512xf32> to vector<8xf32>
    %17 = vector.shape_cast %16 : vector<8xf32> to vector<8x1xf32>
    %18 = arith.mulf %15, %15 : vector<8x512xf32>
    %cst_8 = arith.constant dense<0.000000e+00> : vector<8xf32>
    %19 = vector.multi_reduction <add>, %18, %cst_8 [1] : vector<8x512xf32> to vector<8xf32>
    %20 = vector.shape_cast %19 : vector<8xf32> to vector<8x1xf32>
    %21 = tpu.concatenate %17, %20 in 0 : vector<8x1xf32>, vector<8x1xf32> -> vector<16x1xf32>
    %22 = vector.shape_cast %21 : vector<16x1xf32> to vector<1x16x1xf32>
    %23 = vector.shape_cast %22 : vector<1x16x1xf32> to vector<1x16x1xf32>
    %24 = vector.broadcast %23 : vector<1x16x1xf32> to vector<1x16x128xf32>
    %c0_9 = arith.constant 0 : index
    %c0_10 = arith.constant 0 : index
    %c0_11 = arith.constant 0 : index
    %25 = vector.load %arg5[%c0_9, %c0_10, %c0_11] : memref<1x16x128xf32, #tpu.memory_space<vmem>>, vector<1x16x128xf32>
    tpu.vector_store %arg5[%c0_9, %c0_10, %c0_11], %24 {strides = array<i32>} : memref<1x16x128xf32, #tpu.memory_space<vmem>>, vector<1x16x128xf32>,
    %c0_12 = arith.constant 0 : index
    %c0_13 = arith.constant 0 : index
    %26 = vector.load %arg4[%c0_12, %c0_13] : memref<8x512xf32, #tpu.memory_space<vmem>>, vector<8x512xf32>
    tpu.vector_store %arg4[%c0_12, %c0_13], %5 {strides = array<i32>} : memref<8x512xf32, #tpu.memory_space<vmem>>, vector<8x512xf32>,
    return
  }
  func.func @transform_0(%arg0: i32) -> (i32, i32) {
    %c0_i32 = arith.constant 0 : i32
    %c0_i32_0 = arith.constant 0 : i32
    return %c0_i32, %arg0 : i32, i32
  }
  func.func @transform_1(%arg0: i32) -> (i32, i32) {
    %c0_i32 = arith.constant 0 : i32
    %c0_i32_0 = arith.constant 0 : i32
    %c0_i32_1 = arith.constant 0 : i32
    return %c0_i32, %c0_i32_0 : i32, i32
  }
  func.func @transform_2(%arg0: i32) -> (i32, i32) {
    %c0_i32 = arith.constant 0 : i32
    %c0_i32_0 = arith.constant 0 : i32
    %c0_i32_1 = arith.constant 0 : i32
    return %c0_i32, %c0_i32_0 : i32, i32
  }
  func.func @transform_3(%arg0: i32) -> (i32, i32) {
    %c0_i32 = arith.constant 0 : i32
    %c0_i32_0 = arith.constant 0 : i32
    return %c0_i32, %arg0 : i32, i32
  }
  func.func @transform_4(%arg0: i32) -> (i32, i32, i32) {
    %c0_i32 = arith.constant 0 : i32
    %c0_i32_0 = arith.constant 0 : i32
    %c0_i32_1 = arith.constant 0 : i32
    return %arg0, %c0_i32, %c0_i32_0 : i32, i32, i32
  }
}

module attributes {stable_mosaic.version = 11 : i64} {
  func.func @_res_tail_kernel(%arg0: i32, %arg1: memref<8x512xf32, #tpu.memory_space<vmem>>, %arg2: memref<8x512xf32, #tpu.memory_space<vmem>>, %arg3: memref<8x1xf32, #tpu.memory_space<vmem>>, %arg4: memref<8x1xf32, #tpu.memory_space<vmem>>, %arg5: memref<8x1xf32, #tpu.memory_space<vmem>>, %arg6: memref<8x1xf32, #tpu.memory_space<vmem>>, %arg7: memref<8x512xf32, #tpu.memory_space<vmem>>) attributes {dimension_semantics = [#tpu.dimension_semantics<parallel>], iteration_bounds = array<i64: 1>, scalar_prefetch = 0 : i64, scratch_operands = 0 : i64, tpu.core_type = #tpu.core_type<tc>, window_params = [{transform_indices = @transform_0, window_bounds = array<i64: 8, 512>}, {transform_indices = @transform_1, window_bounds = array<i64: 8, 512>}, {pipeline_mode = #tpu.pipeline_mode<synchronous>, transform_indices = @transform_2, window_bounds = array<i64: 8, 1>}, {pipeline_mode = #tpu.pipeline_mode<synchronous>, transform_indices = @transform_3, window_bounds = array<i64: 8, 1>}, {pipeline_mode = #tpu.pipeline_mode<synchronous>, transform_indices = @transform_4, window_bounds = array<i64: 8, 1>}, {pipeline_mode = #tpu.pipeline_mode<synchronous>, transform_indices = @transform_5, window_bounds = array<i64: 8, 1>}, {transform_indices = @transform_6, window_bounds = array<i64: 8, 512>}]} {
    %c0 = arith.constant 0 : index
    %c0_0 = arith.constant 0 : index
    %0 = vector.load %arg1[%c0, %c0_0] : memref<8x512xf32, #tpu.memory_space<vmem>>, vector<8x512xf32>
    %c0_1 = arith.constant 0 : index
    %c0_2 = arith.constant 0 : index
    %1 = vector.load %arg3[%c0_1, %c0_2] : memref<8x1xf32, #tpu.memory_space<vmem>>, vector<8x1xf32>
    %2 = vector.broadcast %1 : vector<8x1xf32> to vector<8x512xf32>
    %3 = arith.mulf %0, %2 : vector<8x512xf32>
    %c0_3 = arith.constant 0 : index
    %c0_4 = arith.constant 0 : index
    %4 = vector.load %arg4[%c0_3, %c0_4] : memref<8x1xf32, #tpu.memory_space<vmem>>, vector<8x1xf32>
    %5 = vector.broadcast %4 : vector<8x1xf32> to vector<8x512xf32>
    %6 = arith.addf %3, %5 : vector<8x512xf32>
    %c0_5 = arith.constant 0 : index
    %c0_6 = arith.constant 0 : index
    %7 = vector.load %arg2[%c0_5, %c0_6] : memref<8x512xf32, #tpu.memory_space<vmem>>, vector<8x512xf32>
    %c0_7 = arith.constant 0 : index
    %c0_8 = arith.constant 0 : index
    %8 = vector.load %arg5[%c0_7, %c0_8] : memref<8x1xf32, #tpu.memory_space<vmem>>, vector<8x1xf32>
    %9 = vector.broadcast %8 : vector<8x1xf32> to vector<8x512xf32>
    %10 = arith.mulf %7, %9 : vector<8x512xf32>
    %c0_9 = arith.constant 0 : index
    %c0_10 = arith.constant 0 : index
    %11 = vector.load %arg6[%c0_9, %c0_10] : memref<8x1xf32, #tpu.memory_space<vmem>>, vector<8x1xf32>
    %12 = vector.broadcast %11 : vector<8x1xf32> to vector<8x512xf32>
    %13 = arith.addf %10, %12 : vector<8x512xf32>
    %cst = arith.constant 0.000000e+00 : f32
    %14 = vector.broadcast %cst : f32 to vector<8x512xf32>
    %15 = arith.cmpf ogt, %6, %14 : vector<8x512xf32>
    %cst_11 = arith.constant 2.000000e-01 : f32
    %16 = vector.broadcast %cst_11 : f32 to vector<8x512xf32>
    %17 = arith.mulf %16, %6 : vector<8x512xf32>
    %18 = arith.select %15, %6, %17 : vector<8x512xi1>, vector<8x512xf32>
    %cst_12 = arith.constant 0.000000e+00 : f32
    %19 = vector.broadcast %cst_12 : f32 to vector<8x512xf32>
    %20 = arith.cmpf ogt, %13, %19 : vector<8x512xf32>
    %cst_13 = arith.constant 2.000000e-01 : f32
    %21 = vector.broadcast %cst_13 : f32 to vector<8x512xf32>
    %22 = arith.mulf %21, %13 : vector<8x512xf32>
    %23 = arith.select %20, %13, %22 : vector<8x512xi1>, vector<8x512xf32>
    %24 = arith.addf %18, %23 : vector<8x512xf32>
    %c0_14 = arith.constant 0 : index
    %c0_15 = arith.constant 0 : index
    %25 = vector.load %arg7[%c0_14, %c0_15] : memref<8x512xf32, #tpu.memory_space<vmem>>, vector<8x512xf32>
    tpu.vector_store %arg7[%c0_14, %c0_15], %24 {strides = array<i32>} : memref<8x512xf32, #tpu.memory_space<vmem>>, vector<8x512xf32>,
    return
  }
  func.func @transform_0(%arg0: i32) -> (i32, i32) {
    %c0_i32 = arith.constant 0 : i32
    %c0_i32_0 = arith.constant 0 : i32
    return %c0_i32, %arg0 : i32, i32
  }
  func.func @transform_1(%arg0: i32) -> (i32, i32) {
    %c0_i32 = arith.constant 0 : i32
    %c0_i32_0 = arith.constant 0 : i32
    return %c0_i32, %arg0 : i32, i32
  }
  func.func @transform_2(%arg0: i32) -> (i32, i32) {
    %c0_i32 = arith.constant 0 : i32
    %c0_i32_0 = arith.constant 0 : i32
    %c0_i32_1 = arith.constant 0 : i32
    return %c0_i32, %c0_i32_0 : i32, i32
  }
  func.func @transform_3(%arg0: i32) -> (i32, i32) {
    %c0_i32 = arith.constant 0 : i32
    %c0_i32_0 = arith.constant 0 : i32
    %c0_i32_1 = arith.constant 0 : i32
    return %c0_i32, %c0_i32_0 : i32, i32
  }
  func.func @transform_4(%arg0: i32) -> (i32, i32) {
    %c0_i32 = arith.constant 0 : i32
    %c0_i32_0 = arith.constant 0 : i32
    %c0_i32_1 = arith.constant 0 : i32
    return %c0_i32, %c0_i32_0 : i32, i32
  }
  func.func @transform_5(%arg0: i32) -> (i32, i32) {
    %c0_i32 = arith.constant 0 : i32
    %c0_i32_0 = arith.constant 0 : i32
    %c0_i32_1 = arith.constant 0 : i32
    return %c0_i32, %c0_i32_0 : i32, i32
  }
  func.func @transform_6(%arg0: i32) -> (i32, i32) {
    %c0_i32 = arith.constant 0 : i32
    %c0_i32_0 = arith.constant 0 : i32
    return %c0_i32, %arg0 : i32, i32
  }
}

module attributes {stable_mosaic.version = 11 : i64} {
  func.func @_conv_matmul_kernel(%arg0: i32, %arg1: memref<216x128xbf16, #tpu.memory_space<vmem>>, %arg2: memref<48x216xbf16, #tpu.memory_space<vmem>>, %arg3: memref<48x1xf32, #tpu.memory_space<vmem>>, %arg4: memref<8x128xf32, #tpu.memory_space<vmem>>, %arg5: memref<16x128xf32, #tpu.memory_space<vmem>>, %arg6: memref<8x128xf32, #tpu.memory_space<vmem>>, %arg7: memref<16x128xf32, #tpu.memory_space<vmem>>, %arg8: memref<1x96x128xf32, #tpu.memory_space<vmem>>) attributes {dimension_semantics = [#tpu.dimension_semantics<parallel>], iteration_bounds = array<i64: 1>, scalar_prefetch = 0 : i64, scratch_operands = 0 : i64, tpu.core_type = #tpu.core_type<tc>, window_params = [{transform_indices = @transform_0, window_bounds = array<i64: 216, 128>}, {pipeline_mode = #tpu.pipeline_mode<synchronous>, transform_indices = @transform_1, window_bounds = array<i64: 48, 216>}, {pipeline_mode = #tpu.pipeline_mode<synchronous>, transform_indices = @transform_2, window_bounds = array<i64: 48, 1>}, {transform_indices = @transform_3, window_bounds = array<i64: 8, 128>}, {transform_indices = @transform_4, window_bounds = array<i64: 16, 128>}, {transform_indices = @transform_5, window_bounds = array<i64: 8, 128>}, {transform_indices = @transform_6, window_bounds = array<i64: 16, 128>}, {transform_indices = @transform_7, window_bounds = array<i64: 1, 96, 128>}]} {
    %c0 = arith.constant 0 : index
    %c0_0 = arith.constant 0 : index
    %0 = vector.load %arg2[%c0, %c0_0] : memref<48x216xbf16, #tpu.memory_space<vmem>>, vector<48x216xbf16>
    %c0_1 = arith.constant 0 : index
    %c0_2 = arith.constant 0 : index
    %1 = vector.load %arg1[%c0_1, %c0_2] : memref<216x128xbf16, #tpu.memory_space<vmem>>, vector<216x128xbf16>
    %cst = arith.constant dense<0.000000e+00> : vector<48x128xf32>
    %2 = tpu.matmul %0, %1, %cst {dimension_numbers = #tpu.dot_dimension_numbers<[1], [0], [0], [1], [0, 0, 1, 1], [], []>} : vector<48x216xbf16>, vector<216x128xbf16>, vector<48x128xf32> -> vector<48x128xf32>
    %c0_3 = arith.constant 0 : index
    %c0_4 = arith.constant 0 : index
    %3 = vector.load %arg3[%c0_3, %c0_4] : memref<48x1xf32, #tpu.memory_space<vmem>>, vector<48x1xf32>
    %4 = vector.broadcast %3 : vector<48x1xf32> to vector<48x128xf32>
    %5 = arith.addf %2, %4 : vector<48x128xf32>
    %c128_i32 = arith.constant 128 : i32
    %6 = arith.muli %arg0, %c128_i32 : i32
    %7 = tpu.iota {dimensions = array<i32: 1>} : vector<1x128xi32>
    %8 = vector.broadcast %6 : i32 to vector<1x128xi32>
    %9 = arith.addi %7, %8 : vector<1x128xi32>
    %c128_i32_5 = arith.constant 128 : i32
    %10 = vector.broadcast %c128_i32_5 : i32 to vector<1x128xi32>
    %11 = arith.cmpi slt, %9, %10 : vector<1x128xi32>
    %cst_6 = arith.constant 0.000000e+00 : f32
    %12 = vector.shape_cast %11 : vector<1x128xi1> to vector<1x128xi1>
    %13 = vector.broadcast %12 : vector<1x128xi1> to vector<48x128xi1>
    %14 = vector.broadcast %cst_6 : f32 to vector<48x128xf32>
    %15 = arith.select %13, %5, %14 : vector<48x128xi1>, vector<48x128xf32>
    %cst_7 = arith.constant dense<0.000000e+00> : vector<48xf32>
    %16 = vector.multi_reduction <add>, %15, %cst_7 [1] : vector<48x128xf32> to vector<48xf32>
    %17 = vector.shape_cast %16 : vector<48xf32> to vector<48x1xf32>
    %18 = arith.mulf %15, %15 : vector<48x128xf32>
    %cst_8 = arith.constant dense<0.000000e+00> : vector<48xf32>
    %19 = vector.multi_reduction <add>, %18, %cst_8 [1] : vector<48x128xf32> to vector<48xf32>
    %20 = vector.shape_cast %19 : vector<48xf32> to vector<48x1xf32>
    %21 = tpu.concatenate %17, %20 in 0 : vector<48x1xf32>, vector<48x1xf32> -> vector<96x1xf32>
    %22 = vector.shape_cast %21 : vector<96x1xf32> to vector<1x96x1xf32>
    %23 = vector.shape_cast %22 : vector<1x96x1xf32> to vector<1x96x1xf32>
    %24 = vector.broadcast %23 : vector<1x96x1xf32> to vector<1x96x128xf32>
    %c0_9 = arith.constant 0 : index
    %c0_10 = arith.constant 0 : index
    %c0_11 = arith.constant 0 : index
    %25 = vector.load %arg8[%c0_9, %c0_10, %c0_11] : memref<1x96x128xf32, #tpu.memory_space<vmem>>, vector<1x96x128xf32>
    tpu.vector_store %arg8[%c0_9, %c0_10, %c0_11], %24 {strides = array<i32>} : memref<1x96x128xf32, #tpu.memory_space<vmem>>, vector<1x96x128xf32>,
    %26 = vector.extract_strided_slice %5 {offsets = [0, 0], sizes = [8, 128], strides = [1, 1]} : vector<48x128xf32> to vector<8x128xf32>
    %c0_12 = arith.constant 0 : index
    %c0_13 = arith.constant 0 : index
    %27 = vector.load %arg4[%c0_12, %c0_13] : memref<8x128xf32, #tpu.memory_space<vmem>>, vector<8x128xf32>
    tpu.vector_store %arg4[%c0_12, %c0_13], %26 {strides = array<i32>} : memref<8x128xf32, #tpu.memory_space<vmem>>, vector<8x128xf32>,
    %28 = vector.extract_strided_slice %5 {offsets = [8, 0], sizes = [16, 128], strides = [1, 1]} : vector<48x128xf32> to vector<16x128xf32>
    %c0_14 = arith.constant 0 : index
    %c0_15 = arith.constant 0 : index
    %29 = vector.load %arg5[%c0_14, %c0_15] : memref<16x128xf32, #tpu.memory_space<vmem>>, vector<16x128xf32>
    tpu.vector_store %arg5[%c0_14, %c0_15], %28 {strides = array<i32>} : memref<16x128xf32, #tpu.memory_space<vmem>>, vector<16x128xf32>,
    %30 = vector.extract_strided_slice %5 {offsets = [24, 0], sizes = [8, 128], strides = [1, 1]} : vector<48x128xf32> to vector<8x128xf32>
    %c0_16 = arith.constant 0 : index
    %c0_17 = arith.constant 0 : index
    %31 = vector.load %arg6[%c0_16, %c0_17] : memref<8x128xf32, #tpu.memory_space<vmem>>, vector<8x128xf32>
    tpu.vector_store %arg6[%c0_16, %c0_17], %30 {strides = array<i32>} : memref<8x128xf32, #tpu.memory_space<vmem>>, vector<8x128xf32>,
    %32 = vector.extract_strided_slice %5 {offsets = [32, 0], sizes = [16, 128], strides = [1, 1]} : vector<48x128xf32> to vector<16x128xf32>
    %c0_18 = arith.constant 0 : index
    %c0_19 = arith.constant 0 : index
    %33 = vector.load %arg7[%c0_18, %c0_19] : memref<16x128xf32, #tpu.memory_space<vmem>>, vector<16x128xf32>
    tpu.vector_store %arg7[%c0_18, %c0_19], %32 {strides = array<i32>} : memref<16x128xf32, #tpu.memory_space<vmem>>, vector<16x128xf32>,
    return
  }
  func.func @transform_0(%arg0: i32) -> (i32, i32) {
    %c0_i32 = arith.constant 0 : i32
    %c0_i32_0 = arith.constant 0 : i32
    return %c0_i32, %arg0 : i32, i32
  }
  func.func @transform_1(%arg0: i32) -> (i32, i32) {
    %c0_i32 = arith.constant 0 : i32
    %c0_i32_0 = arith.constant 0 : i32
    %c0_i32_1 = arith.constant 0 : i32
    return %c0_i32, %c0_i32_0 : i32, i32
  }
  func.func @transform_2(%arg0: i32) -> (i32, i32) {
    %c0_i32 = arith.constant 0 : i32
    %c0_i32_0 = arith.constant 0 : i32
    %c0_i32_1 = arith.constant 0 : i32
    return %c0_i32, %c0_i32_0 : i32, i32
  }
  func.func @transform_3(%arg0: i32) -> (i32, i32) {
    %c0_i32 = arith.constant 0 : i32
    %c0_i32_0 = arith.constant 0 : i32
    return %c0_i32, %arg0 : i32, i32
  }
  func.func @transform_4(%arg0: i32) -> (i32, i32) {
    %c0_i32 = arith.constant 0 : i32
    %c0_i32_0 = arith.constant 0 : i32
    return %c0_i32, %arg0 : i32, i32
  }
  func.func @transform_5(%arg0: i32) -> (i32, i32) {
    %c0_i32 = arith.constant 0 : i32
    %c0_i32_0 = arith.constant 0 : i32
    return %c0_i32, %arg0 : i32, i32
  }
  func.func @transform_6(%arg0: i32) -> (i32, i32) {
    %c0_i32 = arith.constant 0 : i32
    %c0_i32_0 = arith.constant 0 : i32
    return %c0_i32, %arg0 : i32, i32
  }
  func.func @transform_7(%arg0: i32) -> (i32, i32, i32) {
    %c0_i32 = arith.constant 0 : i32
    %c0_i32_0 = arith.constant 0 : i32
    %c0_i32_1 = arith.constant 0 : i32
    return %arg0, %c0_i32, %c0_i32_0 : i32, i32, i32
  }
}

module attributes {stable_mosaic.version = 11 : i64} {
  func.func @_bn_act_kernel(%arg0: i32, %arg1: memref<8x128xf32, #tpu.memory_space<vmem>>, %arg2: memref<8x1xf32, #tpu.memory_space<vmem>>, %arg3: memref<8x1xf32, #tpu.memory_space<vmem>>, %arg4: memref<8x128xf32, #tpu.memory_space<vmem>>) attributes {dimension_semantics = [#tpu.dimension_semantics<parallel>], iteration_bounds = array<i64: 1>, scalar_prefetch = 0 : i64, scratch_operands = 0 : i64, tpu.core_type = #tpu.core_type<tc>, window_params = [{transform_indices = @transform_0, window_bounds = array<i64: 8, 128>}, {pipeline_mode = #tpu.pipeline_mode<synchronous>, transform_indices = @transform_1, window_bounds = array<i64: 8, 1>}, {pipeline_mode = #tpu.pipeline_mode<synchronous>, transform_indices = @transform_2, window_bounds = array<i64: 8, 1>}, {transform_indices = @transform_3, window_bounds = array<i64: 8, 128>}]} {
    %c0 = arith.constant 0 : index
    %c0_0 = arith.constant 0 : index
    %0 = vector.load %arg1[%c0, %c0_0] : memref<8x128xf32, #tpu.memory_space<vmem>>, vector<8x128xf32>
    %c0_1 = arith.constant 0 : index
    %c0_2 = arith.constant 0 : index
    %1 = vector.load %arg2[%c0_1, %c0_2] : memref<8x1xf32, #tpu.memory_space<vmem>>, vector<8x1xf32>
    %2 = vector.broadcast %1 : vector<8x1xf32> to vector<8x128xf32>
    %3 = arith.mulf %0, %2 : vector<8x128xf32>
    %c0_3 = arith.constant 0 : index
    %c0_4 = arith.constant 0 : index
    %4 = vector.load %arg3[%c0_3, %c0_4] : memref<8x1xf32, #tpu.memory_space<vmem>>, vector<8x1xf32>
    %5 = vector.broadcast %4 : vector<8x1xf32> to vector<8x128xf32>
    %6 = arith.addf %3, %5 : vector<8x128xf32>
    %cst = arith.constant 0.000000e+00 : f32
    %7 = vector.broadcast %cst : f32 to vector<8x128xf32>
    %8 = arith.cmpf ogt, %6, %7 : vector<8x128xf32>
    %cst_5 = arith.constant 2.000000e-01 : f32
    %9 = vector.broadcast %cst_5 : f32 to vector<8x128xf32>
    %10 = arith.mulf %9, %6 : vector<8x128xf32>
    %11 = arith.select %8, %6, %10 : vector<8x128xi1>, vector<8x128xf32>
    %c0_6 = arith.constant 0 : index
    %c0_7 = arith.constant 0 : index
    %12 = vector.load %arg4[%c0_6, %c0_7] : memref<8x128xf32, #tpu.memory_space<vmem>>, vector<8x128xf32>
    tpu.vector_store %arg4[%c0_6, %c0_7], %11 {strides = array<i32>} : memref<8x128xf32, #tpu.memory_space<vmem>>, vector<8x128xf32>,
    return
  }
  func.func @transform_0(%arg0: i32) -> (i32, i32) {
    %c0_i32 = arith.constant 0 : i32
    %c0_i32_0 = arith.constant 0 : i32
    return %c0_i32, %arg0 : i32, i32
  }
  func.func @transform_1(%arg0: i32) -> (i32, i32) {
    %c0_i32 = arith.constant 0 : i32
    %c0_i32_0 = arith.constant 0 : i32
    %c0_i32_1 = arith.constant 0 : i32
    return %c0_i32, %c0_i32_0 : i32, i32
  }
  func.func @transform_2(%arg0: i32) -> (i32, i32) {
    %c0_i32 = arith.constant 0 : i32
    %c0_i32_0 = arith.constant 0 : i32
    %c0_i32_1 = arith.constant 0 : i32
    return %c0_i32, %c0_i32_0 : i32, i32
  }
  func.func @transform_3(%arg0: i32) -> (i32, i32) {
    %c0_i32 = arith.constant 0 : i32
    %c0_i32_0 = arith.constant 0 : i32
    return %c0_i32, %arg0 : i32, i32
  }
}

module attributes {stable_mosaic.version = 11 : i64} {
  func.func @_conv_matmul_kernel(%arg0: i32, %arg1: memref<216x128xbf16, #tpu.memory_space<vmem>>, %arg2: memref<16x216xbf16, #tpu.memory_space<vmem>>, %arg3: memref<16x1xf32, #tpu.memory_space<vmem>>, %arg4: memref<16x128xf32, #tpu.memory_space<vmem>>, %arg5: memref<1x32x128xf32, #tpu.memory_space<vmem>>) attributes {dimension_semantics = [#tpu.dimension_semantics<parallel>], iteration_bounds = array<i64: 1>, scalar_prefetch = 0 : i64, scratch_operands = 0 : i64, tpu.core_type = #tpu.core_type<tc>, window_params = [{transform_indices = @transform_0, window_bounds = array<i64: 216, 128>}, {pipeline_mode = #tpu.pipeline_mode<synchronous>, transform_indices = @transform_1, window_bounds = array<i64: 16, 216>}, {pipeline_mode = #tpu.pipeline_mode<synchronous>, transform_indices = @transform_2, window_bounds = array<i64: 16, 1>}, {transform_indices = @transform_3, window_bounds = array<i64: 16, 128>}, {transform_indices = @transform_4, window_bounds = array<i64: 1, 32, 128>}]} {
    %c0 = arith.constant 0 : index
    %c0_0 = arith.constant 0 : index
    %0 = vector.load %arg2[%c0, %c0_0] : memref<16x216xbf16, #tpu.memory_space<vmem>>, vector<16x216xbf16>
    %c0_1 = arith.constant 0 : index
    %c0_2 = arith.constant 0 : index
    %1 = vector.load %arg1[%c0_1, %c0_2] : memref<216x128xbf16, #tpu.memory_space<vmem>>, vector<216x128xbf16>
    %cst = arith.constant dense<0.000000e+00> : vector<16x128xf32>
    %2 = tpu.matmul %0, %1, %cst {dimension_numbers = #tpu.dot_dimension_numbers<[1], [0], [0], [1], [0, 0, 1, 1], [], []>} : vector<16x216xbf16>, vector<216x128xbf16>, vector<16x128xf32> -> vector<16x128xf32>
    %c0_3 = arith.constant 0 : index
    %c0_4 = arith.constant 0 : index
    %3 = vector.load %arg3[%c0_3, %c0_4] : memref<16x1xf32, #tpu.memory_space<vmem>>, vector<16x1xf32>
    %4 = vector.broadcast %3 : vector<16x1xf32> to vector<16x128xf32>
    %5 = arith.addf %2, %4 : vector<16x128xf32>
    %c128_i32 = arith.constant 128 : i32
    %6 = arith.muli %arg0, %c128_i32 : i32
    %7 = tpu.iota {dimensions = array<i32: 1>} : vector<1x128xi32>
    %8 = vector.broadcast %6 : i32 to vector<1x128xi32>
    %9 = arith.addi %7, %8 : vector<1x128xi32>
    %c128_i32_5 = arith.constant 128 : i32
    %10 = vector.broadcast %c128_i32_5 : i32 to vector<1x128xi32>
    %11 = arith.cmpi slt, %9, %10 : vector<1x128xi32>
    %cst_6 = arith.constant 0.000000e+00 : f32
    %12 = vector.shape_cast %11 : vector<1x128xi1> to vector<1x128xi1>
    %13 = vector.broadcast %12 : vector<1x128xi1> to vector<16x128xi1>
    %14 = vector.broadcast %cst_6 : f32 to vector<16x128xf32>
    %15 = arith.select %13, %5, %14 : vector<16x128xi1>, vector<16x128xf32>
    %cst_7 = arith.constant dense<0.000000e+00> : vector<16xf32>
    %16 = vector.multi_reduction <add>, %15, %cst_7 [1] : vector<16x128xf32> to vector<16xf32>
    %17 = vector.shape_cast %16 : vector<16xf32> to vector<16x1xf32>
    %18 = arith.mulf %15, %15 : vector<16x128xf32>
    %cst_8 = arith.constant dense<0.000000e+00> : vector<16xf32>
    %19 = vector.multi_reduction <add>, %18, %cst_8 [1] : vector<16x128xf32> to vector<16xf32>
    %20 = vector.shape_cast %19 : vector<16xf32> to vector<16x1xf32>
    %21 = tpu.concatenate %17, %20 in 0 : vector<16x1xf32>, vector<16x1xf32> -> vector<32x1xf32>
    %22 = vector.shape_cast %21 : vector<32x1xf32> to vector<1x32x1xf32>
    %23 = vector.shape_cast %22 : vector<1x32x1xf32> to vector<1x32x1xf32>
    %24 = vector.broadcast %23 : vector<1x32x1xf32> to vector<1x32x128xf32>
    %c0_9 = arith.constant 0 : index
    %c0_10 = arith.constant 0 : index
    %c0_11 = arith.constant 0 : index
    %25 = vector.load %arg5[%c0_9, %c0_10, %c0_11] : memref<1x32x128xf32, #tpu.memory_space<vmem>>, vector<1x32x128xf32>
    tpu.vector_store %arg5[%c0_9, %c0_10, %c0_11], %24 {strides = array<i32>} : memref<1x32x128xf32, #tpu.memory_space<vmem>>, vector<1x32x128xf32>,
    %c0_12 = arith.constant 0 : index
    %c0_13 = arith.constant 0 : index
    %26 = vector.load %arg4[%c0_12, %c0_13] : memref<16x128xf32, #tpu.memory_space<vmem>>, vector<16x128xf32>
    tpu.vector_store %arg4[%c0_12, %c0_13], %5 {strides = array<i32>} : memref<16x128xf32, #tpu.memory_space<vmem>>, vector<16x128xf32>,
    return
  }
  func.func @transform_0(%arg0: i32) -> (i32, i32) {
    %c0_i32 = arith.constant 0 : i32
    %c0_i32_0 = arith.constant 0 : i32
    return %c0_i32, %arg0 : i32, i32
  }
  func.func @transform_1(%arg0: i32) -> (i32, i32) {
    %c0_i32 = arith.constant 0 : i32
    %c0_i32_0 = arith.constant 0 : i32
    %c0_i32_1 = arith.constant 0 : i32
    return %c0_i32, %c0_i32_0 : i32, i32
  }
  func.func @transform_2(%arg0: i32) -> (i32, i32) {
    %c0_i32 = arith.constant 0 : i32
    %c0_i32_0 = arith.constant 0 : i32
    %c0_i32_1 = arith.constant 0 : i32
    return %c0_i32, %c0_i32_0 : i32, i32
  }
  func.func @transform_3(%arg0: i32) -> (i32, i32) {
    %c0_i32 = arith.constant 0 : i32
    %c0_i32_0 = arith.constant 0 : i32
    return %c0_i32, %arg0 : i32, i32
  }
  func.func @transform_4(%arg0: i32) -> (i32, i32, i32) {
    %c0_i32 = arith.constant 0 : i32
    %c0_i32_0 = arith.constant 0 : i32
    %c0_i32_1 = arith.constant 0 : i32
    return %arg0, %c0_i32, %c0_i32_0 : i32, i32, i32
  }
}

module attributes {stable_mosaic.version = 11 : i64} {
  func.func @_res_tail_kernel(%arg0: i32, %arg1: memref<16x128xf32, #tpu.memory_space<vmem>>, %arg2: memref<16x128xf32, #tpu.memory_space<vmem>>, %arg3: memref<16x1xf32, #tpu.memory_space<vmem>>, %arg4: memref<16x1xf32, #tpu.memory_space<vmem>>, %arg5: memref<16x1xf32, #tpu.memory_space<vmem>>, %arg6: memref<16x1xf32, #tpu.memory_space<vmem>>, %arg7: memref<16x128xf32, #tpu.memory_space<vmem>>) attributes {dimension_semantics = [#tpu.dimension_semantics<parallel>], iteration_bounds = array<i64: 1>, scalar_prefetch = 0 : i64, scratch_operands = 0 : i64, tpu.core_type = #tpu.core_type<tc>, window_params = [{transform_indices = @transform_0, window_bounds = array<i64: 16, 128>}, {transform_indices = @transform_1, window_bounds = array<i64: 16, 128>}, {pipeline_mode = #tpu.pipeline_mode<synchronous>, transform_indices = @transform_2, window_bounds = array<i64: 16, 1>}, {pipeline_mode = #tpu.pipeline_mode<synchronous>, transform_indices = @transform_3, window_bounds = array<i64: 16, 1>}, {pipeline_mode = #tpu.pipeline_mode<synchronous>, transform_indices = @transform_4, window_bounds = array<i64: 16, 1>}, {pipeline_mode = #tpu.pipeline_mode<synchronous>, transform_indices = @transform_5, window_bounds = array<i64: 16, 1>}, {transform_indices = @transform_6, window_bounds = array<i64: 16, 128>}]} {
    %c0 = arith.constant 0 : index
    %c0_0 = arith.constant 0 : index
    %0 = vector.load %arg1[%c0, %c0_0] : memref<16x128xf32, #tpu.memory_space<vmem>>, vector<16x128xf32>
    %c0_1 = arith.constant 0 : index
    %c0_2 = arith.constant 0 : index
    %1 = vector.load %arg3[%c0_1, %c0_2] : memref<16x1xf32, #tpu.memory_space<vmem>>, vector<16x1xf32>
    %2 = vector.broadcast %1 : vector<16x1xf32> to vector<16x128xf32>
    %3 = arith.mulf %0, %2 : vector<16x128xf32>
    %c0_3 = arith.constant 0 : index
    %c0_4 = arith.constant 0 : index
    %4 = vector.load %arg4[%c0_3, %c0_4] : memref<16x1xf32, #tpu.memory_space<vmem>>, vector<16x1xf32>
    %5 = vector.broadcast %4 : vector<16x1xf32> to vector<16x128xf32>
    %6 = arith.addf %3, %5 : vector<16x128xf32>
    %c0_5 = arith.constant 0 : index
    %c0_6 = arith.constant 0 : index
    %7 = vector.load %arg2[%c0_5, %c0_6] : memref<16x128xf32, #tpu.memory_space<vmem>>, vector<16x128xf32>
    %c0_7 = arith.constant 0 : index
    %c0_8 = arith.constant 0 : index
    %8 = vector.load %arg5[%c0_7, %c0_8] : memref<16x1xf32, #tpu.memory_space<vmem>>, vector<16x1xf32>
    %9 = vector.broadcast %8 : vector<16x1xf32> to vector<16x128xf32>
    %10 = arith.mulf %7, %9 : vector<16x128xf32>
    %c0_9 = arith.constant 0 : index
    %c0_10 = arith.constant 0 : index
    %11 = vector.load %arg6[%c0_9, %c0_10] : memref<16x1xf32, #tpu.memory_space<vmem>>, vector<16x1xf32>
    %12 = vector.broadcast %11 : vector<16x1xf32> to vector<16x128xf32>
    %13 = arith.addf %10, %12 : vector<16x128xf32>
    %cst = arith.constant 0.000000e+00 : f32
    %14 = vector.broadcast %cst : f32 to vector<16x128xf32>
    %15 = arith.cmpf ogt, %6, %14 : vector<16x128xf32>
    %cst_11 = arith.constant 2.000000e-01 : f32
    %16 = vector.broadcast %cst_11 : f32 to vector<16x128xf32>
    %17 = arith.mulf %16, %6 : vector<16x128xf32>
    %18 = arith.select %15, %6, %17 : vector<16x128xi1>, vector<16x128xf32>
    %cst_12 = arith.constant 0.000000e+00 : f32
    %19 = vector.broadcast %cst_12 : f32 to vector<16x128xf32>
    %20 = arith.cmpf ogt, %13, %19 : vector<16x128xf32>
    %cst_13 = arith.constant 2.000000e-01 : f32
    %21 = vector.broadcast %cst_13 : f32 to vector<16x128xf32>
    %22 = arith.mulf %21, %13 : vector<16x128xf32>
    %23 = arith.select %20, %13, %22 : vector<16x128xi1>, vector<16x128xf32>
    %24 = arith.addf %18, %23 : vector<16x128xf32>
    %c0_14 = arith.constant 0 : index
    %c0_15 = arith.constant 0 : index
    %25 = vector.load %arg7[%c0_14, %c0_15] : memref<16x128xf32, #tpu.memory_space<vmem>>, vector<16x128xf32>
    tpu.vector_store %arg7[%c0_14, %c0_15], %24 {strides = array<i32>} : memref<16x128xf32, #tpu.memory_space<vmem>>, vector<16x128xf32>,
    return
  }
  func.func @transform_0(%arg0: i32) -> (i32, i32) {
    %c0_i32 = arith.constant 0 : i32
    %c0_i32_0 = arith.constant 0 : i32
    return %c0_i32, %arg0 : i32, i32
  }
  func.func @transform_1(%arg0: i32) -> (i32, i32) {
    %c0_i32 = arith.constant 0 : i32
    %c0_i32_0 = arith.constant 0 : i32
    return %c0_i32, %arg0 : i32, i32
  }
  func.func @transform_2(%arg0: i32) -> (i32, i32) {
    %c0_i32 = arith.constant 0 : i32
    %c0_i32_0 = arith.constant 0 : i32
    %c0_i32_1 = arith.constant 0 : i32
    return %c0_i32, %c0_i32_0 : i32, i32
  }
  func.func @transform_3(%arg0: i32) -> (i32, i32) {
    %c0_i32 = arith.constant 0 : i32
    %c0_i32_0 = arith.constant 0 : i32
    %c0_i32_1 = arith.constant 0 : i32
    return %c0_i32, %c0_i32_0 : i32, i32
  }
  func.func @transform_4(%arg0: i32) -> (i32, i32) {
    %c0_i32 = arith.constant 0 : i32
    %c0_i32_0 = arith.constant 0 : i32
    %c0_i32_1 = arith.constant 0 : i32
    return %c0_i32, %c0_i32_0 : i32, i32
  }
  func.func @transform_5(%arg0: i32) -> (i32, i32) {
    %c0_i32 = arith.constant 0 : i32
    %c0_i32_0 = arith.constant 0 : i32
    %c0_i32_1 = arith.constant 0 : i32
    return %c0_i32, %c0_i32_0 : i32, i32
  }
  func.func @transform_6(%arg0: i32) -> (i32, i32) {
    %c0_i32 = arith.constant 0 : i32
    %c0_i32_0 = arith.constant 0 : i32
    return %c0_i32, %arg0 : i32, i32
  }
}

module attributes {stable_mosaic.version = 11 : i64} {
  func.func @_res_tail_reparam_kernel(%arg0: i32, %arg1: memref<16x128xf32, #tpu.memory_space<vmem>>, %arg2: memref<16x128xf32, #tpu.memory_space<vmem>>, %arg3: memref<16x128xf32, #tpu.memory_space<vmem>>, %arg4: memref<16x128xf32, #tpu.memory_space<vmem>>, %arg5: memref<16x1xf32, #tpu.memory_space<vmem>>, %arg6: memref<16x1xf32, #tpu.memory_space<vmem>>, %arg7: memref<16x1xf32, #tpu.memory_space<vmem>>, %arg8: memref<16x1xf32, #tpu.memory_space<vmem>>, %arg9: memref<16x128xf32, #tpu.memory_space<vmem>>, %arg10: memref<16x128xf32, #tpu.memory_space<vmem>>) attributes {dimension_semantics = [#tpu.dimension_semantics<parallel>], iteration_bounds = array<i64: 1>, scalar_prefetch = 0 : i64, scratch_operands = 0 : i64, tpu.core_type = #tpu.core_type<tc>, window_params = [{transform_indices = @transform_0, window_bounds = array<i64: 16, 128>}, {transform_indices = @transform_1, window_bounds = array<i64: 16, 128>}, {transform_indices = @transform_2, window_bounds = array<i64: 16, 128>}, {transform_indices = @transform_3, window_bounds = array<i64: 16, 128>}, {pipeline_mode = #tpu.pipeline_mode<synchronous>, transform_indices = @transform_4, window_bounds = array<i64: 16, 1>}, {pipeline_mode = #tpu.pipeline_mode<synchronous>, transform_indices = @transform_5, window_bounds = array<i64: 16, 1>}, {pipeline_mode = #tpu.pipeline_mode<synchronous>, transform_indices = @transform_6, window_bounds = array<i64: 16, 1>}, {pipeline_mode = #tpu.pipeline_mode<synchronous>, transform_indices = @transform_7, window_bounds = array<i64: 16, 1>}, {transform_indices = @transform_8, window_bounds = array<i64: 16, 128>}, {transform_indices = @transform_9, window_bounds = array<i64: 16, 128>}]} {
    %c0 = arith.constant 0 : index
    %c0_0 = arith.constant 0 : index
    %0 = vector.load %arg1[%c0, %c0_0] : memref<16x128xf32, #tpu.memory_space<vmem>>, vector<16x128xf32>
    %c0_1 = arith.constant 0 : index
    %c0_2 = arith.constant 0 : index
    %1 = vector.load %arg5[%c0_1, %c0_2] : memref<16x1xf32, #tpu.memory_space<vmem>>, vector<16x1xf32>
    %2 = vector.broadcast %1 : vector<16x1xf32> to vector<16x128xf32>
    %3 = arith.mulf %0, %2 : vector<16x128xf32>
    %c0_3 = arith.constant 0 : index
    %c0_4 = arith.constant 0 : index
    %4 = vector.load %arg6[%c0_3, %c0_4] : memref<16x1xf32, #tpu.memory_space<vmem>>, vector<16x1xf32>
    %5 = vector.broadcast %4 : vector<16x1xf32> to vector<16x128xf32>
    %6 = arith.addf %3, %5 : vector<16x128xf32>
    %c0_5 = arith.constant 0 : index
    %c0_6 = arith.constant 0 : index
    %7 = vector.load %arg2[%c0_5, %c0_6] : memref<16x128xf32, #tpu.memory_space<vmem>>, vector<16x128xf32>
    %c0_7 = arith.constant 0 : index
    %c0_8 = arith.constant 0 : index
    %8 = vector.load %arg7[%c0_7, %c0_8] : memref<16x1xf32, #tpu.memory_space<vmem>>, vector<16x1xf32>
    %9 = vector.broadcast %8 : vector<16x1xf32> to vector<16x128xf32>
    %10 = arith.mulf %7, %9 : vector<16x128xf32>
    %c0_9 = arith.constant 0 : index
    %c0_10 = arith.constant 0 : index
    %11 = vector.load %arg8[%c0_9, %c0_10] : memref<16x1xf32, #tpu.memory_space<vmem>>, vector<16x1xf32>
    %12 = vector.broadcast %11 : vector<16x1xf32> to vector<16x128xf32>
    %13 = arith.addf %10, %12 : vector<16x128xf32>
    %14 = arith.addf %6, %13 : vector<16x128xf32>
    %c0_11 = arith.constant 0 : index
    %c0_12 = arith.constant 0 : index
    %15 = vector.load %arg9[%c0_11, %c0_12] : memref<16x128xf32, #tpu.memory_space<vmem>>, vector<16x128xf32>
    tpu.vector_store %arg9[%c0_11, %c0_12], %14 {strides = array<i32>} : memref<16x128xf32, #tpu.memory_space<vmem>>, vector<16x128xf32>,
    %c0_13 = arith.constant 0 : index
    %c0_14 = arith.constant 0 : index
    %16 = vector.load %arg3[%c0_13, %c0_14] : memref<16x128xf32, #tpu.memory_space<vmem>>, vector<16x128xf32>
    %c0_15 = arith.constant 0 : index
    %c0_16 = arith.constant 0 : index
    %17 = vector.load %arg4[%c0_15, %c0_16] : memref<16x128xf32, #tpu.memory_space<vmem>>, vector<16x128xf32>
    %18 = math.exp %14 : vector<16x128xf32>
    %19 = arith.mulf %17, %18 : vector<16x128xf32>
    %20 = arith.addf %16, %19 : vector<16x128xf32>
    %c0_17 = arith.constant 0 : index
    %c0_18 = arith.constant 0 : index
    %21 = vector.load %arg10[%c0_17, %c0_18] : memref<16x128xf32, #tpu.memory_space<vmem>>, vector<16x128xf32>
    tpu.vector_store %arg10[%c0_17, %c0_18], %20 {strides = array<i32>} : memref<16x128xf32, #tpu.memory_space<vmem>>, vector<16x128xf32>,
    return
  }
  func.func @transform_0(%arg0: i32) -> (i32, i32) {
    %c0_i32 = arith.constant 0 : i32
    %c0_i32_0 = arith.constant 0 : i32
    return %c0_i32, %arg0 : i32, i32
  }
  func.func @transform_1(%arg0: i32) -> (i32, i32) {
    %c0_i32 = arith.constant 0 : i32
    %c0_i32_0 = arith.constant 0 : i32
    return %c0_i32, %arg0 : i32, i32
  }
  func.func @transform_2(%arg0: i32) -> (i32, i32) {
    %c0_i32 = arith.constant 0 : i32
    %c0_i32_0 = arith.constant 0 : i32
    return %c0_i32, %arg0 : i32, i32
  }
  func.func @transform_3(%arg0: i32) -> (i32, i32) {
    %c0_i32 = arith.constant 0 : i32
    %c0_i32_0 = arith.constant 0 : i32
    return %c0_i32, %arg0 : i32, i32
  }
  func.func @transform_4(%arg0: i32) -> (i32, i32) {
    %c0_i32 = arith.constant 0 : i32
    %c0_i32_0 = arith.constant 0 : i32
    %c0_i32_1 = arith.constant 0 : i32
    return %c0_i32, %c0_i32_0 : i32, i32
  }
  func.func @transform_5(%arg0: i32) -> (i32, i32) {
    %c0_i32 = arith.constant 0 : i32
    %c0_i32_0 = arith.constant 0 : i32
    %c0_i32_1 = arith.constant 0 : i32
    return %c0_i32, %c0_i32_0 : i32, i32
  }
  func.func @transform_6(%arg0: i32) -> (i32, i32) {
    %c0_i32 = arith.constant 0 : i32
    %c0_i32_0 = arith.constant 0 : i32
    %c0_i32_1 = arith.constant 0 : i32
    return %c0_i32, %c0_i32_0 : i32, i32
  }
  func.func @transform_7(%arg0: i32) -> (i32, i32) {
    %c0_i32 = arith.constant 0 : i32
    %c0_i32_0 = arith.constant 0 : i32
    %c0_i32_1 = arith.constant 0 : i32
    return %c0_i32, %c0_i32_0 : i32, i32
  }
  func.func @transform_8(%arg0: i32) -> (i32, i32) {
    %c0_i32 = arith.constant 0 : i32
    %c0_i32_0 = arith.constant 0 : i32
    return %c0_i32, %arg0 : i32, i32
  }
  func.func @transform_9(%arg0: i32) -> (i32, i32) {
    %c0_i32 = arith.constant 0 : i32
    %c0_i32_0 = arith.constant 0 : i32
    return %c0_i32, %arg0 : i32, i32
  }
}

</mosaic_0001>

<llo_original>
// kernel: encoder_forward.14
$region0: #{encoder_forward.14}
  #allocation0 [shape = 'u32[]', space=smem, size = 0x4, offset = 0x4, fixed_abs, tag = 'smem constant byte address 0x4 - core index']
  #allocation1 [shape = 'u32[144,128]{1,0:T(1,128)}', space=vmem, size = 0x12000, scoped, tag = 'internal scratch']
  %s0 = inlined_call_operand.vmem [shape: f32[8,2048], index: 0, kind: input, shape index: {}]
  %s1 = inlined_call_operand.vmem [shape: f32[8,1], index: 1, kind: input, shape index: {}]
  %s2 = inlined_call_operand.vmem [shape: f32[8,1], index: 2, kind: input, shape index: {}]
  %s3 = inlined_call_operand.vmem [shape: f32[8,2048], index: 3, kind: output, shape index: {}]
  %s4 = sld [smem:[#allocation0]]
  $region22: #{encoder_forward.14} parent=0
    _
  %s6 = ssub.s32 1, %s4
  %s7 = scalar_select 0, %s6, %s4
  // Predicated region
  $region2: #{encoder_forward.14} parent=0 // pred_check
    _
  $region3: #{encoder_forward.14} parent=0 // pred_check_branch
    %9 = sbr.rel (0) target = $region5
  $region4: #{encoder_forward.14} parent=0 // pred_region
    _
  $region5: #{encoder_forward.14} parent=0 // pred_fallthru
    _
  // Predicated region
  $region6: #{encoder_forward.14} parent=0 // pred_check
    _
  $region7: #{encoder_forward.14} parent=0 // pred_check_branch
    %11 = sbr.rel (0) target = $region9
  $region8: #{encoder_forward.14} parent=0 // pred_region
    _
  $region9: #{encoder_forward.14} parent=0 // pred_fallthru
    _
  // Predicated region
  $region10: #{encoder_forward.14} parent=0 // pred_check
    _
  $region11: #{encoder_forward.14} parent=0 // pred_check_branch
    %13 = sbr.rel (0) target = $region13
  $region12: #{encoder_forward.14} parent=0 // pred_region
    _
  $region13: #{encoder_forward.14} parent=0 // pred_fallthru
    _
  %v14 = vld [vmem:[%s0] sm:$0xff]
  %v15 = vld [vmem:[%s0 + $0x8] sm:$0xff]
  %v16 = vld [vmem:[%s0 + $0x10] sm:$0xff]
  %v17 = vld [vmem:[%s0 + $0x18] sm:$0xff]
  %v18 = vld [vmem:[%s0 + $0x20] sm:$0xff]
  %v19 = vld [vmem:[%s0 + $0x28] sm:$0xff]
  %v20 = vld [vmem:[%s0 + $0x30] sm:$0xff]
  %v21 = vld [vmem:[%s0 + $0x38] sm:$0xff]
  %v22 = vld [vmem:[%s0 + $0x40] sm:$0xff]
  %v23 = vld [vmem:[%s0 + $0x48] sm:$0xff]
  %v24 = vld [vmem:[%s0 + $0x50] sm:$0xff]
  %v25 = vld [vmem:[%s0 + $0x58] sm:$0xff]
  %v26 = vld [vmem:[%s0 + $0x60] sm:$0xff]
  %v27 = vld [vmem:[%s0 + $0x68] sm:$0xff]
  %v28 = vld [vmem:[%s0 + $0x70] sm:$0xff]
  %v29 = vld [vmem:[%s0 + $0x78] sm:$0xff]
  %v30 = vld [vmem:[%s1] sm:$0xff]
  %32 = vset.pattern.permute.xlu0 0
  %33 = vperm.xlu0 %32, %v30
  %v34 = vpop.permute.xlu0 %33
  %v36 = vmul.f32 %v14, %v34
  %v37 = vmul.f32 %v15, %v34
  %v38 = vmul.f32 %v16, %v34
  %v39 = vmul.f32 %v17, %v34
  %v40 = vmul.f32 %v18, %v34
  %v41 = vmul.f32 %v19, %v34
  %v42 = vmul.f32 %v20, %v34
  %v43 = vmul.f32 %v21, %v34
  %v44 = vmul.f32 %v22, %v34
  %v45 = vmul.f32 %v23, %v34
  %v46 = vmul.f32 %v24, %v34
  %v47 = vmul.f32 %v25, %v34
  %v48 = vmul.f32 %v26, %v34
  %v49 = vmul.f32 %v27, %v34
  %v50 = vmul.f32 %v28, %v34
  %v51 = vmul.f32 %v29, %v34
  %v52 = vld [vmem:[%s2] sm:$0xff]
  %54 = vset.pattern.permute.xlu0 0
  %55 = vperm.xlu0 %54, %v52
  %v56 = vpop.permute.xlu0 %55
  %v58 = vadd.f32 %v36, %v56
  %v59 = vadd.f32 %v37, %v56
  %v60 = vadd.f32 %v38, %v56
  %v61 = vadd.f32 %v39, %v56
  %v62 = vadd.f32 %v40, %v56
  %v63 = vadd.f32 %v41, %v56
  %v64 = vadd.f32 %v42, %v56
  %v65 = vadd.f32 %v43, %v56
  %v66 = vadd.f32 %v44, %v56
  %v67 = vadd.f32 %v45, %v56
  %v68 = vadd.f32 %v46, %v56
  %v69 = vadd.f32 %v47, %v56
  %v70 = vadd.f32 %v48, %v56
  %v71 = vadd.f32 %v49, %v56
  %v72 = vadd.f32 %v50, %v56
  %v73 = vadd.f32 %v51, %v56
  %vm74 = vcmp.gt.f32.partialorder %v58, 0.0
  %vm75 = vcmp.gt.f32.partialorder %v59, 0.0
  %vm76 = vcmp.gt.f32.partialorder %v60, 0.0
  %vm77 = vcmp.gt.f32.partialorder %v61, 0.0
  %vm78 = vcmp.gt.f32.partialorder %v62, 0.0
  %vm79 = vcmp.gt.f32.partialorder %v63, 0.0
  %vm80 = vcmp.gt.f32.partialorder %v64, 0.0
  %vm81 = vcmp.gt.f32.partialorder %v65, 0.0
  %vm82 = vcmp.gt.f32.partialorder %v66, 0.0
  %vm83 = vcmp.gt.f32.partialorder %v67, 0.0
  %vm84 = vcmp.gt.f32.partialorder %v68, 0.0
  %vm85 = vcmp.gt.f32.partialorder %v69, 0.0
  %vm86 = vcmp.gt.f32.partialorder %v70, 0.0
  %vm87 = vcmp.gt.f32.partialorder %v71, 0.0
  %vm88 = vcmp.gt.f32.partialorder %v72, 0.0
  %vm89 = vcmp.gt.f32.partialorder %v73, 0.0
  %v90 = vmul.f32 %v58, 0.2
  %v91 = vmul.f32 %v59, 0.2
  %v92 = vmul.f32 %v60, 0.2
  %v93 = vmul.f32 %v61, 0.2
  %v94 = vmul.f32 %v62, 0.2
  %v95 = vmul.f32 %v63, 0.2
  %v96 = vmul.f32 %v64, 0.2
  %v97 = vmul.f32 %v65, 0.2
  %v98 = vmul.f32 %v66, 0.2
  %v99 = vmul.f32 %v67, 0.2
  %v100 = vmul.f32 %v68, 0.2
  %v101 = vmul.f32 %v69, 0.2
  %v102 = vmul.f32 %v70, 0.2
  %v103 = vmul.f32 %v71, 0.2
  %v104 = vmul.f32 %v72, 0.2
  %v105 = vmul.f32 %v73, 0.2
  %v106 = vsel %vm74, %v58, %v90
  %v107 = vsel %vm75, %v59, %v91
  %v108 = vsel %vm76, %v60, %v92
  %v109 = vsel %vm77, %v61, %v93
  %v110 = vsel %vm78, %v62, %v94
  %v111 = vsel %vm79, %v63, %v95
  %v112 = vsel %vm80, %v64, %v96
  %v113 = vsel %vm81, %v65, %v97
  %v114 = vsel %vm82, %v66, %v98
  %v115 = vsel %vm83, %v67, %v99
  %v116 = vsel %vm84, %v68, %v100
  %v117 = vsel %vm85, %v69, %v101
  %v118 = vsel %vm86, %v70, %v102
  %v119 = vsel %vm87, %v71, %v103
  %v120 = vsel %vm88, %v72, %v104
  %v121 = vsel %vm89, %v73, %v105
  %122 = vst [vmem:[%s3] sm:$0xff] %v106
  %123 = vst [vmem:[%s3 + $0x8] sm:$0xff] %v107
  %124 = vst [vmem:[%s3 + $0x10] sm:$0xff] %v108
  %125 = vst [vmem:[%s3 + $0x18] sm:$0xff] %v109
  %126 = vst [vmem:[%s3 + $0x20] sm:$0xff] %v110
  %127 = vst [vmem:[%s3 + $0x28] sm:$0xff] %v111
  %128 = vst [vmem:[%s3 + $0x30] sm:$0xff] %v112
  %129 = vst [vmem:[%s3 + $0x38] sm:$0xff] %v113
  %130 = vst [vmem:[%s3 + $0x40] sm:$0xff] %v114
  %131 = vst [vmem:[%s3 + $0x48] sm:$0xff] %v115
  %132 = vst [vmem:[%s3 + $0x50] sm:$0xff] %v116
  %133 = vst [vmem:[%s3 + $0x58] sm:$0xff] %v117
  %134 = vst [vmem:[%s3 + $0x60] sm:$0xff] %v118
  %135 = vst [vmem:[%s3 + $0x68] sm:$0xff] %v119
  %136 = vst [vmem:[%s3 + $0x70] sm:$0xff] %v120
  %137 = vst [vmem:[%s3 + $0x78] sm:$0xff] %v121
  // Predicated region
  $region14: #{encoder_forward.14} parent=0 // pred_check
    _
  $region15: #{encoder_forward.14} parent=0 // pred_check_branch
    %139 = sbr.rel (0) target = $region17
  $region16: #{encoder_forward.14} parent=0 // pred_region
    _
  $region17: #{encoder_forward.14} parent=0 // pred_fallthru
    _
  // Predicated region
  $region18: #{encoder_forward.14} parent=0 // pred_check
    _
  $region19: #{encoder_forward.14} parent=0 // pred_check_branch
    %141 = sbr.rel (0) target = $region21
  $region20: #{encoder_forward.14} parent=0 // pred_region
    _
  $region21: #{encoder_forward.14} parent=0 // pred_fallthru
    _

// kernel: encoder_forward.13
$region0: #{encoder_forward.13}
  #allocation0 [shape = 'u32[]', space=smem, size = 0x4, offset = 0x4, fixed_abs, tag = 'smem constant byte address 0x4 - core index']
  #allocation1 [shape = 'u32[144,128]{1,0:T(1,128)}', space=vmem, size = 0x12000, scoped, tag = 'internal scratch']
  %s0 = inlined_call_operand.vmem [shape: bf16[27,2048], index: 0, kind: input, shape index: {}]
  %s1 = inlined_call_operand.vmem [shape: bf16[8,27], index: 1, kind: input, shape index: {}]
  %s2 = inlined_call_operand.vmem [shape: f32[8,1], index: 2, kind: input, shape index: {}]
  %s3 = inlined_call_operand.vmem [shape: f32[8,2048], index: 3, kind: output, shape index: {0}]
  %s4 = inlined_call_operand.vmem [shape: f32[2,16,128], index: 4, kind: output, shape index: {1}]
  %5 = xla_tuple %s3, %s4
  %s6 = sld [smem:[#allocation0]]
  $region76: #{encoder_forward.13} parent=0
    _
  %s8 = ssub.s32 1, %s6
  %s9 = scalar_select 0, %s8, %s6
  $region1: #{encoder_forward.13} parent=0
    #allocation2 [shape = 'u8[131072]{0}', space=vmem, size = 0x20000, scoped, tag = 'input window, operand 0']
    loop: start=0, step=1, limit=4
    $region2: #{encoder_forward.13} parent=1 // loop_pre_header
      _
    $region3: #{encoder_forward.13} parent=1 // loop_header
      %s11 = sphi 0, %s15
      %p12 = scmp.ge.s32.totalorder %s11, 4
      %s21 = sphi 0, %s23
      %s24 = sphi 0, %s21
      %s25 = sphi 0, %s24
      %s41 = sphi 0, %s25
      %s45 = sphi 0, %s45
      %s47 = sphi 0, %s45
      %s48 = sphi 0, %s47
      %s62 = sphi 0, %s48
      %s66 = sphi 0, %s66
      %s68 = sphi 0, %s66
      %s69 = sphi 0, %s68
      %s83 = sphi 0, %s69
      %s89 = sphi 0, %s91
      %s92 = sphi 0, %s89
      %s93 = sphi 0, %s92
      %s109 = sphi 0, %s93
      %s115 = sphi 0, %s117
      %s118 = sphi 0, %s115
      %s119 = sphi 0, %s118
      %s135 = sphi 0, %s119
    $region4: #{encoder_forward.13} parent=1 // loop_header_branch
      %14 = sbr.rel (%p12) target = $region8
    $region5: #{encoder_forward.13} parent=1 // loop_body
      %s16 = ssub.s32 %s11, 1
      %s17 = ssub.s32 %s11, 2
      %s18 = sadd.s32 %s11, 1
      %s19 = ssub.s32 %s11, %s18
      %p20 = scmp.eq.s32.totalorder %s19, 0
      %s22 = sadd.s32 %s21, 1
      %s23 = scalar_select %p20, %s21, %s22
      %p26 = pneg %p20
      %p27 = scmp.eq.s32.totalorder %s11, 1
      %p28 = por %p26, %p27
      %p29 = scmp.ne.s32.totalorder %s21, %s24
      %p30 = scmp.eq.s32.totalorder %s11, 0
      %p31 = por %p29, %p30
      %p32 = scmp.ne.s32.totalorder %s21, %s24
      %p33 = scmp.eq.s32.totalorder %s16, 1
      %p34 = por %p32, %p33
      %p35 = scmp.ne.s32.totalorder %s24, %s25
      %p36 = scmp.eq.s32.totalorder %s16, 0
      %p37 = por %p35, %p36
      %p38 = scmp.ne.s32.totalorder %s24, %s25
      %p39 = scmp.eq.s32.totalorder %s17, 1
      %p40 = por %p38, %p39
      %p42 = scmp.ne.s32.totalorder %s25, %s41
      %p43 = scmp.eq.s32.totalorder %s17, 0
      %p44 = por %p42, %p43
      %s46 = sadd.s32 %s45, 1
      %p49 = scmp.eq.s32.totalorder %s11, 1
      %p50 = scmp.ne.s32.totalorder %s45, %s47
      %p51 = scmp.eq.s32.totalorder %s11, 0
      %p52 = por %p50, %p51
      %p53 = scmp.ne.s32.totalorder %s45, %s47
      %p54 = scmp.eq.s32.totalorder %s16, 1
      %p55 = por %p53, %p54
      %p56 = scmp.ne.s32.totalorder %s47, %s48
      %p57 = scmp.eq.s32.totalorder %s16, 0
      %p58 = por %p56, %p57
      %p59 = scmp.ne.s32.totalorder %s47, %s48
      %p60 = scmp.eq.s32.totalorder %s17, 1
      %p61 = por %p59, %p60
      %p63 = scmp.ne.s32.totalorder %s48, %s62
      %p64 = scmp.eq.s32.totalorder %s17, 0
      %p65 = por %p63, %p64
      %s67 = sadd.s32 %s66, 1
      %p70 = scmp.eq.s32.totalorder %s11, 1
      %p71 = scmp.ne.s32.totalorder %s66, %s68
      %p72 = scmp.eq.s32.totalorder %s11, 0
      %p73 = por %p71, %p72
      %p74 = scmp.ne.s32.totalorder %s66, %s68
      %p75 = scmp.eq.s32.totalorder %s16, 1
      %p76 = por %p74, %p75
      %p77 = scmp.ne.s32.totalorder %s68, %s69
      %p78 = scmp.eq.s32.totalorder %s16, 0
      %p79 = por %p77, %p78
      %p80 = scmp.ne.s32.totalorder %s68, %s69
      %p81 = scmp.eq.s32.totalorder %s17, 1
      %p82 = por %p80, %p81
      %p84 = scmp.ne.s32.totalorder %s69, %s83
      %p85 = scmp.eq.s32.totalorder %s17, 0
      %p86 = por %p84, %p85
      %s87 = ssub.s32 %s11, %s18
      %p88 = scmp.eq.s32.totalorder %s87, 0
      %s90 = sadd.s32 %s89, 1
      %s91 = scalar_select %p88, %s89, %s90
      %p94 = pneg %p88
      %p95 = scmp.eq.s32.totalorder %s11, 1
      %p96 = por %p94, %p95
      %p97 = scmp.ne.s32.totalorder %s89, %s92
      %p98 = scmp.eq.s32.totalorder %s11, 0
      %p99 = por %p97, %p98
      %p100 = scmp.ne.s32.totalorder %s89, %s92
      %p101 = scmp.eq.s32.totalorder %s16, 1
      %p102 = por %p100, %p101
      %p103 = scmp.ne.s32.totalorder %s92, %s93
      %p104 = scmp.eq.s32.totalorder %s16, 0
      %p105 = por %p103, %p104
      %p106 = scmp.ne.s32.totalorder %s92, %s93
      %p107 = scmp.eq.s32.totalorder %s17, 1
      %p108 = por %p106, %p107
      %p110 = scmp.ne.s32.totalorder %s93, %s109
      %p111 = scmp.eq.s32.totalorder %s17, 0
      %p112 = por %p110, %p111
      %s113 = ssub.s32 %s11, %s18
      %p114 = scmp.eq.s32.totalorder %s113, 0
      %s116 = sadd.s32 %s115, 1
      %s117 = scalar_select %p114, %s115, %s116
      %p120 = pneg %p114
      %p121 = scmp.eq.s32.totalorder %s11, 1
      %p122 = por %p120, %p121
      %p123 = scmp.ne.s32.totalorder %s115, %s118
      %p124 = scmp.eq.s32.totalorder %s11, 0
      %p125 = por %p123, %p124
      %p126 = scmp.ne.s32.totalorder %s115, %s118
      %p127 = scmp.eq.s32.totalorder %s16, 1
      %p128 = por %p126, %p127
      %p129 = scmp.ne.s32.totalorder %s118, %s119
      %p130 = scmp.eq.s32.totalorder %s16, 0
      %p131 = por %p129, %p130
      %p132 = scmp.ne.s32.totalorder %s118, %s119
      %p133 = scmp.eq.s32.totalorder %s17, 1
      %p134 = por %p132, %p133
      %p136 = scmp.ne.s32.totalorder %s119, %s135
      %p137 = scmp.eq.s32.totalorder %s17, 0
      %p138 = por %p136, %p137
      %p139 = scmp.le.s32.totalorder 1, %s11
      %p140 = scmp.lt.s32.totalorder %s11, 3
      %p141 = pnand %p139, %p140
      %p142 = pneg %p141
      // Predicated region
      $region9: #{encoder_forward.13} parent=5 // pred_check
        _
      $region10: #{encoder_forward.13} parent=5 // pred_check_branch
        %144 = sbr.rel (%p141) target = $region12
      $region11: #{encoder_forward.13} parent=5 // pred_region
        %s145 = ssub.s32 %s11, 1
        // Predicated region
        $region13: #{encoder_forward.13} parent=11 // pred_check
          %p146 = pneg %p58
        $region14: #{encoder_forward.13} parent=11 // pred_check_branch
          %148 = sbr.rel (%p146) target = $region16
        $region15: #{encoder_forward.13} parent=11 // pred_region
          _
        $region16: #{encoder_forward.13} parent=11 // pred_fallthru
          _
        // Predicated region
        $region17: #{encoder_forward.13} parent=11 // pred_check
          %p149 = pneg %p79
        $region18: #{encoder_forward.13} parent=11 // pred_check_branch
          %151 = sbr.rel (%p149) target = $region20
        $region19: #{encoder_forward.13} parent=11 // pred_region
          _
        $region20: #{encoder_forward.13} parent=11 // pred_fallthru
          _
      $region12: #{encoder_forward.13} parent=5 // pred_fallthru
        _
      %p152 = scmp.lt.s32.totalorder %s11, 2
      // Predicated region
      $region21: #{encoder_forward.13} parent=5 // pred_check
        %p153 = pneg %p152
      $region22: #{encoder_forward.13} parent=5 // pred_check_branch
        %155 = sbr.rel (%p153) target = $region24
      $region23: #{encoder_forward.13} parent=5 // pred_region
        // Predicated region
        $region25: #{encoder_forward.13} parent=23 // pred_check
          %p156 = pneg %p31
        $region26: #{encoder_forward.13} parent=23 // pred_check_branch
          %158 = sbr.rel (%p156) target = $region28
        $region27: #{encoder_forward.13} parent=23 // pred_region
          %s159 = sand.u32 %s21, 1
          %s160 = sand.u32 %s21, 1
          %s161 = smul.addr %s160, 128
          %s162 = scalar_lea.vmem [#allocation2], %s161
          %s163 = smul.u32 8, %s11
          %s164 = smul.addr %s163, 4
          %s165 = scalar_lea.vmem %s0, %s164
          // Predicated region
          $region29: #{encoder_forward.13} parent=27 // pred_check
            _
          $region30: #{encoder_forward.13} parent=27 // pred_check_branch
            %167 = sbr.rel (0) target = $region32
          $region31: #{encoder_forward.13} parent=27 // pred_region
            // Predicated region
            $region33: #{encoder_forward.13} parent=31 // pred_check
              _
            $region34: #{encoder_forward.13} parent=31 // pred_check_branch
              %169 = sbr.rel (0) target = $region36
            $region35: #{encoder_forward.13} parent=31 // pred_region
              loop: start=0, step=1, limit=1
              $region37: #{encoder_forward.13} parent=35 // loop_pre_header
                _
              $region38: #{encoder_forward.13} parent=35 // loop_header
                %s171 = sphi 0, %s175
                %p172 = scmp.ge.s32.totalorder %s171, 1
                %s176 = sphi %s165, %s165
                %s177 = sphi %s162, %s162
              $region39: #{encoder_forward.13} parent=35 // loop_header_branch
                %174 = sbr.rel (%p172) target = $region43
              $region40: #{encoder_forward.13} parent=35 // loop_body
                %v178 = vld [vmem:[%s176] sm:$0xff]
                %179 = vst [vmem:[%s177] sm:$0xff] %v178
                %v180 = vld [vmem:[%s176 + $0x8] sm:$0xff]
                %181 = vst [vmem:[%s177 + $0x8] sm:$0xff] %v180
                %v182 = vld [vmem:[%s176 + $0x10] sm:$0xff]
                %183 = vst [vmem:[%s177 + $0x10] sm:$0xff] %v182
                %v184 = vld [vmem:[%s176 + $0x18] sm:$0xff]
                %185 = vst [vmem:[%s177 + $0x18] sm:$0xff] %v184
                %v186 = vld [vmem:[%s176 + $0x40] sm:$0xff]
                %187 = vst [vmem:[%s177 + $0x20] sm:$0xff] %v186
                %v188 = vld [vmem:[%s176 + $0x48] sm:$0xff]
                %189 = vst [vmem:[%s177 + $0x28] sm:$0xff] %v188
                %v190 = vld [vmem:[%s176 + $0x50] sm:$0xff]
                %191 = vst [vmem:[%s177 + $0x30] sm:$0xff] %v190
                %v192 = vld [vmem:[%s176 + $0x58] sm:$0xff]
                %193 = vst [vmem:[%s177 + $0x38] sm:$0xff] %v192
                %v194 = vld [vmem:[%s176 + $0x80] sm:$0xff]
                %195 = vst [vmem:[%s177 + $0x40] sm:$0xff] %v194
                %v196 = vld [vmem:[%s176 + $0x88] sm:$0xff]
                %197 = vst [vmem:[%s177 + $0x48] sm:$0xff] %v196
                %v198 = vld [vmem:[%s176 + $0x90] sm:$0xff]
                %199 = vst [vmem:[%s177 + $0x50] sm:$0xff] %v198
                %v200 = vld [vmem:[%s176 + $0x98] sm:$0xff]
                %201 = vst [vmem:[%s177 + $0x58] sm:$0xff] %v200
                %v202 = vld [vmem:[%s176 + $0xc0] sm:$0xff]
                %203 = vst [vmem:[%s177 + $0x60] sm:$0xff] %v202
                %v204 = vld [vmem:[%s176 + $0xc8] sm:$0xff]
                %205 = vst [vmem:[%s177 + $0x68] sm:$0xff] %v204
                %v206 = vld [vmem:[%s176 + $0xd0] sm:$0xff]
                %207 = vst [vmem:[%s177 + $0x70] sm:$0xff] %v206
                %v208 = vld [vmem:[%s176 + $0xd8] sm:$0xff]
                %209 = vst [vmem:[%s177 + $0x78] sm:$0xff] %v208
              $region41: #{encoder_forward.13} parent=35 // loop_footer
                %s175 = sadd.s32 1, %s171
              $region42: #{encoder_forward.13} parent=35 // loop_footer_branch
                %170 = sbr.rel target = $region38
              $region43: #{encoder_forward.13} parent=35 // loop_exit
                _
            $region36: #{encoder_forward.13} parent=31 // pred_fallthru
              _
            // Predicated region
            $region44: #{encoder_forward.13} parent=31 // pred_check
              _
            $region45: #{encoder_forward.13} parent=31 // pred_check_branch
              %211 = sbr.rel target = $region47
            $region46: #{encoder_forward.13} parent=31 // pred_region
              _
            $region47: #{encoder_forward.13} parent=31 // pred_fallthru
              _
          $region32: #{encoder_forward.13} parent=27 // pred_fallthru
            _
          %212 = vnop
        $region28: #{encoder_forward.13} parent=23 // pred_fallthru
          _
      $region24: #{encoder_forward.13} parent=5 // pred_fallthru
        _
      %p213 = scmp.le.s32.totalorder 1, %s11
      %p214 = scmp.lt.s32.totalorder %s11, 3
      %p215 = pnand %p213, %p214
      %p216 = pneg %p215
      // Predicated region
      $region48: #{encoder_forward.13} parent=5 // pred_check
        _
      $region49: #{encoder_forward.13} parent=5 // pred_check_branch
        %218 = sbr.rel (%p215) target = $region51
      $region50: #{encoder_forward.13} parent=5 // pred_region
        %s219 = ssub.s32 %s11, 1
        %s220 = sand.u32 %s24, 1
        %s221 = sand.u32 %s24, 1
        %s222 = smul.addr %s221, 128
        %s223 = scalar_lea.vmem [#allocation2], %s222
        // Predicated region
        $region52: #{encoder_forward.13} parent=50 // pred_check
          %p224 = pneg %p37
        $region53: #{encoder_forward.13} parent=50 // pred_check_branch
          %226 = sbr.rel (%p224) target = $region55
        $region54: #{encoder_forward.13} parent=50 // pred_region
          _
        $region55: #{encoder_forward.13} parent=50 // pred_fallthru
          _
        %s227 = sand.u32 %s24, 1
        %s228 = sand.u32 %s24, 1
        %s229 = smul.addr %s228, 128
        %s230 = scalar_lea.vmem [#allocation2], %s229
        %p231 = pneg %p37
        %p232 = pneg %p34
        %p233 = pneg %p58
        %p234 = pneg %p55
        %p235 = pneg %p79
        %p236 = pneg %p76
        %p237 = pneg %p105
        %p238 = pneg %p102
        %s239 = smul.u32 8, %s16
        %p240 = scmp.lt.s32.totalorder %s239, 15
        %s241 = scalar_select %p240, %s239, 15
        %s242 = smul.addr %s241, 8
        %s243 = scalar_lea.vmem %s3, %s242
        %p244 = pneg %p131
        %p245 = pneg %p128
        %p246 = scmp.lt.s32.totalorder %s16, 1
        %s247 = scalar_select %p246, %s16, 1
        %s248 = smul.addr %s247, 2
        %s249 = smul.addr %s248, 8
        %s250 = scalar_lea.vmem %s4, %s249
        %s251 = smul.u32 8, %s16
        %s252 = smul.u32 8, %s16
        %p253 = scmp.lt.s32.totalorder %s252, 15
        %s254 = scalar_select %p253, %s252, 15
        %s255 = smul.addr %s254, 8
        %s256 = scalar_lea.vmem %s3, %s255
        %s257 = smul.u32 8, %s16
        %p258 = scmp.lt.s32.totalorder %s16, 1
        %s259 = scalar_select %p258, %s16, 1
        %s260 = smul.addr %s259, 2
        %s261 = smul.addr %s260, 8
        %s262 = scalar_lea.vmem %s4, %s261
        %v264 = vld [vmem:[%s1] sm:$0xf]
        %v265 = vld [vmem:[%s223] sm:$0xff]
        %v266 = vld [vmem:[%s223 + $0x8] sm:$0xff]
        %v267 = vld [vmem:[%s223 + $0x10] sm:$0xff]
        %v268 = vld [vmem:[%s223 + $0x18] sm:$0xff]
        %v269 = vld [vmem:[%s223 + $0x20] sm:$0xff]
        %v270 = vld [vmem:[%s223 + $0x28] sm:$0xff]
        %v271 = vld [vmem:[%s223 + $0x30] sm:$0xff]
        %v272 = vld [vmem:[%s223 + $0x38] sm:$0xff]
        %v273 = vld [vmem:[%s223 + $0x40] sm:$0xff]
        %v274 = vld [vmem:[%s223 + $0x48] sm:$0xff]
        %v275 = vld [vmem:[%s223 + $0x50] sm:$0xff]
        %v276 = vld [vmem:[%s223 + $0x58] sm:$0xff]
        %v277 = vld [vmem:[%s223 + $0x60] sm:$0x33]
        %v278 = vld [vmem:[%s223 + $0x68] sm:$0x33]
        %v279 = vld [vmem:[%s223 + $0x70] sm:$0x33]
        %v280 = vld [vmem:[%s223 + $0x78] sm:$0x33]
        %v281 = vld [vmem:[%s2] sm:$0xff]
        %283 = vset.pattern.permute.xlu0 0
        %284 = vperm.xlu0 %283, %v281
        %v285 = vpop.permute.xlu0 %284
        %v303 = vunpack.c.l.b16 %v265
        %v304 = vunpack.c.h.b16 %v265
        %v305 = vunpack.c.l.b16 %v266
        %v306 = vunpack.c.h.b16 %v266
        %v307 = vunpack.c.l.b16 %v267
        %v308 = vunpack.c.h.b16 %v267
        %v309 = vunpack.c.l.b16 %v268
        %v310 = vunpack.c.h.b16 %v268
        %v311 = vunpack.c.l.b16 %v269
        %v312 = vunpack.c.h.b16 %v269
        %v313 = vunpack.c.l.b16 %v270
        %v314 = vunpack.c.h.b16 %v270
        %v315 = vunpack.c.l.b16 %v271
        %v316 = vunpack.c.h.b16 %v271
        %v317 = vunpack.c.l.b16 %v272
        %v318 = vunpack.c.h.b16 %v272
        %v319 = vunpack.c.l.b16 %v273
        %v320 = vunpack.c.h.b16 %v273
        %v321 = vunpack.c.l.b16 %v274
        %v322 = vunpack.c.h.b16 %v274
        %v323 = vunpack.c.l.b16 %v275
        %v324 = vunpack.c.h.b16 %v275
        %v325 = vunpack.c.l.b16 %v276
        %v326 = vunpack.c.h.b16 %v276
        %v327 = vunpack.c.l.b16 %v277
        %v328 = vunpack.c.h.b16 %v277
        %v329 = vunpack.c.l.b16 %v278
        %v330 = vunpack.c.h.b16 %v278
        %v331 = vunpack.c.l.b16 %v279
        %v332 = vunpack.c.h.b16 %v279
        %v333 = vunpack.c.l.b16 %v280
        %v334 = vunpack.c.h.b16 %v280
        %v335 = vpack.c.b16 %v311, %v303
        %v336 = vpack.c.b16 %v312, %v304
        %v337 = vpack.c.b16 %v313, %v305
        %v338 = vpack.c.b16 %v314, %v306
        %v339 = vpack.c.b16 %v315, %v307
        %v340 = vpack.c.b16 %v316, %v308
        %v341 = vpack.c.b16 %v317, %v309
        %v342 = vpack.c.b16 %v318, %v310
        %v343 = vpack.c.b16 %v327, %v319
        %v344 = vpack.c.b16 %v328, %v320
        %v345 = vpack.c.b16 %v329, %v321
        %v346 = vpack.c.b16 %v330, %v322
        %v347 = vpack.c.b16 %v331, %v323
        %v348 = vpack.c.b16 %v332, %v324
        %v349 = vpack.c.b16 %v333, %v325
        %v350 = vpack.c.b16 %v334, %v326
        %vm359 = vcmask 220160
        %v361 = vsel %vm359, %v264, 0
        %vm363 = vcmask 1044480
        %vm364 = vcmask 1045504
        %v365 = vsel %vm363, 4294967295, 65535
        %v366 = vsel %vm364, %v365, 0
        %v368 = vand.u32 %v343, %v366
        %v371 = vand.u32 %v344, %v366
        %v374 = vand.u32 %v345, %v366
        %v377 = vand.u32 %v346, %v366
        %v380 = vand.u32 %v347, %v366
        %v383 = vand.u32 %v348, %v366
        %v386 = vand.u32 %v349, %v366
        %v389 = vand.u32 %v350, %v366
        %391 = vmatprep.subr.bf16.mxu0 %v336
        %392 = vmatpush1.bf16.msra.mxu0 %v335
        %393 = vmatprep.subr.bf16.mxu0 %v371
        %394 = vmatpush1.bf16.msra.mxu0 %v368
        %395 = vmatprep.subr.bf16.mxu0 0
        %396 = vmatpush1.bf16.msra.mxu0 0
        %397 = vmatprep.subr.bf16.mxu0 0
        %398 = vmatpush1.bf16.msra.mxu0 0
        %399 = vmatprep.subr.bf16.mxu0 0
        %400 = vmatpush1.bf16.msra.mxu0 0
        %401 = vmatprep.subr.bf16.mxu0 0
        %402 = vmatpush1.bf16.msra.mxu0 0
        %403 = vmatprep.subr.bf16.mxu0 0
        %404 = vmatpush1.bf16.msra.mxu0 0
        %405 = vmatprep.subr.bf16.mxu0 0
        %406 = vmatpush1.bf16.msra.mxu0 0
        %407 = vmatprep.subr.bf16.mxu0 0
        %408 = vmatpush1.bf16.msra.mxu0 0
        %409 = vmatprep.subr.bf16.mxu0 0
        %410 = vmatpush1.bf16.msra.mxu0 0
        %411 = vmatprep.subr.bf16.mxu0 0
        %412 = vmatpush1.bf16.msra.mxu0 0
        %413 = vmatprep.subr.bf16.mxu0 0
        %414 = vmatpush1.bf16.msra.mxu0 0
        %415 = vmatprep.subr.bf16.mxu0 0
        %416 = vmatpush1.bf16.msra.mxu0 0
        %417 = vmatprep.subr.bf16.mxu0 0
        %418 = vmatpush1.bf16.msra.mxu0 0
        %419 = vmatprep.subr.bf16.mxu0 0
        %420 = vmatpush1.bf16.msra.mxu0 0
        %421 = vmatprep.subr.bf16.mxu0 0
        %422 = vmatpush1.bf16.msra.mxu0 0
        %423 = vmatprep.mubr.bf16.mxu0 0
        %424 = vmatmul.mubr.bf16.gmra.mrb[0].mxu0 %v361
        %v425 = vpop.f32.mrb[0].mxu0
        %v426 = vadd.f32 %v285, %v425
        %v427 = vpop.f32.mrb[0].mxu0
        %v428 = vadd.f32 %v285, %v427
        %v429 = vpop.f32.mrb[0].mxu0
        %v430 = vpop.f32.mrb[0].mxu0
        %431 = vdwg.mxu0
        %432 = vmatprep.subr.bf16.mxu0 %v338
        %433 = vmatpush1.bf16.msra.mxu0 %v337
        %434 = vmatprep.subr.bf16.mxu0 %v377
        %435 = vmatpush1.bf16.msra.mxu0 %v374
        %436 = vmatprep.subr.bf16.mxu0 0
        %437 = vmatpush1.bf16.msra.mxu0 0
        %438 = vmatprep.subr.bf16.mxu0 0
        %439 = vmatpush1.bf16.msra.mxu0 0
        %440 = vmatprep.subr.bf16.mxu0 0
        %441 = vmatpush1.bf16.msra.mxu0 0
        %442 = vmatprep.subr.bf16.mxu0 0
        %443 = vmatpush1.bf16.msra.mxu0 0
        %444 = vmatprep.subr.bf16.mxu0 0
        %445 = vmatpush1.bf16.msra.mxu0 0
        %446 = vmatprep.subr.bf16.mxu0 0
        %447 = vmatpush1.bf16.msra.mxu0 0
        %448 = vmatprep.subr.bf16.mxu0 0
        %449 = vmatpush1.bf16.msra.mxu0 0
        %450 = vmatprep.subr.bf16.mxu0 0
        %451 = vmatpush1.bf16.msra.mxu0 0
        %452 = vmatprep.subr.bf16.mxu0 0
        %453 = vmatpush1.bf16.msra.mxu0 0
        %454 = vmatprep.subr.bf16.mxu0 0
        %455 = vmatpush1.bf16.msra.mxu0 0
        %456 = vmatprep.subr.bf16.mxu0 0
        %457 = vmatpush1.bf16.msra.mxu0 0
        %458 = vmatprep.subr.bf16.mxu0 0
        %459 = vmatpush1.bf16.msra.mxu0 0
        %460 = vmatprep.subr.bf16.mxu0 0
        %461 = vmatpush1.bf16.msra.mxu0 0
        %462 = vmatprep.subr.bf16.mxu0 0
        %463 = vmatpush1.bf16.msra.mxu0 0
        %464 = vmatprep.mubr.bf16.mxu0 0
        %465 = vmatmul.mubr.bf16.gmra.mrb[0].mxu0 %v361
        %v466 = vpop.f32.mrb[0].mxu0
        %v467 = vadd.f32 %v285, %v466
        %v468 = vpop.f32.mrb[0].mxu0
        %v469 = vadd.f32 %v285, %v468
        %v470 = vpop.f32.mrb[0].mxu0
        %v471 = vpop.f32.mrb[0].mxu0
        %472 = vdwg.mxu0
        %473 = vmatprep.subr.bf16.mxu0 %v340
        %474 = vmatpush1.bf16.msra.mxu0 %v339
        %475 = vmatprep.subr.bf16.mxu0 %v383
        %476 = vmatpush1.bf16.msra.mxu0 %v380
        %477 = vmatprep.subr.bf16.mxu0 0
        %478 = vmatpush1.bf16.msra.mxu0 0
        %479 = vmatprep.subr.bf16.mxu0 0
        %480 = vmatpush1.bf16.msra.mxu0 0
        %481 = vmatprep.subr.bf16.mxu0 0
        %482 = vmatpush1.bf16.msra.mxu0 0
        %483 = vmatprep.subr.bf16.mxu0 0
        %484 = vmatpush1.bf16.msra.mxu0 0
        %485 = vmatprep.subr.bf16.mxu0 0
        %486 = vmatpush1.bf16.msra.mxu0 0
        %487 = vmatprep.subr.bf16.mxu0 0
        %488 = vmatpush1.bf16.msra.mxu0 0
        %489 = vmatprep.subr.bf16.mxu0 0
        %490 = vmatpush1.bf16.msra.mxu0 0
        %491 = vmatprep.subr.bf16.mxu0 0
        %492 = vmatpush1.bf16.msra.mxu0 0
        %493 = vmatprep.subr.bf16.mxu0 0
        %494 = vmatpush1.bf16.msra.mxu0 0
        %495 = vmatprep.subr.bf16.mxu0 0
        %496 = vmatpush1.bf16.msra.mxu0 0
        %497 = vmatprep.subr.bf16.mxu0 0
        %498 = vmatpush1.bf16.msra.mxu0 0
        %499 = vmatprep.subr.bf16.mxu0 0
        %500 = vmatpush1.bf16.msra.mxu0 0
        %501 = vmatprep.subr.bf16.mxu0 0
        %502 = vmatpush1.bf16.msra.mxu0 0
        %503 = vmatprep.subr.bf16.mxu0 0
        %504 = vmatpush1.bf16.msra.mxu0 0
        %505 = vmatprep.mubr.bf16.mxu0 0
        %506 = vmatmul.mubr.bf16.gmra.mrb[0].mxu0 %v361
        %v507 = vpop.f32.mrb[0].mxu0
        %v508 = vadd.f32 %v285, %v507
        %v509 = vpop.f32.mrb[0].mxu0
        %v510 = vadd.f32 %v285, %v509
        %v511 = vpop.f32.mrb[0].mxu0
        %v512 = vpop.f32.mrb[0].mxu0
        %513 = vdwg.mxu0
        %514 = vmatprep.subr.bf16.mxu0 %v342
        %515 = vmatpush1.bf16.msra.mxu0 %v341
        %516 = vmatprep.subr.bf16.mxu0 %v389
        %517 = vmatpush1.bf16.msra.mxu0 %v386
        %518 = vmatprep.subr.bf16.mxu0 0
        %519 = vmatpush1.bf16.msra.mxu0 0
        %520 = vmatprep.subr.bf16.mxu0 0
        %521 = vmatpush1.bf16.msra.mxu0 0
        %522 = vmatprep.subr.bf16.mxu0 0
        %523 = vmatpush1.bf16.msra.mxu0 0
        %524 = vmatprep.subr.bf16.mxu0 0
        %525 = vmatpush1.bf16.msra.mxu0 0
        %526 = vmatprep.subr.bf16.mxu0 0
        %527 = vmatpush1.bf16.msra.mxu0 0
        %528 = vmatprep.subr.bf16.mxu0 0
        %529 = vmatpush1.bf16.msra.mxu0 0
        %530 = vmatprep.subr.bf16.mxu0 0
        %531 = vmatpush1.bf16.msra.mxu0 0
        %532 = vmatprep.subr.bf16.mxu0 0
        %533 = vmatpush1.bf16.msra.mxu0 0
        %534 = vmatprep.subr.bf16.mxu0 0
        %535 = vmatpush1.bf16.msra.mxu0 0
        %536 = vmatprep.subr.bf16.mxu0 0
        %537 = vmatpush1.bf16.msra.mxu0 0
        %538 = vmatprep.subr.bf16.mxu0 0
        %539 = vmatpush1.bf16.msra.mxu0 0
        %540 = vmatprep.subr.bf16.mxu0 0
        %541 = vmatpush1.bf16.msra.mxu0 0
        %542 = vmatprep.subr.bf16.mxu0 0
        %543 = vmatpush1.bf16.msra.mxu0 0
        %544 = vmatprep.subr.bf16.mxu0 0
        %545 = vmatpush1.bf16.msra.mxu0 0
        %546 = vmatprep.mubr.bf16.mxu0 0
        %547 = vmatmul.mubr.bf16.gmra.mrb[0].mxu0 %v361
        %v548 = vpop.f32.mrb[0].mxu0
        %v549 = vadd.f32 %v285, %v548
        %v550 = vpop.f32.mrb[0].mxu0
        %v551 = vadd.f32 %v285, %v550
        %v552 = vpop.f32.mrb[0].mxu0
        %v553 = vpop.f32.mrb[0].mxu0
        %554 = vdwg.mxu0
        %s555 = smul.u32 %s16, 1024
        %v556 = vlaneseq
        %v557 = vand.u32 %v556, 127
        %v558 = vadd.s32 %v557, 128
        %v559 = vadd.s32 %v557, 256
        %v560 = vadd.s32 %v557, 384
        %v561 = vadd.s32 %v557, 512
        %v562 = vadd.s32 %v557, 640
        %v563 = vadd.s32 %v557, 768
        %v564 = vadd.s32 %v557, 896
        %v565 = vstv %s555
        %v566 = vadd.s32 %v557, %v565
        %v567 = vadd.s32 %v558, %v565
        %v568 = vadd.s32 %v559, %v565
        %v569 = vadd.s32 %v560, %v565
        %v570 = vadd.s32 %v561, %v565
        %v571 = vadd.s32 %v562, %v565
        %v572 = vadd.s32 %v563, %v565
        %v573 = vadd.s32 %v564, %v565
        %vm574 = vcmp.lt.s32.totalorder %v566, 2048
        %vm575 = vcmp.lt.s32.totalorder %v567, 2048
        %vm576 = vcmp.lt.s32.totalorder %v568, 2048
        %vm577 = vcmp.lt.s32.totalorder %v569, 2048
        %vm578 = vcmp.lt.s32.totalorder %v570, 2048
        %vm579 = vcmp.lt.s32.totalorder %v571, 2048
        %vm580 = vcmp.lt.s32.totalorder %v572, 2048
        %vm581 = vcmp.lt.s32.totalorder %v573, 2048
        %v582 = vsel %vm574, 1, 0
        %v583 = vsel %vm575, 1, 0
        %v584 = vsel %vm576, 1, 0
        %v585 = vsel %vm577, 1, 0
        %v586 = vsel %vm578, 1, 0
        %v587 = vsel %vm579, 1, 0
        %v588 = vsel %vm580, 1, 0
        %v589 = vsel %vm581, 1, 0
        %vm590 = vcmp.eq.s32.totalorder %v582, 1
        %vm591 = vcmp.eq.s32.totalorder %v583, 1
        %vm592 = vcmp.eq.s32.totalorder %v584, 1
        %vm593 = vcmp.eq.s32.totalorder %v585, 1
        %vm594 = vcmp.eq.s32.totalorder %v586, 1
        %vm595 = vcmp.eq.s32.totalorder %v587, 1
        %vm596 = vcmp.eq.s32.totalorder %v588, 1
        %vm597 = vcmp.eq.s32.totalorder %v589, 1
        %v598 = vsel %vm590, %v426, 0.0
        %v599 = vsel %vm591, %v428, 0.0
        %v600 = vsel %vm592, %v467, 0.0
        %v601 = vsel %vm593, %v469, 0.0
        %v602 = vsel %vm594, %v508, 0.0
        %v603 = vsel %vm595, %v510, 0.0
        %v604 = vsel %vm596, %v549, 0.0
        %v605 = vsel %vm597, %v551, 0.0
        %v606 = vadd.f32 %v598, %v599
        %v607 = vadd.f32 %v606, %v600
        %v608 = vadd.f32 %v607, %v601
        %v609 = vadd.f32 %v608, %v602
        %v610 = vadd.f32 %v609, %v603
        %v611 = vadd.f32 %v610, %v604
        %v612 = vadd.f32 %v611, %v605
        %613 = vadd.xlane.f32.xlu0 %v612
        %v614 = vpop.xlane.xlu0 %613
        %v615 = vmul.f32 %v598, %v598
        %v616 = vmul.f32 %v599, %v599
        %v617 = vmul.f32 %v600, %v600
        %v618 = vmul.f32 %v601, %v601
        %v619 = vmul.f32 %v602, %v602
        %v620 = vmul.f32 %v603, %v603
        %v621 = vmul.f32 %v604, %v604
        %v622 = vmul.f32 %v605, %v605
        %v623 = vadd.f32 %v615, %v616
        %v624 = vadd.f32 %v623, %v617
        %v625 = vadd.f32 %v624, %v618
        %v626 = vadd.f32 %v625, %v619
        %v627 = vadd.f32 %v626, %v620
        %v628 = vadd.f32 %v627, %v621
        %v629 = vadd.f32 %v628, %v622
        %630 = vadd.xlane.f32.xlu0 %v629
        %v631 = vpop.xlane.xlu0 %630
        %633 = vset.pattern.permute.xlu0 0
        %634 = vperm.xlu0 %633, %v614
        %v635 = vpop.permute.xlu0 %634
        %638 = vset.pattern.permute.xlu0 0
        %639 = vperm.xlu0 %638, %v631
        %v640 = vpop.permute.xlu0 %639
        %642 = vst [vmem:[%s262] sm:$0xff] %v635
        %643 = vst [vmem:[%s262 + $0x8] sm:$0xff] %v640
        %644 = vst [vmem:[%s256] sm:$0xff] %v426
        %645 = vst [vmem:[%s256 + $0x8] sm:$0xff] %v428
        %646 = vst [vmem:[%s256 + $0x10] sm:$0xff] %v467
        %647 = vst [vmem:[%s256 + $0x18] sm:$0xff] %v469
        %648 = vst [vmem:[%s256 + $0x20] sm:$0xff] %v508
        %649 = vst [vmem:[%s256 + $0x28] sm:$0xff] %v510
        %650 = vst [vmem:[%s256 + $0x30] sm:$0xff] %v549
        %651 = vst [vmem:[%s256 + $0x38] sm:$0xff] %v551
        %s652 = smul.u32 8, %s16
        %p653 = scmp.lt.s32.totalorder %s652, 15
        %s654 = scalar_select %p653, %s652, 15
        %s655 = smul.addr %s654, 8
        %s656 = scalar_lea.vmem %s3, %s655
        %p657 = scmp.lt.s32.totalorder %s16, 1
        %s658 = scalar_select %p657, %s16, 1
        %s659 = smul.addr %s658, 2
        %s660 = smul.addr %s659, 8
        %s661 = scalar_lea.vmem %s4, %s660
        // Predicated region
        $region56: #{encoder_forward.13} parent=50 // pred_check
          %p662 = pneg %p102
        $region57: #{encoder_forward.13} parent=50 // pred_check_branch
          %664 = sbr.rel (%p662) target = $region59
        $region58: #{encoder_forward.13} parent=50 // pred_region
          %s665 = smul.u32 8, %s16
        $region59: #{encoder_forward.13} parent=50 // pred_fallthru
          _
        // Predicated region
        $region60: #{encoder_forward.13} parent=50 // pred_check
          %p666 = pneg %p128
        $region61: #{encoder_forward.13} parent=50 // pred_check_branch
          %668 = sbr.rel (%p666) target = $region63
        $region62: #{encoder_forward.13} parent=50 // pred_region
          _
        $region63: #{encoder_forward.13} parent=50 // pred_fallthru
          _
      $region51: #{encoder_forward.13} parent=5 // pred_fallthru
        _
      %p669 = scmp.le.s32.totalorder 2, %s11
      // Predicated region
      $region64: #{encoder_forward.13} parent=5 // pred_check
        %p670 = pneg %p669
      $region65: #{encoder_forward.13} parent=5 // pred_check_branch
        %672 = sbr.rel (%p670) target = $region67
      $region66: #{encoder_forward.13} parent=5 // pred_region
        %s673 = ssub.s32 %s11, 2
        // Predicated region
        $region68: #{encoder_forward.13} parent=66 // pred_check
          %p674 = pneg %p108
        $region69: #{encoder_forward.13} parent=66 // pred_check_branch
          %676 = sbr.rel (%p674) target = $region71
        $region70: #{encoder_forward.13} parent=66 // pred_region
          %s677 = smul.u32 8, %s17
          %p678 = scmp.lt.s32.totalorder %s677, 15
          %s679 = scalar_select %p678, %s677, 15
          %s680 = smul.addr %s679, 8
          %s681 = scalar_lea.vmem %s3, %s680
        $region71: #{encoder_forward.13} parent=66 // pred_fallthru
          _
        // Predicated region
        $region72: #{encoder_forward.13} parent=66 // pred_check
          %p682 = pneg %p134
        $region73: #{encoder_forward.13} parent=66 // pred_check_branch
          %684 = sbr.rel (%p682) target = $region75
        $region74: #{encoder_forward.13} parent=66 // pred_region
          %p685 = scmp.lt.s32.totalorder %s17, 1
          %s686 = scalar_select %p685, %s17, 1
          %s687 = smul.addr %s686, 2
          %s688 = smul.addr %s687, 8
          %s689 = scalar_lea.vmem %s4, %s688
        $region75: #{encoder_forward.13} parent=66 // pred_fallthru
          _
      $region67: #{encoder_forward.13} parent=5 // pred_fallthru
        _
    $region6: #{encoder_forward.13} parent=1 // loop_footer
      %s15 = sadd.s32 1, %s11
    $region7: #{encoder_forward.13} parent=1 // loop_footer_branch
      %10 = sbr.rel target = $region3
    $region8: #{encoder_forward.13} parent=1 // loop_exit
      _

// kernel: encoder_forward.15
$region0: #{encoder_forward.15}
  #allocation0 [shape = 'u32[]', space=smem, size = 0x4, offset = 0x4, fixed_abs, tag = 'smem constant byte address 0x4 - core index']
  #allocation1 [shape = 'u32[144,128]{1,0:T(1,128)}', space=vmem, size = 0x12000, scoped, tag = 'internal scratch']
  %s0 = inlined_call_operand.vmem [shape: bf16[216,512], index: 0, kind: input, shape index: {}]
  %s1 = inlined_call_operand.vmem [shape: bf16[16,216], index: 1, kind: input, shape index: {}]
  %s2 = inlined_call_operand.vmem [shape: f32[16,1], index: 2, kind: input, shape index: {}]
  %s3 = inlined_call_operand.vmem [shape: f32[8,512], index: 3, kind: output, shape index: {0}]
  %s4 = inlined_call_operand.vmem [shape: f32[8,512], index: 4, kind: output, shape index: {1}]
  %s5 = inlined_call_operand.vmem [shape: f32[1,32,128], index: 5, kind: output, shape index: {2}]
  %6 = xla_tuple %s3, %s4, %s5
  %s7 = sld [smem:[#allocation0]]
  $region38: #{encoder_forward.15} parent=0
    _
  %s9 = ssub.s32 1, %s7
  %s10 = scalar_select 0, %s9, %s7
  // Predicated region
  $region2: #{encoder_forward.15} parent=0 // pred_check
    _
  $region3: #{encoder_forward.15} parent=0 // pred_check_branch
    %12 = sbr.rel (0) target = $region5
  $region4: #{encoder_forward.15} parent=0 // pred_region
    _
  $region5: #{encoder_forward.15} parent=0 // pred_fallthru
    _
  // Predicated region
  $region6: #{encoder_forward.15} parent=0 // pred_check
    _
  $region7: #{encoder_forward.15} parent=0 // pred_check_branch
    %14 = sbr.rel (0) target = $region9
  $region8: #{encoder_forward.15} parent=0 // pred_region
    _
  $region9: #{encoder_forward.15} parent=0 // pred_fallthru
    _
  // Predicated region
  $region10: #{encoder_forward.15} parent=0 // pred_check
    _
  $region11: #{encoder_forward.15} parent=0 // pred_check_branch
    %16 = sbr.rel (0) target = $region13
  $region12: #{encoder_forward.15} parent=0 // pred_region
    _
  $region13: #{encoder_forward.15} parent=0 // pred_fallthru
    _
  %v18 = vld [vmem:[%s1] sm:$0xff]
  %v19 = vld [vmem:[%s1 + $0x8] sm:$0xff]
  %v20 = vld [vmem:[%s0] sm:$0xff]
  %v21 = vld [vmem:[%s0 + $0x8] sm:$0xff]
  %v22 = vld [vmem:[%s0 + $0x10] sm:$0xff]
  %v23 = vld [vmem:[%s0 + $0x18] sm:$0xff]
  %v24 = vld [vmem:[%s0 + $0x20] sm:$0xff]
  %v25 = vld [vmem:[%s0 + $0x28] sm:$0xff]
  %v26 = vld [vmem:[%s0 + $0x30] sm:$0xff]
  %v27 = vld [vmem:[%s0 + $0x38] sm:$0xff]
  %v28 = vld [vmem:[%s0 + $0x40] sm:$0xff]
  %v29 = vld [vmem:[%s0 + $0x48] sm:$0xff]
  %v30 = vld [vmem:[%s0 + $0x50] sm:$0xff]
  %v31 = vld [vmem:[%s0 + $0x58] sm:$0xff]
  %v32 = vld [vmem:[%s0 + $0x60] sm:$0xff]
  %v33 = vld [vmem:[%s0 + $0x68] sm:$0xff]
  %v34 = vld [vmem:[%s0 + $0x70] sm:$0xff]
  %v35 = vld [vmem:[%s0 + $0x78] sm:$0xff]
  %v36 = vld [vmem:[%s0 + $0x80] sm:$0xff]
  %v37 = vld [vmem:[%s0 + $0x88] sm:$0xff]
  %v38 = vld [vmem:[%s0 + $0x90] sm:$0xff]
  %v39 = vld [vmem:[%s0 + $0x98] sm:$0xff]
  %v40 = vld [vmem:[%s0 + $0xa0] sm:$0xff]
  %v41 = vld [vmem:[%s0 + $0xa8] sm:$0xff]
  %v42 = vld [vmem:[%s0 + $0xb0] sm:$0xff]
  %v43 = vld [vmem:[%s0 + $0xb8] sm:$0xff]
  %v44 = vld [vmem:[%s0 + $0xc0] sm:$0xff]
  %v45 = vld [vmem:[%s0 + $0xc8] sm:$0xff]
  %v46 = vld [vmem:[%s0 + $0xd0] sm:$0xff]
  %v47 = vld [vmem:[%s0 + $0xd8] sm:$0xff]
  %v48 = vld [vmem:[%s0 + $0xe0] sm:$0xff]
  %v49 = vld [vmem:[%s0 + $0xe8] sm:$0xff]
  %v50 = vld [vmem:[%s0 + $0xf0] sm:$0xff]
  %v51 = vld [vmem:[%s0 + $0xf8] sm:$0xff]
  %v52 = vld [vmem:[%s0 + $0x100] sm:$0xff]
  %v53 = vld [vmem:[%s0 + $0x108] sm:$0xff]
  %v54 = vld [vmem:[%s0 + $0x110] sm:$0xff]
  %v55 = vld [vmem:[%s0 + $0x118] sm:$0xff]
  %v56 = vld [vmem:[%s0 + $0x120] sm:$0xff]
  %v57 = vld [vmem:[%s0 + $0x128] sm:$0xff]
  %v58 = vld [vmem:[%s0 + $0x130] sm:$0xff]
  %v59 = vld [vmem:[%s0 + $0x138] sm:$0xff]
  %v60 = vld [vmem:[%s0 + $0x140] sm:$0xff]
  %v61 = vld [vmem:[%s0 + $0x148] sm:$0xff]
  %v62 = vld [vmem:[%s0 + $0x150] sm:$0xff]
  %v63 = vld [vmem:[%s0 + $0x158] sm:$0xff]
  %v64 = vld [vmem:[%s0 + $0x160] sm:$0xff]
  %v65 = vld [vmem:[%s0 + $0x168] sm:$0xff]
  %v66 = vld [vmem:[%s0 + $0x170] sm:$0xff]
  %v67 = vld [vmem:[%s0 + $0x178] sm:$0xff]
  %v68 = vld [vmem:[%s0 + $0x180] sm:$0xff]
  %v69 = vld [vmem:[%s0 + $0x188] sm:$0xff]
  %v70 = vld [vmem:[%s0 + $0x190] sm:$0xff]
  %v71 = vld [vmem:[%s0 + $0x198] sm:$0xff]
  %v72 = vld [vmem:[%s0 + $0x1a0] sm:$0xff]
  %v73 = vld [vmem:[%s0 + $0x1a8] sm:$0xff]
  %v74 = vld [vmem:[%s2] sm:$0xff]
  %v75 = vld [vmem:[%s2 + $0x8] sm:$0xff]
  %77 = vset.pattern.permute.xlu0 0
  %78 = vperm.xlu0 %77, %v74
  %v79 = vpop.permute.xlu0 %78
  %82 = vset.pattern.permute.xlu0 0
  %83 = vperm.xlu0 %82, %v75
  %v84 = vpop.permute.xlu0 %83
  %v88 = vunpack.c.l.b16 %v18
  %v89 = vunpack.c.h.b16 %v18
  %v90 = vunpack.c.l.b16 %v19
  %v91 = vunpack.c.h.b16 %v19
  %v92 = vpack.c.b16 %v90, %v88
  %v93 = vpack.c.b16 %v91, %v89
  %v149 = vunpack.c.l.b16 %v20
  %v150 = vunpack.c.h.b16 %v20
  %v151 = vunpack.c.l.b16 %v21
  %v152 = vunpack.c.h.b16 %v21
  %v153 = vunpack.c.l.b16 %v22
  %v154 = vunpack.c.h.b16 %v22
  %v155 = vunpack.c.l.b16 %v23
  %v156 = vunpack.c.h.b16 %v23
  %v157 = vunpack.c.l.b16 %v24
  %v158 = vunpack.c.h.b16 %v24
  %v159 = vunpack.c.l.b16 %v25
  %v160 = vunpack.c.h.b16 %v25
  %v161 = vunpack.c.l.b16 %v26
  %v162 = vunpack.c.h.b16 %v26
  %v163 = vunpack.c.l.b16 %v27
  %v164 = vunpack.c.h.b16 %v27
  %v165 = vunpack.c.l.b16 %v28
  %v166 = vunpack.c.h.b16 %v28
  %v167 = vunpack.c.l.b16 %v29
  %v168 = vunpack.c.h.b16 %v29
  %v169 = vunpack.c.l.b16 %v30
  %v170 = vunpack.c.h.b16 %v30
  %v171 = vunpack.c.l.b16 %v31
  %v172 = vunpack.c.h.b16 %v31
  %v173 = vunpack.c.l.b16 %v32
  %v174 = vunpack.c.h.b16 %v32
  %v175 = vunpack.c.l.b16 %v33
  %v176 = vunpack.c.h.b16 %v33
  %v177 = vunpack.c.l.b16 %v34
  %v178 = vunpack.c.h.b16 %v34
  %v179 = vunpack.c.l.b16 %v35
  %v180 = vunpack.c.h.b16 %v35
  %v181 = vunpack.c.l.b16 %v36
  %v182 = vunpack.c.h.b16 %v36
  %v183 = vunpack.c.l.b16 %v37
  %v184 = vunpack.c.h.b16 %v37
  %v185 = vunpack.c.l.b16 %v38
  %v186 = vunpack.c.h.b16 %v38
  %v187 = vunpack.c.l.b16 %v39
  %v188 = vunpack.c.h.b16 %v39
  %v189 = vunpack.c.l.b16 %v40
  %v190 = vunpack.c.h.b16 %v40
  %v191 = vunpack.c.l.b16 %v41
  %v192 = vunpack.c.h.b16 %v41
  %v193 = vunpack.c.l.b16 %v42
  %v194 = vunpack.c.h.b16 %v42
  %v195 = vunpack.c.l.b16 %v43
  %v196 = vunpack.c.h.b16 %v43
  %v197 = vunpack.c.l.b16 %v44
  %v198 = vunpack.c.h.b16 %v44
  %v199 = vunpack.c.l.b16 %v45
  %v200 = vunpack.c.h.b16 %v45
  %v201 = vunpack.c.l.b16 %v46
  %v202 = vunpack.c.h.b16 %v46
  %v203 = vunpack.c.l.b16 %v47
  %v204 = vunpack.c.h.b16 %v47
  %v205 = vunpack.c.l.b16 %v48
  %v206 = vunpack.c.h.b16 %v48
  %v207 = vunpack.c.l.b16 %v49
  %v208 = vunpack.c.h.b16 %v49
  %v209 = vunpack.c.l.b16 %v50
  %v210 = vunpack.c.h.b16 %v50
  %v211 = vunpack.c.l.b16 %v51
  %v212 = vunpack.c.h.b16 %v51
  %v213 = vunpack.c.l.b16 %v52
  %v214 = vunpack.c.h.b16 %v52
  %v215 = vunpack.c.l.b16 %v53
  %v216 = vunpack.c.h.b16 %v53
  %v217 = vunpack.c.l.b16 %v54
  %v218 = vunpack.c.h.b16 %v54
  %v219 = vunpack.c.l.b16 %v55
  %v220 = vunpack.c.h.b16 %v55
  %v221 = vunpack.c.l.b16 %v56
  %v222 = vunpack.c.h.b16 %v56
  %v223 = vunpack.c.l.b16 %v57
  %v224 = vunpack.c.h.b16 %v57
  %v225 = vunpack.c.l.b16 %v58
  %v226 = vunpack.c.h.b16 %v58
  %v227 = vunpack.c.l.b16 %v59
  %v228 = vunpack.c.h.b16 %v59
  %v229 = vunpack.c.l.b16 %v60
  %v230 = vunpack.c.h.b16 %v60
  %v231 = vunpack.c.l.b16 %v61
  %v232 = vunpack.c.h.b16 %v61
  %v233 = vunpack.c.l.b16 %v62
  %v234 = vunpack.c.h.b16 %v62
  %v235 = vunpack.c.l.b16 %v63
  %v236 = vunpack.c.h.b16 %v63
  %v237 = vunpack.c.l.b16 %v64
  %v238 = vunpack.c.h.b16 %v64
  %v239 = vunpack.c.l.b16 %v65
  %v240 = vunpack.c.h.b16 %v65
  %v241 = vunpack.c.l.b16 %v66
  %v242 = vunpack.c.h.b16 %v66
  %v243 = vunpack.c.l.b16 %v67
  %v244 = vunpack.c.h.b16 %v67
  %v245 = vunpack.c.l.b16 %v68
  %v246 = vunpack.c.h.b16 %v68
  %v247 = vunpack.c.l.b16 %v69
  %v248 = vunpack.c.h.b16 %v69
  %v249 = vunpack.c.l.b16 %v70
  %v250 = vunpack.c.h.b16 %v70
  %v251 = vunpack.c.l.b16 %v71
  %v252 = vunpack.c.h.b16 %v71
  %v253 = vunpack.c.l.b16 %v72
  %v254 = vunpack.c.h.b16 %v72
  %v255 = vunpack.c.l.b16 %v73
  %v256 = vunpack.c.h.b16 %v73
  %v257 = vpack.c.b16 %v153, %v149
  %v258 = vpack.c.b16 %v154, %v150
  %v259 = vpack.c.b16 %v155, %v151
  %v260 = vpack.c.b16 %v156, %v152
  %v261 = vpack.c.b16 %v161, %v157
  %v262 = vpack.c.b16 %v162, %v158
  %v263 = vpack.c.b16 %v163, %v159
  %v264 = vpack.c.b16 %v164, %v160
  %v265 = vpack.c.b16 %v169, %v165
  %v266 = vpack.c.b16 %v170, %v166
  %v267 = vpack.c.b16 %v171, %v167
  %v268 = vpack.c.b16 %v172, %v168
  %v269 = vpack.c.b16 %v177, %v173
  %v270 = vpack.c.b16 %v178, %v174
  %v271 = vpack.c.b16 %v179, %v175
  %v272 = vpack.c.b16 %v180, %v176
  %v273 = vpack.c.b16 %v185, %v181
  %v274 = vpack.c.b16 %v186, %v182
  %v275 = vpack.c.b16 %v187, %v183
  %v276 = vpack.c.b16 %v188, %v184
  %v277 = vpack.c.b16 %v193, %v189
  %v278 = vpack.c.b16 %v194, %v190
  %v279 = vpack.c.b16 %v195, %v191
  %v280 = vpack.c.b16 %v196, %v192
  %v281 = vpack.c.b16 %v201, %v197
  %v282 = vpack.c.b16 %v202, %v198
  %v283 = vpack.c.b16 %v203, %v199
  %v284 = vpack.c.b16 %v204, %v200
  %v285 = vpack.c.b16 %v209, %v205
  %v286 = vpack.c.b16 %v210, %v206
  %v287 = vpack.c.b16 %v211, %v207
  %v288 = vpack.c.b16 %v212, %v208
  %v289 = vpack.c.b16 %v217, %v213
  %v290 = vpack.c.b16 %v218, %v214
  %v291 = vpack.c.b16 %v219, %v215
  %v292 = vpack.c.b16 %v220, %v216
  %v293 = vpack.c.b16 %v225, %v221
  %v294 = vpack.c.b16 %v226, %v222
  %v295 = vpack.c.b16 %v227, %v223
  %v296 = vpack.c.b16 %v228, %v224
  %v297 = vpack.c.b16 %v233, %v229
  %v298 = vpack.c.b16 %v234, %v230
  %v299 = vpack.c.b16 %v235, %v231
  %v300 = vpack.c.b16 %v236, %v232
  %v301 = vpack.c.b16 %v241, %v237
  %v302 = vpack.c.b16 %v242, %v238
  %v303 = vpack.c.b16 %v243, %v239
  %v304 = vpack.c.b16 %v244, %v240
  %v305 = vpack.c.b16 %v249, %v245
  %v306 = vpack.c.b16 %v250, %v246
  %v307 = vpack.c.b16 %v251, %v247
  %v308 = vpack.c.b16 %v252, %v248
  %v309 = vpack.c.b16 %v253, %v253
  %v310 = vpack.c.b16 %v254, %v254
  %v311 = vpack.c.b16 %v255, %v255
  %v312 = vpack.c.b16 %v256, %v256
  %vm365 = vcmask 719872
  %v367 = vsel %vm365, %v93, 0
  %vm369 = vcmask 1043456
  %v371 = vsel %vm369, %v309, 0
  %v374 = vsel %vm369, %v310, 0
  %v377 = vsel %vm369, %v311, 0
  %v380 = vsel %vm369, %v312, 0
  %382 = vmatprep.subr.bf16.mxu0 %v258
  %383 = vmatpush1.bf16.msra.mxu0 %v257
  %384 = vmatprep.subr.bf16.mxu0 %v262
  %385 = vmatpush1.bf16.msra.mxu0 %v261
  %386 = vmatprep.subr.bf16.mxu0 %v266
  %387 = vmatpush1.bf16.msra.mxu0 %v265
  %388 = vmatprep.subr.bf16.mxu0 %v270
  %389 = vmatpush1.bf16.msra.mxu0 %v269
  %390 = vmatprep.subr.bf16.mxu0 %v274
  %391 = vmatpush1.bf16.msra.mxu0 %v273
  %392 = vmatprep.subr.bf16.mxu0 %v278
  %393 = vmatpush1.bf16.msra.mxu0 %v277
  %394 = vmatprep.subr.bf16.mxu0 %v282
  %395 = vmatpush1.bf16.msra.mxu0 %v281
  %396 = vmatprep.subr.bf16.mxu0 %v286
  %397 = vmatpush1.bf16.msra.mxu0 %v285
  %398 = vmatprep.subr.bf16.mxu0 %v290
  %399 = vmatpush1.bf16.msra.mxu0 %v289
  %400 = vmatprep.subr.bf16.mxu0 %v294
  %401 = vmatpush1.bf16.msra.mxu0 %v293
  %402 = vmatprep.subr.bf16.mxu0 %v298
  %403 = vmatpush1.bf16.msra.mxu0 %v297
  %404 = vmatprep.subr.bf16.mxu0 %v302
  %405 = vmatpush1.bf16.msra.mxu0 %v301
  %406 = vmatprep.subr.bf16.mxu0 %v306
  %407 = vmatpush1.bf16.msra.mxu0 %v305
  %408 = vmatprep.subr.bf16.mxu0 %v374
  %409 = vmatpush1.bf16.msra.mxu0 %v371
  %410 = vmatprep.subr.bf16.mxu0 0
  %411 = vmatpush1.bf16.msra.mxu0 0
  %412 = vmatprep.subr.bf16.mxu0 0
  %413 = vmatpush1.bf16.msra.mxu0 0
  %414 = vmatprep.mubr.bf16.mxu0 %v367
  %415 = vmatmul.mubr.bf16.gmra.mrb[0].mxu0 %v92
  %v416 = vpop.f32.mrb[0].mxu0
  %v417 = vadd.f32 %v79, %v416
  %v418 = vpop.f32.mrb[0].mxu0
  %v419 = vadd.f32 %v79, %v418
  %v420 = vpop.f32.mrb[0].mxu0
  %v421 = vadd.f32 %v84, %v420
  %v422 = vpop.f32.mrb[0].mxu0
  %v423 = vadd.f32 %v84, %v422
  %424 = vdwg.mxu0
  %425 = vmatprep.subr.bf16.mxu0 %v260
  %426 = vmatpush1.bf16.msra.mxu0 %v259
  %427 = vmatprep.subr.bf16.mxu0 %v264
  %428 = vmatpush1.bf16.msra.mxu0 %v263
  %429 = vmatprep.subr.bf16.mxu0 %v268
  %430 = vmatpush1.bf16.msra.mxu0 %v267
  %431 = vmatprep.subr.bf16.mxu0 %v272
  %432 = vmatpush1.bf16.msra.mxu0 %v271
  %433 = vmatprep.subr.bf16.mxu0 %v276
  %434 = vmatpush1.bf16.msra.mxu0 %v275
  %435 = vmatprep.subr.bf16.mxu0 %v280
  %436 = vmatpush1.bf16.msra.mxu0 %v279
  %437 = vmatprep.subr.bf16.mxu0 %v284
  %438 = vmatpush1.bf16.msra.mxu0 %v283
  %439 = vmatprep.subr.bf16.mxu0 %v288
  %440 = vmatpush1.bf16.msra.mxu0 %v287
  %441 = vmatprep.subr.bf16.mxu0 %v292
  %442 = vmatpush1.bf16.msra.mxu0 %v291
  %443 = vmatprep.subr.bf16.mxu0 %v296
  %444 = vmatpush1.bf16.msra.mxu0 %v295
  %445 = vmatprep.subr.bf16.mxu0 %v300
  %446 = vmatpush1.bf16.msra.mxu0 %v299
  %447 = vmatprep.subr.bf16.mxu0 %v304
  %448 = vmatpush1.bf16.msra.mxu0 %v303
  %449 = vmatprep.subr.bf16.mxu0 %v308
  %450 = vmatpush1.bf16.msra.mxu0 %v307
  %451 = vmatprep.subr.bf16.mxu0 %v380
  %452 = vmatpush1.bf16.msra.mxu0 %v377
  %453 = vmatprep.subr.bf16.mxu0 0
  %454 = vmatpush1.bf16.msra.mxu0 0
  %455 = vmatprep.subr.bf16.mxu0 0
  %456 = vmatpush1.bf16.msra.mxu0 0
  %457 = vmatprep.mubr.bf16.mxu0 %v367
  %458 = vmatmul.mubr.bf16.gmra.mrb[0].mxu0 %v92
  %v459 = vpop.f32.mrb[0].mxu0
  %v460 = vadd.f32 %v79, %v459
  %v461 = vpop.f32.mrb[0].mxu0
  %v462 = vadd.f32 %v79, %v461
  %v463 = vpop.f32.mrb[0].mxu0
  %v464 = vadd.f32 %v84, %v463
  %v465 = vpop.f32.mrb[0].mxu0
  %v466 = vadd.f32 %v84, %v465
  %467 = vdwg.mxu0
  %s468 = smul.u32 0, 512
  %v469 = vlaneseq
  %v470 = vand.u32 %v469, 127
  %v471 = vadd.s32 %v470, 128
  %v472 = vadd.s32 %v470, 256
  %v473 = vadd.s32 %v470, 384
  %v474 = vstv %s468
  %v475 = vadd.s32 %v470, %v474
  %v476 = vadd.s32 %v471, %v474
  %v477 = vadd.s32 %v472, %v474
  %v478 = vadd.s32 %v473, %v474
  %vm479 = vcmp.lt.s32.totalorder %v475, 512
  %vm480 = vcmp.lt.s32.totalorder %v476, 512
  %vm481 = vcmp.lt.s32.totalorder %v477, 512
  %vm482 = vcmp.lt.s32.totalorder %v478, 512
  %v483 = vsel %vm479, 1, 0
  %v484 = vsel %vm480, 1, 0
  %v485 = vsel %vm481, 1, 0
  %v486 = vsel %vm482, 1, 0
  %vm487 = vcmp.eq.s32.totalorder %v483, 1
  %vm488 = vcmp.eq.s32.totalorder %v484, 1
  %vm489 = vcmp.eq.s32.totalorder %v485, 1
  %vm490 = vcmp.eq.s32.totalorder %v486, 1
  %v491 = vsel %vm487, %v417, 0.0
  %v492 = vsel %vm488, %v419, 0.0
  %v493 = vsel %vm489, %v460, 0.0
  %v494 = vsel %vm490, %v462, 0.0
  %v495 = vsel %vm487, %v421, 0.0
  %v496 = vsel %vm488, %v423, 0.0
  %v497 = vsel %vm489, %v464, 0.0
  %v498 = vsel %vm490, %v466, 0.0
  %v499 = vadd.f32 %v491, %v492
  %v500 = vadd.f32 %v499, %v493
  %v501 = vadd.f32 %v500, %v494
  %502 = vadd.xlane.f32.xlu0 %v501
  %v503 = vpop.xlane.xlu0 %502
  %v504 = vadd.f32 %v495, %v496
  %v505 = vadd.f32 %v504, %v497
  %v506 = vadd.f32 %v505, %v498
  %507 = vadd.xlane.f32.xlu0 %v506
  %v508 = vpop.xlane.xlu0 %507
  %v509 = vmul.f32 %v491, %v491
  %v510 = vmul.f32 %v492, %v492
  %v511 = vmul.f32 %v493, %v493
  %v512 = vmul.f32 %v494, %v494
  %v513 = vmul.f32 %v495, %v495
  %v514 = vmul.f32 %v496, %v496
  %v515 = vmul.f32 %v497, %v497
  %v516 = vmul.f32 %v498, %v498
  %v517 = vadd.f32 %v509, %v510
  %v518 = vadd.f32 %v517, %v511
  %v519 = vadd.f32 %v518, %v512
  %520 = vadd.xlane.f32.xlu0 %v519
  %v521 = vpop.xlane.xlu0 %520
  %v522 = vadd.f32 %v513, %v514
  %v523 = vadd.f32 %v522, %v515
  %v524 = vadd.f32 %v523, %v516
  %525 = vadd.xlane.f32.xlu0 %v524
  %v526 = vpop.xlane.xlu0 %525
  %528 = vset.pattern.permute.xlu0 0
  %529 = vperm.xlu0 %528, %v503
  %v530 = vpop.permute.xlu0 %529
  %533 = vset.pattern.permute.xlu0 0
  %534 = vperm.xlu0 %533, %v508
  %v535 = vpop.permute.xlu0 %534
  %538 = vset.pattern.permute.xlu0 0
  %539 = vperm.xlu0 %538, %v521
  %v540 = vpop.permute.xlu0 %539
  %543 = vset.pattern.permute.xlu0 0
  %544 = vperm.xlu0 %543, %v526
  %v545 = vpop.permute.xlu0 %544
  %547 = vst [vmem:[%s5] sm:$0xff] %v530
  %548 = vst [vmem:[%s5 + $0x8] sm:$0xff] %v535
  %549 = vst [vmem:[%s5 + $0x10] sm:$0xff] %v540
  %550 = vst [vmem:[%s5 + $0x18] sm:$0xff] %v545
  %551 = vst [vmem:[%s3] sm:$0xff] %v417
  %552 = vst [vmem:[%s3 + $0x8] sm:$0xff] %v419
  %553 = vst [vmem:[%s3 + $0x10] sm:$0xff] %v460
  %554 = vst [vmem:[%s3 + $0x18] sm:$0xff] %v462
  %555 = vst [vmem:[%s4] sm:$0xff] %v421
  %556 = vst [vmem:[%s4 + $0x8] sm:$0xff] %v423
  %557 = vst [vmem:[%s4 + $0x10] sm:$0xff] %v464
  %558 = vst [vmem:[%s4 + $0x18] sm:$0xff] %v466
  // Predicated region
  $region14: #{encoder_forward.15} parent=0 // pred_check
    _
  $region15: #{encoder_forward.15} parent=0 // pred_check_branch
    %560 = sbr.rel (0) target = $region17
  $region16: #{encoder_forward.15} parent=0 // pred_region
    _
  $region17: #{encoder_forward.15} parent=0 // pred_fallthru
    _
  // Predicated region
  $region18: #{encoder_forward.15} parent=0 // pred_check
    _
  $region19: #{encoder_forward.15} parent=0 // pred_check_branch
    %562 = sbr.rel (0) target = $region21
  $region20: #{encoder_forward.15} parent=0 // pred_region
    _
  $region21: #{encoder_forward.15} parent=0 // pred_fallthru
    _
  // Predicated region
  $region22: #{encoder_forward.15} parent=0 // pred_check
    _
  $region23: #{encoder_forward.15} parent=0 // pred_check_branch
    %564 = sbr.rel (0) target = $region25
  $region24: #{encoder_forward.15} parent=0 // pred_region
    _
  $region25: #{encoder_forward.15} parent=0 // pred_fallthru
    _
  // Predicated region
  $region26: #{encoder_forward.15} parent=0 // pred_check
    _
  $region27: #{encoder_forward.15} parent=0 // pred_check_branch
    %566 = sbr.rel (0) target = $region29
  $region28: #{encoder_forward.15} parent=0 // pred_region
    _
  $region29: #{encoder_forward.15} parent=0 // pred_fallthru
    _
  // Predicated region
  $region30: #{encoder_forward.15} parent=0 // pred_check
    _
  $region31: #{encoder_forward.15} parent=0 // pred_check_branch
    %568 = sbr.rel (0) target = $region33
  $region32: #{encoder_forward.15} parent=0 // pred_region
    _
  $region33: #{encoder_forward.15} parent=0 // pred_fallthru
    _
  // Predicated region
  $region34: #{encoder_forward.15} parent=0 // pred_check
    _
  $region35: #{encoder_forward.15} parent=0 // pred_check_branch
    %570 = sbr.rel (0) target = $region37
  $region36: #{encoder_forward.15} parent=0 // pred_region
    _
  $region37: #{encoder_forward.15} parent=0 // pred_fallthru
    _

// kernel: encoder_forward.16
$region0: #{encoder_forward.16}
  #allocation0 [shape = 'u32[]', space=smem, size = 0x4, offset = 0x4, fixed_abs, tag = 'smem constant byte address 0x4 - core index']
  #allocation1 [shape = 'u32[144,128]{1,0:T(1,128)}', space=vmem, size = 0x12000, scoped, tag = 'internal scratch']
  %s0 = inlined_call_operand.vmem [shape: f32[8,512], index: 0, kind: input, shape index: {}]
  %s1 = inlined_call_operand.vmem [shape: f32[8,1], index: 1, kind: input, shape index: {}]
  %s2 = inlined_call_operand.vmem [shape: f32[8,1], index: 2, kind: input, shape index: {}]
  %s3 = inlined_call_operand.vmem [shape: f32[8,512], index: 3, kind: output, shape index: {}]
  %s4 = sld [smem:[#allocation0]]
  $region22: #{encoder_forward.16} parent=0
    _
  %s6 = ssub.s32 1, %s4
  %s7 = scalar_select 0, %s6, %s4
  // Predicated region
  $region2: #{encoder_forward.16} parent=0 // pred_check
    _
  $region3: #{encoder_forward.16} parent=0 // pred_check_branch
    %9 = sbr.rel (0) target = $region5
  $region4: #{encoder_forward.16} parent=0 // pred_region
    _
  $region5: #{encoder_forward.16} parent=0 // pred_fallthru
    _
  // Predicated region
  $region6: #{encoder_forward.16} parent=0 // pred_check
    _
  $region7: #{encoder_forward.16} parent=0 // pred_check_branch
    %11 = sbr.rel (0) target = $region9
  $region8: #{encoder_forward.16} parent=0 // pred_region
    _
  $region9: #{encoder_forward.16} parent=0 // pred_fallthru
    _
  // Predicated region
  $region10: #{encoder_forward.16} parent=0 // pred_check
    _
  $region11: #{encoder_forward.16} parent=0 // pred_check_branch
    %13 = sbr.rel (0) target = $region13
  $region12: #{encoder_forward.16} parent=0 // pred_region
    _
  $region13: #{encoder_forward.16} parent=0 // pred_fallthru
    _
  %v14 = vld [vmem:[%s0] sm:$0xff]
  %v15 = vld [vmem:[%s0 + $0x8] sm:$0xff]
  %v16 = vld [vmem:[%s0 + $0x10] sm:$0xff]
  %v17 = vld [vmem:[%s0 + $0x18] sm:$0xff]
  %v18 = vld [vmem:[%s1] sm:$0xff]
  %20 = vset.pattern.permute.xlu0 0
  %21 = vperm.xlu0 %20, %v18
  %v22 = vpop.permute.xlu0 %21
  %v24 = vmul.f32 %v14, %v22
  %v25 = vmul.f32 %v15, %v22
  %v26 = vmul.f32 %v16, %v22
  %v27 = vmul.f32 %v17, %v22
  %v28 = vld [vmem:[%s2] sm:$0xff]
  %30 = vset.pattern.permute.xlu0 0
  %31 = vperm.xlu0 %30, %v28
  %v32 = vpop.permute.xlu0 %31
  %v34 = vadd.f32 %v24, %v32
  %v35 = vadd.f32 %v25, %v32
  %v36 = vadd.f32 %v26, %v32
  %v37 = vadd.f32 %v27, %v32
  %vm38 = vcmp.gt.f32.partialorder %v34, 0.0
  %vm39 = vcmp.gt.f32.partialorder %v35, 0.0
  %vm40 = vcmp.gt.f32.partialorder %v36, 0.0
  %vm41 = vcmp.gt.f32.partialorder %v37, 0.0
  %v42 = vmul.f32 %v34, 0.2
  %v43 = vmul.f32 %v35, 0.2
  %v44 = vmul.f32 %v36, 0.2
  %v45 = vmul.f32 %v37, 0.2
  %v46 = vsel %vm38, %v34, %v42
  %v47 = vsel %vm39, %v35, %v43
  %v48 = vsel %vm40, %v36, %v44
  %v49 = vsel %vm41, %v37, %v45
  %50 = vst [vmem:[%s3] sm:$0xff] %v46
  %51 = vst [vmem:[%s3 + $0x8] sm:$0xff] %v47
  %52 = vst [vmem:[%s3 + $0x10] sm:$0xff] %v48
  %53 = vst [vmem:[%s3 + $0x18] sm:$0xff] %v49
  // Predicated region
  $region14: #{encoder_forward.16} parent=0 // pred_check
    _
  $region15: #{encoder_forward.16} parent=0 // pred_check_branch
    %55 = sbr.rel (0) target = $region17
  $region16: #{encoder_forward.16} parent=0 // pred_region
    _
  $region17: #{encoder_forward.16} parent=0 // pred_fallthru
    _
  // Predicated region
  $region18: #{encoder_forward.16} parent=0 // pred_check
    _
  $region19: #{encoder_forward.16} parent=0 // pred_check_branch
    %57 = sbr.rel (0) target = $region21
  $region20: #{encoder_forward.16} parent=0 // pred_region
    _
  $region21: #{encoder_forward.16} parent=0 // pred_fallthru
    _

// kernel: encoder_forward.18
$region0: #{encoder_forward.18}
  #allocation0 [shape = 'u32[]', space=smem, size = 0x4, offset = 0x4, fixed_abs, tag = 'smem constant byte address 0x4 - core index']
  #allocation1 [shape = 'u32[144,128]{1,0:T(1,128)}', space=vmem, size = 0x12000, scoped, tag = 'internal scratch']
  %s0 = inlined_call_operand.vmem [shape: f32[8,512], index: 0, kind: input, shape index: {}]
  %s1 = inlined_call_operand.vmem [shape: f32[8,512], index: 1, kind: input, shape index: {}]
  %s2 = inlined_call_operand.vmem [shape: f32[8,1], index: 2, kind: input, shape index: {}]
  %s3 = inlined_call_operand.vmem [shape: f32[8,1], index: 3, kind: input, shape index: {}]
  %s4 = inlined_call_operand.vmem [shape: f32[8,1], index: 4, kind: input, shape index: {}]
  %s5 = inlined_call_operand.vmem [shape: f32[8,1], index: 5, kind: input, shape index: {}]
  %s6 = inlined_call_operand.vmem [shape: f32[8,512], index: 6, kind: output, shape index: {}]
  %s7 = sld [smem:[#allocation0]]
  $region34: #{encoder_forward.18} parent=0
    _
  %s9 = ssub.s32 1, %s7
  %s10 = scalar_select 0, %s9, %s7
  // Predicated region
  $region2: #{encoder_forward.18} parent=0 // pred_check
    _
  $region3: #{encoder_forward.18} parent=0 // pred_check_branch
    %12 = sbr.rel (0) target = $region5
  $region4: #{encoder_forward.18} parent=0 // pred_region
    _
  $region5: #{encoder_forward.18} parent=0 // pred_fallthru
    _
  // Predicated region
  $region6: #{encoder_forward.18} parent=0 // pred_check
    _
  $region7: #{encoder_forward.18} parent=0 // pred_check_branch
    %14 = sbr.rel (0) target = $region9
  $region8: #{encoder_forward.18} parent=0 // pred_region
    _
  $region9: #{encoder_forward.18} parent=0 // pred_fallthru
    _
  // Predicated region
  $region10: #{encoder_forward.18} parent=0 // pred_check
    _
  $region11: #{encoder_forward.18} parent=0 // pred_check_branch
    %16 = sbr.rel (0) target = $region13
  $region12: #{encoder_forward.18} parent=0 // pred_region
    _
  $region13: #{encoder_forward.18} parent=0 // pred_fallthru
    _
  // Predicated region
  $region14: #{encoder_forward.18} parent=0 // pred_check
    _
  $region15: #{encoder_forward.18} parent=0 // pred_check_branch
    %18 = sbr.rel (0) target = $region17
  $region16: #{encoder_forward.18} parent=0 // pred_region
    _
  $region17: #{encoder_forward.18} parent=0 // pred_fallthru
    _
  // Predicated region
  $region18: #{encoder_forward.18} parent=0 // pred_check
    _
  $region19: #{encoder_forward.18} parent=0 // pred_check_branch
    %20 = sbr.rel (0) target = $region21
  $region20: #{encoder_forward.18} parent=0 // pred_region
    _
  $region21: #{encoder_forward.18} parent=0 // pred_fallthru
    _
  // Predicated region
  $region22: #{encoder_forward.18} parent=0 // pred_check
    _
  $region23: #{encoder_forward.18} parent=0 // pred_check_branch
    %22 = sbr.rel (0) target = $region25
  $region24: #{encoder_forward.18} parent=0 // pred_region
    _
  $region25: #{encoder_forward.18} parent=0 // pred_fallthru
    _
  %v23 = vld [vmem:[%s0] sm:$0xff]
  %v24 = vld [vmem:[%s0 + $0x8] sm:$0xff]
  %v25 = vld [vmem:[%s0 + $0x10] sm:$0xff]
  %v26 = vld [vmem:[%s0 + $0x18] sm:$0xff]
  %v27 = vld [vmem:[%s2] sm:$0xff]
  %29 = vset.pattern.permute.xlu0 0
  %30 = vperm.xlu0 %29, %v27
  %v31 = vpop.permute.xlu0 %30
  %v33 = vmul.f32 %v23, %v31
  %v34 = vmul.f32 %v24, %v31
  %v35 = vmul.f32 %v25, %v31
  %v36 = vmul.f32 %v26, %v31
  %v37 = vld [vmem:[%s3] sm:$0xff]
  %39 = vset.pattern.permute.xlu0 0
  %40 = vperm.xlu0 %39, %v37
  %v41 = vpop.permute.xlu0 %40
  %v43 = vadd.f32 %v33, %v41
  %v44 = vadd.f32 %v34, %v41
  %v45 = vadd.f32 %v35, %v41
  %v46 = vadd.f32 %v36, %v41
  %v47 = vld [vmem:[%s1] sm:$0xff]
  %v48 = vld [vmem:[%s1 + $0x8] sm:$0xff]
  %v49 = vld [vmem:[%s1 + $0x10] sm:$0xff]
  %v50 = vld [vmem:[%s1 + $0x18] sm:$0xff]
  %v51 = vld [vmem:[%s4] sm:$0xff]
  %53 = vset.pattern.permute.xlu0 0
  %54 = vperm.xlu0 %53, %v51
  %v55 = vpop.permute.xlu0 %54
  %v57 = vmul.f32 %v47, %v55
  %v58 = vmul.f32 %v48, %v55
  %v59 = vmul.f32 %v49, %v55
  %v60 = vmul.f32 %v50, %v55
  %v61 = vld [vmem:[%s5] sm:$0xff]
  %63 = vset.pattern.permute.xlu0 0
  %64 = vperm.xlu0 %63, %v61
  %v65 = vpop.permute.xlu0 %64
  %v67 = vadd.f32 %v57, %v65
  %v68 = vadd.f32 %v58, %v65
  %v69 = vadd.f32 %v59, %v65
  %v70 = vadd.f32 %v60, %v65
  %vm71 = vcmp.gt.f32.partialorder %v43, 0.0
  %vm72 = vcmp.gt.f32.partialorder %v44, 0.0
  %vm73 = vcmp.gt.f32.partialorder %v45, 0.0
  %vm74 = vcmp.gt.f32.partialorder %v46, 0.0
  %v75 = vmul.f32 %v43, 0.2
  %v76 = vmul.f32 %v44, 0.2
  %v77 = vmul.f32 %v45, 0.2
  %v78 = vmul.f32 %v46, 0.2
  %v79 = vsel %vm71, %v43, %v75
  %v80 = vsel %vm72, %v44, %v76
  %v81 = vsel %vm73, %v45, %v77
  %v82 = vsel %vm74, %v46, %v78
  %vm83 = vcmp.gt.f32.partialorder %v67, 0.0
  %vm84 = vcmp.gt.f32.partialorder %v68, 0.0
  %vm85 = vcmp.gt.f32.partialorder %v69, 0.0
  %vm86 = vcmp.gt.f32.partialorder %v70, 0.0
  %v87 = vmul.f32 %v67, 0.2
  %v88 = vmul.f32 %v68, 0.2
  %v89 = vmul.f32 %v69, 0.2
  %v90 = vmul.f32 %v70, 0.2
  %v91 = vsel %vm83, %v67, %v87
  %v92 = vsel %vm84, %v68, %v88
  %v93 = vsel %vm85, %v69, %v89
  %v94 = vsel %vm86, %v70, %v90
  %v95 = vadd.f32 %v79, %v91
  %v96 = vadd.f32 %v80, %v92
  %v97 = vadd.f32 %v81, %v93
  %v98 = vadd.f32 %v82, %v94
  %99 = vst [vmem:[%s6] sm:$0xff] %v95
  %100 = vst [vmem:[%s6 + $0x8] sm:$0xff] %v96
  %101 = vst [vmem:[%s6 + $0x10] sm:$0xff] %v97
  %102 = vst [vmem:[%s6 + $0x18] sm:$0xff] %v98
  // Predicated region
  $region26: #{encoder_forward.18} parent=0 // pred_check
    _
  $region27: #{encoder_forward.18} parent=0 // pred_check_branch
    %104 = sbr.rel (0) target = $region29
  $region28: #{encoder_forward.18} parent=0 // pred_region
    _
  $region29: #{encoder_forward.18} parent=0 // pred_fallthru
    _
  // Predicated region
  $region30: #{encoder_forward.18} parent=0 // pred_check
    _
  $region31: #{encoder_forward.18} parent=0 // pred_check_branch
    %106 = sbr.rel (0) target = $region33
  $region32: #{encoder_forward.18} parent=0 // pred_region
    _
  $region33: #{encoder_forward.18} parent=0 // pred_fallthru
    _

// kernel: encoder_forward.17
$region0: #{encoder_forward.17}
  #allocation0 [shape = 'u32[]', space=smem, size = 0x4, offset = 0x4, fixed_abs, tag = 'smem constant byte address 0x4 - core index']
  #allocation1 [shape = 'u32[144,128]{1,0:T(1,128)}', space=vmem, size = 0x12000, scoped, tag = 'internal scratch']
  %s0 = inlined_call_operand.vmem [shape: bf16[216,512], index: 0, kind: input, shape index: {}]
  %s1 = inlined_call_operand.vmem [shape: bf16[8,216], index: 1, kind: input, shape index: {}]
  %s2 = inlined_call_operand.vmem [shape: f32[8,1], index: 2, kind: input, shape index: {}]
  %s3 = inlined_call_operand.vmem [shape: f32[8,512], index: 3, kind: output, shape index: {0}]
  %s4 = inlined_call_operand.vmem [shape: f32[1,16,128], index: 4, kind: output, shape index: {1}]
  %5 = xla_tuple %s3, %s4
  %s6 = sld [smem:[#allocation0]]
  $region30: #{encoder_forward.17} parent=0
    _
  %s8 = ssub.s32 1, %s6
  %s9 = scalar_select 0, %s8, %s6
  // Predicated region
  $region2: #{encoder_forward.17} parent=0 // pred_check
    _
  $region3: #{encoder_forward.17} parent=0 // pred_check_branch
    %11 = sbr.rel (0) target = $region5
  $region4: #{encoder_forward.17} parent=0 // pred_region
    _
  $region5: #{encoder_forward.17} parent=0 // pred_fallthru
    _
  // Predicated region
  $region6: #{encoder_forward.17} parent=0 // pred_check
    _
  $region7: #{encoder_forward.17} parent=0 // pred_check_branch
    %13 = sbr.rel (0) target = $region9
  $region8: #{encoder_forward.17} parent=0 // pred_region
    _
  $region9: #{encoder_forward.17} parent=0 // pred_fallthru
    _
  // Predicated region
  $region10: #{encoder_forward.17} parent=0 // pred_check
    _
  $region11: #{encoder_forward.17} parent=0 // pred_check_branch
    %15 = sbr.rel (0) target = $region13
  $region12: #{encoder_forward.17} parent=0 // pred_region
    _
  $region13: #{encoder_forward.17} parent=0 // pred_fallthru
    _
  %v17 = vld [vmem:[%s1] sm:$0xff]
  %v18 = vld [vmem:[%s0] sm:$0xff]
  %v19 = vld [vmem:[%s0 + $0x8] sm:$0xff]
  %v20 = vld [vmem:[%s0 + $0x10] sm:$0xff]
  %v21 = vld [vmem:[%s0 + $0x18] sm:$0xff]
  %v22 = vld [vmem:[%s0 + $0x20] sm:$0xff]
  %v23 = vld [vmem:[%s0 + $0x28] sm:$0xff]
  %v24 = vld [vmem:[%s0 + $0x30] sm:$0xff]
  %v25 = vld [vmem:[%s0 + $0x38] sm:$0xff]
  %v26 = vld [vmem:[%s0 + $0x40] sm:$0xff]
  %v27 = vld [vmem:[%s0 + $0x48] sm:$0xff]
  %v28 = vld [vmem:[%s0 + $0x50] sm:$0xff]
  %v29 = vld [vmem:[%s0 + $0x58] sm:$0xff]
  %v30 = vld [vmem:[%s0 + $0x60] sm:$0xff]
  %v31 = vld [vmem:[%s0 + $0x68] sm:$0xff]
  %v32 = vld [vmem:[%s0 + $0x70] sm:$0xff]
  %v33 = vld [vmem:[%s0 + $0x78] sm:$0xff]
  %v34 = vld [vmem:[%s0 + $0x80] sm:$0xff]
  %v35 = vld [vmem:[%s0 + $0x88] sm:$0xff]
  %v36 = vld [vmem:[%s0 + $0x90] sm:$0xff]
  %v37 = vld [vmem:[%s0 + $0x98] sm:$0xff]
  %v38 = vld [vmem:[%s0 + $0xa0] sm:$0xff]
  %v39 = vld [vmem:[%s0 + $0xa8] sm:$0xff]
  %v40 = vld [vmem:[%s0 + $0xb0] sm:$0xff]
  %v41 = vld [vmem:[%s0 + $0xb8] sm:$0xff]
  %v42 = vld [vmem:[%s0 + $0xc0] sm:$0xff]
  %v43 = vld [vmem:[%s0 + $0xc8] sm:$0xff]
  %v44 = vld [vmem:[%s0 + $0xd0] sm:$0xff]
  %v45 = vld [vmem:[%s0 + $0xd8] sm:$0xff]
  %v46 = vld [vmem:[%s0 + $0xe0] sm:$0xff]
  %v47 = vld [vmem:[%s0 + $0xe8] sm:$0xff]
  %v48 = vld [vmem:[%s0 + $0xf0] sm:$0xff]
  %v49 = vld [vmem:[%s0 + $0xf8] sm:$0xff]
  %v50 = vld [vmem:[%s0 + $0x100] sm:$0xff]
  %v51 = vld [vmem:[%s0 + $0x108] sm:$0xff]
  %v52 = vld [vmem:[%s0 + $0x110] sm:$0xff]
  %v53 = vld [vmem:[%s0 + $0x118] sm:$0xff]
  %v54 = vld [vmem:[%s0 + $0x120] sm:$0xff]
  %v55 = vld [vmem:[%s0 + $0x128] sm:$0xff]
  %v56 = vld [vmem:[%s0 + $0x130] sm:$0xff]
  %v57 = vld [vmem:[%s0 + $0x138] sm:$0xff]
  %v58 = vld [vmem:[%s0 + $0x140] sm:$0xff]
  %v59 = vld [vmem:[%s0 + $0x148] sm:$0xff]
  %v60 = vld [vmem:[%s0 + $0x150] sm:$0xff]
  %v61 = vld [vmem:[%s0 + $0x158] sm:$0xff]
  %v62 = vld [vmem:[%s0 + $0x160] sm:$0xff]
  %v63 = vld [vmem:[%s0 + $0x168] sm:$0xff]
  %v64 = vld [vmem:[%s0 + $0x170] sm:$0xff]
  %v65 = vld [vmem:[%s0 + $0x178] sm:$0xff]
  %v66 = vld [vmem:[%s0 + $0x180] sm:$0xff]
  %v67 = vld [vmem:[%s0 + $0x188] sm:$0xff]
  %v68 = vld [vmem:[%s0 + $0x190] sm:$0xff]
  %v69 = vld [vmem:[%s0 + $0x198] sm:$0xff]
  %v70 = vld [vmem:[%s0 + $0x1a0] sm:$0xff]
  %v71 = vld [vmem:[%s0 + $0x1a8] sm:$0xff]
  %v72 = vld [vmem:[%s2] sm:$0xff]
  %74 = vset.pattern.permute.xlu0 0
  %75 = vperm.xlu0 %74, %v72
  %v76 = vpop.permute.xlu0 %75
  %v79 = vunpack.c.l.b16 %v17
  %v80 = vunpack.c.h.b16 %v17
  %v81 = vpack.c.b16 %v79, %v79
  %v82 = vpack.c.b16 %v80, %v80
  %v138 = vunpack.c.l.b16 %v18
  %v139 = vunpack.c.h.b16 %v18
  %v140 = vunpack.c.l.b16 %v19
  %v141 = vunpack.c.h.b16 %v19
  %v142 = vunpack.c.l.b16 %v20
  %v143 = vunpack.c.h.b16 %v20
  %v144 = vunpack.c.l.b16 %v21
  %v145 = vunpack.c.h.b16 %v21
  %v146 = vunpack.c.l.b16 %v22
  %v147 = vunpack.c.h.b16 %v22
  %v148 = vunpack.c.l.b16 %v23
  %v149 = vunpack.c.h.b16 %v23
  %v150 = vunpack.c.l.b16 %v24
  %v151 = vunpack.c.h.b16 %v24
  %v152 = vunpack.c.l.b16 %v25
  %v153 = vunpack.c.h.b16 %v25
  %v154 = vunpack.c.l.b16 %v26
  %v155 = vunpack.c.h.b16 %v26
  %v156 = vunpack.c.l.b16 %v27
  %v157 = vunpack.c.h.b16 %v27
  %v158 = vunpack.c.l.b16 %v28
  %v159 = vunpack.c.h.b16 %v28
  %v160 = vunpack.c.l.b16 %v29
  %v161 = vunpack.c.h.b16 %v29
  %v162 = vunpack.c.l.b16 %v30
  %v163 = vunpack.c.h.b16 %v30
  %v164 = vunpack.c.l.b16 %v31
  %v165 = vunpack.c.h.b16 %v31
  %v166 = vunpack.c.l.b16 %v32
  %v167 = vunpack.c.h.b16 %v32
  %v168 = vunpack.c.l.b16 %v33
  %v169 = vunpack.c.h.b16 %v33
  %v170 = vunpack.c.l.b16 %v34
  %v171 = vunpack.c.h.b16 %v34
  %v172 = vunpack.c.l.b16 %v35
  %v173 = vunpack.c.h.b16 %v35
  %v174 = vunpack.c.l.b16 %v36
  %v175 = vunpack.c.h.b16 %v36
  %v176 = vunpack.c.l.b16 %v37
  %v177 = vunpack.c.h.b16 %v37
  %v178 = vunpack.c.l.b16 %v38
  %v179 = vunpack.c.h.b16 %v38
  %v180 = vunpack.c.l.b16 %v39
  %v181 = vunpack.c.h.b16 %v39
  %v182 = vunpack.c.l.b16 %v40
  %v183 = vunpack.c.h.b16 %v40
  %v184 = vunpack.c.l.b16 %v41
  %v185 = vunpack.c.h.b16 %v41
  %v186 = vunpack.c.l.b16 %v42
  %v187 = vunpack.c.h.b16 %v42
  %v188 = vunpack.c.l.b16 %v43
  %v189 = vunpack.c.h.b16 %v43
  %v190 = vunpack.c.l.b16 %v44
  %v191 = vunpack.c.h.b16 %v44
  %v192 = vunpack.c.l.b16 %v45
  %v193 = vunpack.c.h.b16 %v45
  %v194 = vunpack.c.l.b16 %v46
  %v195 = vunpack.c.h.b16 %v46
  %v196 = vunpack.c.l.b16 %v47
  %v197 = vunpack.c.h.b16 %v47
  %v198 = vunpack.c.l.b16 %v48
  %v199 = vunpack.c.h.b16 %v48
  %v200 = vunpack.c.l.b16 %v49
  %v201 = vunpack.c.h.b16 %v49
  %v202 = vunpack.c.l.b16 %v50
  %v203 = vunpack.c.h.b16 %v50
  %v204 = vunpack.c.l.b16 %v51
  %v205 = vunpack.c.h.b16 %v51
  %v206 = vunpack.c.l.b16 %v52
  %v207 = vunpack.c.h.b16 %v52
  %v208 = vunpack.c.l.b16 %v53
  %v209 = vunpack.c.h.b16 %v53
  %v210 = vunpack.c.l.b16 %v54
  %v211 = vunpack.c.h.b16 %v54
  %v212 = vunpack.c.l.b16 %v55
  %v213 = vunpack.c.h.b16 %v55
  %v214 = vunpack.c.l.b16 %v56
  %v215 = vunpack.c.h.b16 %v56
  %v216 = vunpack.c.l.b16 %v57
  %v217 = vunpack.c.h.b16 %v57
  %v218 = vunpack.c.l.b16 %v58
  %v219 = vunpack.c.h.b16 %v58
  %v220 = vunpack.c.l.b16 %v59
  %v221 = vunpack.c.h.b16 %v59
  %v222 = vunpack.c.l.b16 %v60
  %v223 = vunpack.c.h.b16 %v60
  %v224 = vunpack.c.l.b16 %v61
  %v225 = vunpack.c.h.b16 %v61
  %v226 = vunpack.c.l.b16 %v62
  %v227 = vunpack.c.h.b16 %v62
  %v228 = vunpack.c.l.b16 %v63
  %v229 = vunpack.c.h.b16 %v63
  %v230 = vunpack.c.l.b16 %v64
  %v231 = vunpack.c.h.b16 %v64
  %v232 = vunpack.c.l.b16 %v65
  %v233 = vunpack.c.h.b16 %v65
  %v234 = vunpack.c.l.b16 %v66
  %v235 = vunpack.c.h.b16 %v66
  %v236 = vunpack.c.l.b16 %v67
  %v237 = vunpack.c.h.b16 %v67
  %v238 = vunpack.c.l.b16 %v68
  %v239 = vunpack.c.h.b16 %v68
  %v240 = vunpack.c.l.b16 %v69
  %v241 = vunpack.c.h.b16 %v69
  %v242 = vunpack.c.l.b16 %v70
  %v243 = vunpack.c.h.b16 %v70
  %v244 = vunpack.c.l.b16 %v71
  %v245 = vunpack.c.h.b16 %v71
  %v246 = vpack.c.b16 %v142, %v138
  %v247 = vpack.c.b16 %v143, %v139
  %v248 = vpack.c.b16 %v144, %v140
  %v249 = vpack.c.b16 %v145, %v141
  %v250 = vpack.c.b16 %v150, %v146
  %v251 = vpack.c.b16 %v151, %v147
  %v252 = vpack.c.b16 %v152, %v148
  %v253 = vpack.c.b16 %v153, %v149
  %v254 = vpack.c.b16 %v158, %v154
  %v255 = vpack.c.b16 %v159, %v155
  %v256 = vpack.c.b16 %v160, %v156
  %v257 = vpack.c.b16 %v161, %v157
  %v258 = vpack.c.b16 %v166, %v162
  %v259 = vpack.c.b16 %v167, %v163
  %v260 = vpack.c.b16 %v168, %v164
  %v261 = vpack.c.b16 %v169, %v165
  %v262 = vpack.c.b16 %v174, %v170
  %v263 = vpack.c.b16 %v175, %v171
  %v264 = vpack.c.b16 %v176, %v172
  %v265 = vpack.c.b16 %v177, %v173
  %v266 = vpack.c.b16 %v182, %v178
  %v267 = vpack.c.b16 %v183, %v179
  %v268 = vpack.c.b16 %v184, %v180
  %v269 = vpack.c.b16 %v185, %v181
  %v270 = vpack.c.b16 %v190, %v186
  %v271 = vpack.c.b16 %v191, %v187
  %v272 = vpack.c.b16 %v192, %v188
  %v273 = vpack.c.b16 %v193, %v189
  %v274 = vpack.c.b16 %v198, %v194
  %v275 = vpack.c.b16 %v199, %v195
  %v276 = vpack.c.b16 %v200, %v196
  %v277 = vpack.c.b16 %v201, %v197
  %v278 = vpack.c.b16 %v206, %v202
  %v279 = vpack.c.b16 %v207, %v203
  %v280 = vpack.c.b16 %v208, %v204
  %v281 = vpack.c.b16 %v209, %v205
  %v282 = vpack.c.b16 %v214, %v210
  %v283 = vpack.c.b16 %v215, %v211
  %v284 = vpack.c.b16 %v216, %v212
  %v285 = vpack.c.b16 %v217, %v213
  %v286 = vpack.c.b16 %v222, %v218
  %v287 = vpack.c.b16 %v223, %v219
  %v288 = vpack.c.b16 %v224, %v220
  %v289 = vpack.c.b16 %v225, %v221
  %v290 = vpack.c.b16 %v230, %v226
  %v291 = vpack.c.b16 %v231, %v227
  %v292 = vpack.c.b16 %v232, %v228
  %v293 = vpack.c.b16 %v233, %v229
  %v294 = vpack.c.b16 %v238, %v234
  %v295 = vpack.c.b16 %v239, %v235
  %v296 = vpack.c.b16 %v240, %v236
  %v297 = vpack.c.b16 %v241, %v237
  %v298 = vpack.c.b16 %v242, %v242
  %v299 = vpack.c.b16 %v243, %v243
  %v300 = vpack.c.b16 %v244, %v244
  %v301 = vpack.c.b16 %v245, %v245
  %vm354 = vcmask 719872
  %v356 = vsel %vm354, %v82, 0
  %vm358 = vcmask 1043456
  %v360 = vsel %vm358, %v298, 0
  %v363 = vsel %vm358, %v299, 0
  %v366 = vsel %vm358, %v300, 0
  %v369 = vsel %vm358, %v301, 0
  %371 = vmatprep.subr.bf16.mxu0 %v247
  %372 = vmatpush1.bf16.msra.mxu0 %v246
  %373 = vmatprep.subr.bf16.mxu0 %v251
  %374 = vmatpush1.bf16.msra.mxu0 %v250
  %375 = vmatprep.subr.bf16.mxu0 %v255
  %376 = vmatpush1.bf16.msra.mxu0 %v254
  %377 = vmatprep.subr.bf16.mxu0 %v259
  %378 = vmatpush1.bf16.msra.mxu0 %v258
  %379 = vmatprep.subr.bf16.mxu0 %v263
  %380 = vmatpush1.bf16.msra.mxu0 %v262
  %381 = vmatprep.subr.bf16.mxu0 %v267
  %382 = vmatpush1.bf16.msra.mxu0 %v266
  %383 = vmatprep.subr.bf16.mxu0 %v271
  %384 = vmatpush1.bf16.msra.mxu0 %v270
  %385 = vmatprep.subr.bf16.mxu0 %v275
  %386 = vmatpush1.bf16.msra.mxu0 %v274
  %387 = vmatprep.subr.bf16.mxu0 %v279
  %388 = vmatpush1.bf16.msra.mxu0 %v278
  %389 = vmatprep.subr.bf16.mxu0 %v283
  %390 = vmatpush1.bf16.msra.mxu0 %v282
  %391 = vmatprep.subr.bf16.mxu0 %v287
  %392 = vmatpush1.bf16.msra.mxu0 %v286
  %393 = vmatprep.subr.bf16.mxu0 %v291
  %394 = vmatpush1.bf16.msra.mxu0 %v290
  %395 = vmatprep.subr.bf16.mxu0 %v295
  %396 = vmatpush1.bf16.msra.mxu0 %v294
  %397 = vmatprep.subr.bf16.mxu0 %v363
  %398 = vmatpush1.bf16.msra.mxu0 %v360
  %399 = vmatprep.subr.bf16.mxu0 0
  %400 = vmatpush1.bf16.msra.mxu0 0
  %401 = vmatprep.subr.bf16.mxu0 0
  %402 = vmatpush1.bf16.msra.mxu0 0
  %403 = vmatprep.mubr.bf16.mxu0 %v356
  %404 = vmatmul.mubr.bf16.gmra.mrb[0].mxu0 %v81
  %v405 = vpop.f32.mrb[0].mxu0
  %v406 = vadd.f32 %v76, %v405
  %v407 = vpop.f32.mrb[0].mxu0
  %v408 = vadd.f32 %v76, %v407
  %v409 = vpop.f32.mrb[0].mxu0
  %v410 = vpop.f32.mrb[0].mxu0
  %411 = vdwg.mxu0
  %412 = vmatprep.subr.bf16.mxu0 %v249
  %413 = vmatpush1.bf16.msra.mxu0 %v248
  %414 = vmatprep.subr.bf16.mxu0 %v253
  %415 = vmatpush1.bf16.msra.mxu0 %v252
  %416 = vmatprep.subr.bf16.mxu0 %v257
  %417 = vmatpush1.bf16.msra.mxu0 %v256
  %418 = vmatprep.subr.bf16.mxu0 %v261
  %419 = vmatpush1.bf16.msra.mxu0 %v260
  %420 = vmatprep.subr.bf16.mxu0 %v265
  %421 = vmatpush1.bf16.msra.mxu0 %v264
  %422 = vmatprep.subr.bf16.mxu0 %v269
  %423 = vmatpush1.bf16.msra.mxu0 %v268
  %424 = vmatprep.subr.bf16.mxu0 %v273
  %425 = vmatpush1.bf16.msra.mxu0 %v272
  %426 = vmatprep.subr.bf16.mxu0 %v277
  %427 = vmatpush1.bf16.msra.mxu0 %v276
  %428 = vmatprep.subr.bf16.mxu0 %v281
  %429 = vmatpush1.bf16.msra.mxu0 %v280
  %430 = vmatprep.subr.bf16.mxu0 %v285
  %431 = vmatpush1.bf16.msra.mxu0 %v284
  %432 = vmatprep.subr.bf16.mxu0 %v289
  %433 = vmatpush1.bf16.msra.mxu0 %v288
  %434 = vmatprep.subr.bf16.mxu0 %v293
  %435 = vmatpush1.bf16.msra.mxu0 %v292
  %436 = vmatprep.subr.bf16.mxu0 %v297
  %437 = vmatpush1.bf16.msra.mxu0 %v296
  %438 = vmatprep.subr.bf16.mxu0 %v369
  %439 = vmatpush1.bf16.msra.mxu0 %v366
  %440 = vmatprep.subr.bf16.mxu0 0
  %441 = vmatpush1.bf16.msra.mxu0 0
  %442 = vmatprep.subr.bf16.mxu0 0
  %443 = vmatpush1.bf16.msra.mxu0 0
  %444 = vmatprep.mubr.bf16.mxu0 %v356
  %445 = vmatmul.mubr.bf16.gmra.mrb[0].mxu0 %v81
  %v446 = vpop.f32.mrb[0].mxu0
  %v447 = vadd.f32 %v76, %v446
  %v448 = vpop.f32.mrb[0].mxu0
  %v449 = vadd.f32 %v76, %v448
  %v450 = vpop.f32.mrb[0].mxu0
  %v451 = vpop.f32.mrb[0].mxu0
  %452 = vdwg.mxu0
  %s453 = smul.u32 0, 512
  %v454 = vlaneseq
  %v455 = vand.u32 %v454, 127
  %v456 = vadd.s32 %v455, 128
  %v457 = vadd.s32 %v455, 256
  %v458 = vadd.s32 %v455, 384
  %v459 = vstv %s453
  %v460 = vadd.s32 %v455, %v459
  %v461 = vadd.s32 %v456, %v459
  %v462 = vadd.s32 %v457, %v459
  %v463 = vadd.s32 %v458, %v459
  %vm464 = vcmp.lt.s32.totalorder %v460, 512
  %vm465 = vcmp.lt.s32.totalorder %v461, 512
  %vm466 = vcmp.lt.s32.totalorder %v462, 512
  %vm467 = vcmp.lt.s32.totalorder %v463, 512
  %v468 = vsel %vm464, 1, 0
  %v469 = vsel %vm465, 1, 0
  %v470 = vsel %vm466, 1, 0
  %v471 = vsel %vm467, 1, 0
  %vm472 = vcmp.eq.s32.totalorder %v468, 1
  %vm473 = vcmp.eq.s32.totalorder %v469, 1
  %vm474 = vcmp.eq.s32.totalorder %v470, 1
  %vm475 = vcmp.eq.s32.totalorder %v471, 1
  %v476 = vsel %vm472, %v406, 0.0
  %v477 = vsel %vm473, %v408, 0.0
  %v478 = vsel %vm474, %v447, 0.0
  %v479 = vsel %vm475, %v449, 0.0
  %v480 = vadd.f32 %v476, %v477
  %v481 = vadd.f32 %v480, %v478
  %v482 = vadd.f32 %v481, %v479
  %483 = vadd.xlane.f32.xlu0 %v482
  %v484 = vpop.xlane.xlu0 %483
  %v485 = vmul.f32 %v476, %v476
  %v486 = vmul.f32 %v477, %v477
  %v487 = vmul.f32 %v478, %v478
  %v488 = vmul.f32 %v479, %v479
  %v489 = vadd.f32 %v485, %v486
  %v490 = vadd.f32 %v489, %v487
  %v491 = vadd.f32 %v490, %v488
  %492 = vadd.xlane.f32.xlu0 %v491
  %v493 = vpop.xlane.xlu0 %492
  %495 = vset.pattern.permute.xlu0 0
  %496 = vperm.xlu0 %495, %v484
  %v497 = vpop.permute.xlu0 %496
  %500 = vset.pattern.permute.xlu0 0
  %501 = vperm.xlu0 %500, %v493
  %v502 = vpop.permute.xlu0 %501
  %504 = vst [vmem:[%s4] sm:$0xff] %v497
  %505 = vst [vmem:[%s4 + $0x8] sm:$0xff] %v502
  %506 = vst [vmem:[%s3] sm:$0xff] %v406
  %507 = vst [vmem:[%s3 + $0x8] sm:$0xff] %v408
  %508 = vst [vmem:[%s3 + $0x10] sm:$0xff] %v447
  %509 = vst [vmem:[%s3 + $0x18] sm:$0xff] %v449
  // Predicated region
  $region14: #{encoder_forward.17} parent=0 // pred_check
    _
  $region15: #{encoder_forward.17} parent=0 // pred_check_branch
    %511 = sbr.rel (0) target = $region17
  $region16: #{encoder_forward.17} parent=0 // pred_region
    _
  $region17: #{encoder_forward.17} parent=0 // pred_fallthru
    _
  // Predicated region
  $region18: #{encoder_forward.17} parent=0 // pred_check
    _
  $region19: #{encoder_forward.17} parent=0 // pred_check_branch
    %513 = sbr.rel (0) target = $region21
  $region20: #{encoder_forward.17} parent=0 // pred_region
    _
  $region21: #{encoder_forward.17} parent=0 // pred_fallthru
    _
  // Predicated region
  $region22: #{encoder_forward.17} parent=0 // pred_check
    _
  $region23: #{encoder_forward.17} parent=0 // pred_check_branch
    %515 = sbr.rel (0) target = $region25
  $region24: #{encoder_forward.17} parent=0 // pred_region
    _
  $region25: #{encoder_forward.17} parent=0 // pred_fallthru
    _
  // Predicated region
  $region26: #{encoder_forward.17} parent=0 // pred_check
    _
  $region27: #{encoder_forward.17} parent=0 // pred_check_branch
    %517 = sbr.rel (0) target = $region29
  $region28: #{encoder_forward.17} parent=0 // pred_region
    _
  $region29: #{encoder_forward.17} parent=0 // pred_fallthru
    _

// kernel: encoder_forward.19
$region0: #{encoder_forward.19}
  #allocation0 [shape = 'u32[]', space=smem, size = 0x4, offset = 0x4, fixed_abs, tag = 'smem constant byte address 0x4 - core index']
  #allocation1 [shape = 'u32[144,128]{1,0:T(1,128)}', space=vmem, size = 0x12000, scoped, tag = 'internal scratch']
  %s0 = inlined_call_operand.vmem [shape: bf16[216,128], index: 0, kind: input, shape index: {}]
  %s1 = inlined_call_operand.vmem [shape: bf16[48,216], index: 1, kind: input, shape index: {}]
  %s2 = inlined_call_operand.vmem [shape: f32[48,1], index: 2, kind: input, shape index: {}]
  %s3 = inlined_call_operand.vmem [shape: f32[8,128], index: 3, kind: output, shape index: {0}]
  %s4 = inlined_call_operand.vmem [shape: f32[16,128], index: 4, kind: output, shape index: {1}]
  %s5 = inlined_call_operand.vmem [shape: f32[8,128], index: 5, kind: output, shape index: {2}]
  %s6 = inlined_call_operand.vmem [shape: f32[16,128], index: 6, kind: output, shape index: {3}]
  %s7 = inlined_call_operand.vmem [shape: f32[1,96,128], index: 7, kind: output, shape index: {4}]
  %8 = xla_tuple %s3, %s4, %s5, %s6, %s7
  %s9 = sld [smem:[#allocation0]]
  $region54: #{encoder_forward.19} parent=0
    _
  %s11 = ssub.s32 1, %s9
  %s12 = scalar_select 0, %s11, %s9
  // Predicated region
  $region2: #{encoder_forward.19} parent=0 // pred_check
    _
  $region3: #{encoder_forward.19} parent=0 // pred_check_branch
    %14 = sbr.rel (0) target = $region5
  $region4: #{encoder_forward.19} parent=0 // pred_region
    _
  $region5: #{encoder_forward.19} parent=0 // pred_fallthru
    _
  // Predicated region
  $region6: #{encoder_forward.19} parent=0 // pred_check
    _
  $region7: #{encoder_forward.19} parent=0 // pred_check_branch
    %16 = sbr.rel (0) target = $region9
  $region8: #{encoder_forward.19} parent=0 // pred_region
    _
  $region9: #{encoder_forward.19} parent=0 // pred_fallthru
    _
  // Predicated region
  $region10: #{encoder_forward.19} parent=0 // pred_check
    _
  $region11: #{encoder_forward.19} parent=0 // pred_check_branch
    %18 = sbr.rel (0) target = $region13
  $region12: #{encoder_forward.19} parent=0 // pred_region
    _
  $region13: #{encoder_forward.19} parent=0 // pred_fallthru
    _
  %v20 = vld [vmem:[%s1] sm:$0xff]
  %v21 = vld [vmem:[%s1 + $0x8] sm:$0xff]
  %v22 = vld [vmem:[%s1 + $0x10] sm:$0xff]
  %v23 = vld [vmem:[%s1 + $0x18] sm:$0xff]
  %v24 = vld [vmem:[%s1 + $0x20] sm:$0xff]
  %v25 = vld [vmem:[%s1 + $0x28] sm:$0xff]
  %v26 = vld [vmem:[%s0] sm:$0xf]
  %v27 = vld [vmem:[%s0 + $0x4] sm:$0xf]
  %v28 = vld [vmem:[%s0 + $0x8] sm:$0xf]
  %v29 = vld [vmem:[%s0 + $0xc] sm:$0xf]
  %v30 = vld [vmem:[%s0 + $0x10] sm:$0xf]
  %v31 = vld [vmem:[%s0 + $0x14] sm:$0xf]
  %v32 = vld [vmem:[%s0 + $0x18] sm:$0xf]
  %v33 = vld [vmem:[%s0 + $0x1c] sm:$0xf]
  %v34 = vld [vmem:[%s0 + $0x20] sm:$0xf]
  %v35 = vld [vmem:[%s0 + $0x24] sm:$0xf]
  %v36 = vld [vmem:[%s0 + $0x28] sm:$0xf]
  %v37 = vld [vmem:[%s0 + $0x2c] sm:$0xf]
  %v38 = vld [vmem:[%s0 + $0x30] sm:$0xf]
  %v39 = vld [vmem:[%s0 + $0x34] sm:$0xf]
  %v40 = vld [vmem:[%s0 + $0x38] sm:$0xf]
  %v41 = vld [vmem:[%s0 + $0x3c] sm:$0xf]
  %v42 = vld [vmem:[%s0 + $0x40] sm:$0xf]
  %v43 = vld [vmem:[%s0 + $0x44] sm:$0xf]
  %v44 = vld [vmem:[%s0 + $0x48] sm:$0xf]
  %v45 = vld [vmem:[%s0 + $0x4c] sm:$0xf]
  %v46 = vld [vmem:[%s0 + $0x50] sm:$0xf]
  %v47 = vld [vmem:[%s0 + $0x54] sm:$0xf]
  %v48 = vld [vmem:[%s0 + $0x58] sm:$0xf]
  %v49 = vld [vmem:[%s0 + $0x5c] sm:$0xf]
  %v50 = vld [vmem:[%s0 + $0x60] sm:$0xf]
  %v51 = vld [vmem:[%s0 + $0x64] sm:$0xf]
  %v52 = vld [vmem:[%s0 + $0x68] sm:$0xf]
  %v53 = vld [vmem:[%s2] sm:$0xff]
  %v54 = vld [vmem:[%s2 + $0x8] sm:$0xff]
  %v55 = vld [vmem:[%s2 + $0x10] sm:$0xff]
  %v56 = vld [vmem:[%s2 + $0x18] sm:$0xff]
  %v57 = vld [vmem:[%s2 + $0x20] sm:$0xff]
  %v58 = vld [vmem:[%s2 + $0x28] sm:$0xff]
  %60 = vset.pattern.permute.xlu0 0
  %61 = vperm.xlu0 %60, %v53
  %v62 = vpop.permute.xlu0 %61
  %65 = vset.pattern.permute.xlu0 0
  %66 = vperm.xlu0 %65, %v54
  %v67 = vpop.permute.xlu0 %66
  %70 = vset.pattern.permute.xlu0 0
  %71 = vperm.xlu0 %70, %v55
  %v72 = vpop.permute.xlu0 %71
  %75 = vset.pattern.permute.xlu0 0
  %76 = vperm.xlu0 %75, %v56
  %v77 = vpop.permute.xlu0 %76
  %80 = vset.pattern.permute.xlu0 0
  %81 = vperm.xlu0 %80, %v57
  %v82 = vpop.permute.xlu0 %81
  %85 = vset.pattern.permute.xlu0 0
  %86 = vperm.xlu0 %85, %v58
  %v87 = vpop.permute.xlu0 %86
  %v95 = vunpack.c.l.b16 %v20
  %v96 = vunpack.c.h.b16 %v20
  %v97 = vunpack.c.l.b16 %v21
  %v98 = vunpack.c.h.b16 %v21
  %v99 = vunpack.c.l.b16 %v22
  %v100 = vunpack.c.h.b16 %v22
  %v101 = vunpack.c.l.b16 %v23
  %v102 = vunpack.c.h.b16 %v23
  %v103 = vunpack.c.l.b16 %v24
  %v104 = vunpack.c.h.b16 %v24
  %v105 = vunpack.c.l.b16 %v25
  %v106 = vunpack.c.h.b16 %v25
  %v107 = vpack.c.b16 %v97, %v95
  %v108 = vpack.c.b16 %v98, %v96
  %v109 = vpack.c.b16 %v101, %v99
  %v110 = vpack.c.b16 %v102, %v100
  %v111 = vpack.c.b16 %v105, %v103
  %v112 = vpack.c.b16 %v106, %v104
  %v143 = vunpack.c.l.b16 %v26
  %v144 = vunpack.c.l.b16 %v27
  %v145 = vunpack.c.l.b16 %v28
  %v146 = vunpack.c.l.b16 %v29
  %v147 = vunpack.c.l.b16 %v30
  %v148 = vunpack.c.l.b16 %v31
  %v149 = vunpack.c.l.b16 %v32
  %v150 = vunpack.c.l.b16 %v33
  %v151 = vunpack.c.l.b16 %v34
  %v152 = vunpack.c.l.b16 %v35
  %v153 = vunpack.c.l.b16 %v36
  %v154 = vunpack.c.l.b16 %v37
  %v155 = vunpack.c.l.b16 %v38
  %v156 = vunpack.c.l.b16 %v39
  %v157 = vunpack.c.l.b16 %v40
  %v158 = vunpack.c.l.b16 %v41
  %v159 = vunpack.c.l.b16 %v42
  %v160 = vunpack.c.l.b16 %v43
  %v161 = vunpack.c.l.b16 %v44
  %v162 = vunpack.c.l.b16 %v45
  %v163 = vunpack.c.l.b16 %v46
  %v164 = vunpack.c.l.b16 %v47
  %v165 = vunpack.c.l.b16 %v48
  %v166 = vunpack.c.l.b16 %v49
  %v167 = vunpack.c.l.b16 %v50
  %v168 = vunpack.c.l.b16 %v51
  %v169 = vunpack.c.l.b16 %v52
  %v170 = vpack.c.b16 %v144, %v143
  %v171 = vpack.c.b16 %v146, %v145
  %v172 = vpack.c.b16 %v148, %v147
  %v173 = vpack.c.b16 %v150, %v149
  %v174 = vpack.c.b16 %v152, %v151
  %v175 = vpack.c.b16 %v154, %v153
  %v176 = vpack.c.b16 %v156, %v155
  %v177 = vpack.c.b16 %v158, %v157
  %v178 = vpack.c.b16 %v160, %v159
  %v179 = vpack.c.b16 %v162, %v161
  %v180 = vpack.c.b16 %v164, %v163
  %v181 = vpack.c.b16 %v166, %v165
  %v182 = vpack.c.b16 %v168, %v167
  %v183 = vpack.c.b16 %v169, %v169
  %vm197 = vcmask 719872
  %v199 = vsel %vm197, %v108, 0
  %v202 = vsel %vm197, %v110, 0
  %v205 = vsel %vm197, %v112, 0
  %vm207 = vcmask 1043456
  %v209 = vsel %vm207, %v183, 0
  %211 = vmatprep.subr.bf16.mxu0 0
  %212 = vmatpush1.bf16.msra.mxu0 %v170
  %213 = vmatprep.subr.bf16.mxu0 0
  %214 = vmatpush1.bf16.msra.mxu0 %v171
  %215 = vmatprep.subr.bf16.mxu0 0
  %216 = vmatpush1.bf16.msra.mxu0 %v172
  %217 = vmatprep.subr.bf16.mxu0 0
  %218 = vmatpush1.bf16.msra.mxu0 %v173
  %219 = vmatprep.subr.bf16.mxu0 0
  %220 = vmatpush1.bf16.msra.mxu0 %v174
  %221 = vmatprep.subr.bf16.mxu0 0
  %222 = vmatpush1.bf16.msra.mxu0 %v175
  %223 = vmatprep.subr.bf16.mxu0 0
  %224 = vmatpush1.bf16.msra.mxu0 %v176
  %225 = vmatprep.subr.bf16.mxu0 0
  %226 = vmatpush1.bf16.msra.mxu0 %v177
  %227 = vmatprep.subr.bf16.mxu0 0
  %228 = vmatpush1.bf16.msra.mxu0 %v178
  %229 = vmatprep.subr.bf16.mxu0 0
  %230 = vmatpush1.bf16.msra.mxu0 %v179
  %231 = vmatprep.subr.bf16.mxu0 0
  %232 = vmatpush1.bf16.msra.mxu0 %v180
  %233 = vmatprep.subr.bf16.mxu0 0
  %234 = vmatpush1.bf16.msra.mxu0 %v181
  %235 = vmatprep.subr.bf16.mxu0 0
  %236 = vmatpush1.bf16.msra.mxu0 %v182
  %237 = vmatprep.subr.bf16.mxu0 0
  %238 = vmatpush1.bf16.msra.mxu0 %v209
  %239 = vmatprep.subr.bf16.mxu0 0
  %240 = vmatpush1.bf16.msra.mxu0 0
  %241 = vmatprep.subr.bf16.mxu0 0
  %242 = vmatpush1.bf16.msra.mxu0 0
  %243 = vmatprep.mubr.bf16.mxu0 %v199
  %244 = vmatmul.mubr.bf16.gmra.mrb[0].mxu0 %v107
  %v245 = vpop.f32.mrb[0].mxu0
  %v246 = vadd.f32 %v62, %v245
  %v247 = vpop.f32.mrb[0].mxu0
  %v248 = vpop.f32.mrb[0].mxu0
  %v249 = vadd.f32 %v67, %v248
  %v250 = vpop.f32.mrb[0].mxu0
  %251 = vmatprep.mubr.bf16.mxu0 %v202
  %252 = vmatmul.mubr.bf16.gmra.mrb[0].mxu0 %v109
  %v253 = vpop.f32.mrb[0].mxu0
  %v254 = vadd.f32 %v72, %v253
  %v255 = vpop.f32.mrb[0].mxu0
  %v256 = vpop.f32.mrb[0].mxu0
  %v257 = vadd.f32 %v77, %v256
  %v258 = vpop.f32.mrb[0].mxu0
  %259 = vmatprep.mubr.bf16.mxu0 %v205
  %260 = vmatmul.mubr.bf16.gmra.mrb[0].mxu0 %v111
  %v261 = vpop.f32.mrb[0].mxu0
  %v262 = vadd.f32 %v82, %v261
  %v263 = vpop.f32.mrb[0].mxu0
  %v264 = vpop.f32.mrb[0].mxu0
  %v265 = vadd.f32 %v87, %v264
  %v266 = vpop.f32.mrb[0].mxu0
  %267 = vdwg.mxu0
  %s268 = smul.u32 0, 128
  %v269 = vlaneseq
  %v270 = vand.u32 %v269, 127
  %v271 = vstv %s268
  %v272 = vadd.s32 %v270, %v271
  %vm273 = vcmp.lt.s32.totalorder %v272, 128
  %v274 = vsel %vm273, 1, 0
  %vm275 = vcmp.eq.s32.totalorder %v274, 1
  %v276 = vsel %vm275, %v246, 0.0
  %v277 = vsel %vm275, %v249, 0.0
  %v278 = vsel %vm275, %v254, 0.0
  %v279 = vsel %vm275, %v257, 0.0
  %v280 = vsel %vm275, %v262, 0.0
  %v281 = vsel %vm275, %v265, 0.0
  %282 = vadd.xlane.f32.xlu0 %v276
  %v283 = vpop.xlane.xlu0 %282
  %284 = vadd.xlane.f32.xlu0 %v277
  %v285 = vpop.xlane.xlu0 %284
  %286 = vadd.xlane.f32.xlu0 %v278
  %v287 = vpop.xlane.xlu0 %286
  %288 = vadd.xlane.f32.xlu0 %v279
  %v289 = vpop.xlane.xlu0 %288
  %290 = vadd.xlane.f32.xlu0 %v280
  %v291 = vpop.xlane.xlu0 %290
  %292 = vadd.xlane.f32.xlu0 %v281
  %v293 = vpop.xlane.xlu0 %292
  %v294 = vmul.f32 %v276, %v276
  %v295 = vmul.f32 %v277, %v277
  %v296 = vmul.f32 %v278, %v278
  %v297 = vmul.f32 %v279, %v279
  %v298 = vmul.f32 %v280, %v280
  %v299 = vmul.f32 %v281, %v281
  %300 = vadd.xlane.f32.xlu0 %v294
  %v301 = vpop.xlane.xlu0 %300
  %302 = vadd.xlane.f32.xlu0 %v295
  %v303 = vpop.xlane.xlu0 %302
  %304 = vadd.xlane.f32.xlu0 %v296
  %v305 = vpop.xlane.xlu0 %304
  %306 = vadd.xlane.f32.xlu0 %v297
  %v307 = vpop.xlane.xlu0 %306
  %308 = vadd.xlane.f32.xlu0 %v298
  %v309 = vpop.xlane.xlu0 %308
  %310 = vadd.xlane.f32.xlu0 %v299
  %v311 = vpop.xlane.xlu0 %310
  %313 = vset.pattern.permute.xlu0 0
  %314 = vperm.xlu0 %313, %v283
  %v315 = vpop.permute.xlu0 %314
  %318 = vset.pattern.permute.xlu0 0
  %319 = vperm.xlu0 %318, %v285
  %v320 = vpop.permute.xlu0 %319
  %323 = vset.pattern.permute.xlu0 0
  %324 = vperm.xlu0 %323, %v287
  %v325 = vpop.permute.xlu0 %324
  %328 = vset.pattern.permute.xlu0 0
  %329 = vperm.xlu0 %328, %v289
  %v330 = vpop.permute.xlu0 %329
  %333 = vset.pattern.permute.xlu0 0
  %334 = vperm.xlu0 %333, %v291
  %v335 = vpop.permute.xlu0 %334
  %338 = vset.pattern.permute.xlu0 0
  %339 = vperm.xlu0 %338, %v293
  %v340 = vpop.permute.xlu0 %339
  %343 = vset.pattern.permute.xlu0 0
  %344 = vperm.xlu0 %343, %v301
  %v345 = vpop.permute.xlu0 %344
  %348 = vset.pattern.permute.xlu0 0
  %349 = vperm.xlu0 %348, %v303
  %v350 = vpop.permute.xlu0 %349
  %353 = vset.pattern.permute.xlu0 0
  %354 = vperm.xlu0 %353, %v305
  %v355 = vpop.permute.xlu0 %354
  %358 = vset.pattern.permute.xlu0 0
  %359 = vperm.xlu0 %358, %v307
  %v360 = vpop.permute.xlu0 %359
  %363 = vset.pattern.permute.xlu0 0
  %364 = vperm.xlu0 %363, %v309
  %v365 = vpop.permute.xlu0 %364
  %368 = vset.pattern.permute.xlu0 0
  %369 = vperm.xlu0 %368, %v311
  %v370 = vpop.permute.xlu0 %369
  %372 = vst [vmem:[%s7] sm:$0xff] %v315
  %373 = vst [vmem:[%s7 + $0x8] sm:$0xff] %v320
  %374 = vst [vmem:[%s7 + $0x10] sm:$0xff] %v325
  %375 = vst [vmem:[%s7 + $0x18] sm:$0xff] %v330
  %376 = vst [vmem:[%s7 + $0x20] sm:$0xff] %v335
  %377 = vst [vmem:[%s7 + $0x28] sm:$0xff] %v340
  %378 = vst [vmem:[%s7 + $0x30] sm:$0xff] %v345
  %379 = vst [vmem:[%s7 + $0x38] sm:$0xff] %v350
  %380 = vst [vmem:[%s7 + $0x40] sm:$0xff] %v355
  %381 = vst [vmem:[%s7 + $0x48] sm:$0xff] %v360
  %382 = vst [vmem:[%s7 + $0x50] sm:$0xff] %v365
  %383 = vst [vmem:[%s7 + $0x58] sm:$0xff] %v370
  %384 = vst [vmem:[%s3] sm:$0xff] %v246
  %385 = vst [vmem:[%s4] sm:$0xff] %v249
  %386 = vst [vmem:[%s4 + $0x8] sm:$0xff] %v254
  %387 = vst [vmem:[%s5] sm:$0xff] %v257
  %388 = vst [vmem:[%s6] sm:$0xff] %v262
  %389 = vst [vmem:[%s6 + $0x8] sm:$0xff] %v265
  // Predicated region
  $region14: #{encoder_forward.19} parent=0 // pred_check
    _
  $region15: #{encoder_forward.19} parent=0 // pred_check_branch
    %391 = sbr.rel (0) target = $region17
  $region16: #{encoder_forward.19} parent=0 // pred_region
    _
  $region17: #{encoder_forward.19} parent=0 // pred_fallthru
    _
  // Predicated region
  $region18: #{encoder_forward.19} parent=0 // pred_check
    _
  $region19: #{encoder_forward.19} parent=0 // pred_check_branch
    %393 = sbr.rel (0) target = $region21
  $region20: #{encoder_forward.19} parent=0 // pred_region
    _
  $region21: #{encoder_forward.19} parent=0 // pred_fallthru
    _
  // Predicated region
  $region22: #{encoder_forward.19} parent=0 // pred_check
    _
  $region23: #{encoder_forward.19} parent=0 // pred_check_branch
    %395 = sbr.rel (0) target = $region25
  $region24: #{encoder_forward.19} parent=0 // pred_region
    _
  $region25: #{encoder_forward.19} parent=0 // pred_fallthru
    _
  // Predicated region
  $region26: #{encoder_forward.19} parent=0 // pred_check
    _
  $region27: #{encoder_forward.19} parent=0 // pred_check_branch
    %397 = sbr.rel (0) target = $region29
  $region28: #{encoder_forward.19} parent=0 // pred_region
    _
  $region29: #{encoder_forward.19} parent=0 // pred_fallthru
    _
  // Predicated region
  $region30: #{encoder_forward.19} parent=0 // pred_check
    _
  $region31: #{encoder_forward.19} parent=0 // pred_check_branch
    %399 = sbr.rel (0) target = $region33
  $region32: #{encoder_forward.19} parent=0 // pred_region
    _
  $region33: #{encoder_forward.19} parent=0 // pred_fallthru
    _
  // Predicated region
  $region34: #{encoder_forward.19} parent=0 // pred_check
    _
  $region35: #{encoder_forward.19} parent=0 // pred_check_branch
    %401 = sbr.rel (0) target = $region37
  $region36: #{encoder_forward.19} parent=0 // pred_region
    _
  $region37: #{encoder_forward.19} parent=0 // pred_fallthru
    _
  // Predicated region
  $region38: #{encoder_forward.19} parent=0 // pred_check
    _
  $region39: #{encoder_forward.19} parent=0 // pred_check_branch
    %403 = sbr.rel (0) target = $region41
  $region40: #{encoder_forward.19} parent=0 // pred_region
    _
  $region41: #{encoder_forward.19} parent=0 // pred_fallthru
    _
  // Predicated region
  $region42: #{encoder_forward.19} parent=0 // pred_check
    _
  $region43: #{encoder_forward.19} parent=0 // pred_check_branch
    %405 = sbr.rel (0) target = $region45
  $region44: #{encoder_forward.19} parent=0 // pred_region
    _
  $region45: #{encoder_forward.19} parent=0 // pred_fallthru
    _
  // Predicated region
  $region46: #{encoder_forward.19} parent=0 // pred_check
    _
  $region47: #{encoder_forward.19} parent=0 // pred_check_branch
    %407 = sbr.rel (0) target = $region49
  $region48: #{encoder_forward.19} parent=0 // pred_region
    _
  $region49: #{encoder_forward.19} parent=0 // pred_fallthru
    _
  // Predicated region
  $region50: #{encoder_forward.19} parent=0 // pred_check
    _
  $region51: #{encoder_forward.19} parent=0 // pred_check_branch
    %409 = sbr.rel (0) target = $region53
  $region52: #{encoder_forward.19} parent=0 // pred_region
    _
  $region53: #{encoder_forward.19} parent=0 // pred_fallthru
    _

// kernel: encoder_forward.23
$region0: #{encoder_forward.23}
  #allocation0 [shape = 'u32[]', space=smem, size = 0x4, offset = 0x4, fixed_abs, tag = 'smem constant byte address 0x4 - core index']
  #allocation1 [shape = 'u32[144,128]{1,0:T(1,128)}', space=vmem, size = 0x12000, scoped, tag = 'internal scratch']
  %s0 = inlined_call_operand.vmem [shape: f32[8,128], index: 0, kind: input, shape index: {}]
  %s1 = inlined_call_operand.vmem [shape: f32[8,1], index: 1, kind: input, shape index: {}]
  %s2 = inlined_call_operand.vmem [shape: f32[8,1], index: 2, kind: input, shape index: {}]
  %s3 = inlined_call_operand.vmem [shape: f32[8,128], index: 3, kind: output, shape index: {}]
  %s4 = sld [smem:[#allocation0]]
  $region22: #{encoder_forward.23} parent=0
    _
  %s6 = ssub.s32 1, %s4
  %s7 = scalar_select 0, %s6, %s4
  // Predicated region
  $region2: #{encoder_forward.23} parent=0 // pred_check
    _
  $region3: #{encoder_forward.23} parent=0 // pred_check_branch
    %9 = sbr.rel (0) target = $region5
  $region4: #{encoder_forward.23} parent=0 // pred_region
    _
  $region5: #{encoder_forward.23} parent=0 // pred_fallthru
    _
  // Predicated region
  $region6: #{encoder_forward.23} parent=0 // pred_check
    _
  $region7: #{encoder_forward.23} parent=0 // pred_check_branch
    %11 = sbr.rel (0) target = $region9
  $region8: #{encoder_forward.23} parent=0 // pred_region
    _
  $region9: #{encoder_forward.23} parent=0 // pred_fallthru
    _
  // Predicated region
  $region10: #{encoder_forward.23} parent=0 // pred_check
    _
  $region11: #{encoder_forward.23} parent=0 // pred_check_branch
    %13 = sbr.rel (0) target = $region13
  $region12: #{encoder_forward.23} parent=0 // pred_region
    _
  $region13: #{encoder_forward.23} parent=0 // pred_fallthru
    _
  %v14 = vld [vmem:[%s0] sm:$0xff]
  %v15 = vld [vmem:[%s1] sm:$0xff]
  %17 = vset.pattern.permute.xlu0 0
  %18 = vperm.xlu0 %17, %v15
  %v19 = vpop.permute.xlu0 %18
  %v21 = vmul.f32 %v14, %v19
  %v22 = vld [vmem:[%s2] sm:$0xff]
  %24 = vset.pattern.permute.xlu0 0
  %25 = vperm.xlu0 %24, %v22
  %v26 = vpop.permute.xlu0 %25
  %v28 = vadd.f32 %v21, %v26
  %vm29 = vcmp.gt.f32.partialorder %v28, 0.0
  %v30 = vmul.f32 %v28, 0.2
  %v31 = vsel %vm29, %v28, %v30
  %32 = vst [vmem:[%s3] sm:$0xff] %v31
  // Predicated region
  $region14: #{encoder_forward.23} parent=0 // pred_check
    _
  $region15: #{encoder_forward.23} parent=0 // pred_check_branch
    %34 = sbr.rel (0) target = $region17
  $region16: #{encoder_forward.23} parent=0 // pred_region
    _
  $region17: #{encoder_forward.23} parent=0 // pred_fallthru
    _
  // Predicated region
  $region18: #{encoder_forward.23} parent=0 // pred_check
    _
  $region19: #{encoder_forward.23} parent=0 // pred_check_branch
    %36 = sbr.rel (0) target = $region21
  $region20: #{encoder_forward.23} parent=0 // pred_region
    _
  $region21: #{encoder_forward.23} parent=0 // pred_fallthru
    _

// kernel: encoder_forward.24
$region0: #{encoder_forward.24}
  #allocation0 [shape = 'u32[]', space=smem, size = 0x4, offset = 0x4, fixed_abs, tag = 'smem constant byte address 0x4 - core index']
  #allocation1 [shape = 'u32[144,128]{1,0:T(1,128)}', space=vmem, size = 0x12000, scoped, tag = 'internal scratch']
  %s0 = inlined_call_operand.vmem [shape: bf16[216,128], index: 0, kind: input, shape index: {}]
  %s1 = inlined_call_operand.vmem [shape: bf16[16,216], index: 1, kind: input, shape index: {}]
  %s2 = inlined_call_operand.vmem [shape: f32[16,1], index: 2, kind: input, shape index: {}]
  %s3 = inlined_call_operand.vmem [shape: f32[16,128], index: 3, kind: output, shape index: {0}]
  %s4 = inlined_call_operand.vmem [shape: f32[1,32,128], index: 4, kind: output, shape index: {1}]
  %5 = xla_tuple %s3, %s4
  %s6 = sld [smem:[#allocation0]]
  $region30: #{encoder_forward.24} parent=0
    _
  %s8 = ssub.s32 1, %s6
  %s9 = scalar_select 0, %s8, %s6
  // Predicated region
  $region2: #{encoder_forward.24} parent=0 // pred_check
    _
  $region3: #{encoder_forward.24} parent=0 // pred_check_branch
    %11 = sbr.rel (0) target = $region5
  $region4: #{encoder_forward.24} parent=0 // pred_region
    _
  $region5: #{encoder_forward.24} parent=0 // pred_fallthru
    _
  // Predicated region
  $region6: #{encoder_forward.24} parent=0 // pred_check
    _
  $region7: #{encoder_forward.24} parent=0 // pred_check_branch
    %13 = sbr.rel (0) target = $region9
  $region8: #{encoder_forward.24} parent=0 // pred_region
    _
  $region9: #{encoder_forward.24} parent=0 // pred_fallthru
    _
  // Predicated region
  $region10: #{encoder_forward.24} parent=0 // pred_check
    _
  $region11: #{encoder_forward.24} parent=0 // pred_check_branch
    %15 = sbr.rel (0) target = $region13
  $region12: #{encoder_forward.24} parent=0 // pred_region
    _
  $region13: #{encoder_forward.24} parent=0 // pred_fallthru
    _
  %v17 = vld [vmem:[%s1] sm:$0xff]
  %v18 = vld [vmem:[%s1 + $0x8] sm:$0xff]
  %v19 = vld [vmem:[%s0] sm:$0xf]
  %v20 = vld [vmem:[%s0 + $0x4] sm:$0xf]
  %v21 = vld [vmem:[%s0 + $0x8] sm:$0xf]
  %v22 = vld [vmem:[%s0 + $0xc] sm:$0xf]
  %v23 = vld [vmem:[%s0 + $0x10] sm:$0xf]
  %v24 = vld [vmem:[%s0 + $0x14] sm:$0xf]
  %v25 = vld [vmem:[%s0 + $0x18] sm:$0xf]
  %v26 = vld [vmem:[%s0 + $0x1c] sm:$0xf]
  %v27 = vld [vmem:[%s0 + $0x20] sm:$0xf]
  %v28 = vld [vmem:[%s0 + $0x24] sm:$0xf]
  %v29 = vld [vmem:[%s0 + $0x28] sm:$0xf]
  %v30 = vld [vmem:[%s0 + $0x2c] sm:$0xf]
  %v31 = vld [vmem:[%s0 + $0x30] sm:$0xf]
  %v32 = vld [vmem:[%s0 + $0x34] sm:$0xf]
  %v33 = vld [vmem:[%s0 + $0x38] sm:$0xf]
  %v34 = vld [vmem:[%s0 + $0x3c] sm:$0xf]
  %v35 = vld [vmem:[%s0 + $0x40] sm:$0xf]
  %v36 = vld [vmem:[%s0 + $0x44] sm:$0xf]
  %v37 = vld [vmem:[%s0 + $0x48] sm:$0xf]
  %v38 = vld [vmem:[%s0 + $0x4c] sm:$0xf]
  %v39 = vld [vmem:[%s0 + $0x50] sm:$0xf]
  %v40 = vld [vmem:[%s0 + $0x54] sm:$0xf]
  %v41 = vld [vmem:[%s0 + $0x58] sm:$0xf]
  %v42 = vld [vmem:[%s0 + $0x5c] sm:$0xf]
  %v43 = vld [vmem:[%s0 + $0x60] sm:$0xf]
  %v44 = vld [vmem:[%s0 + $0x64] sm:$0xf]
  %v45 = vld [vmem:[%s0 + $0x68] sm:$0xf]
  %v46 = vld [vmem:[%s2] sm:$0xff]
  %v47 = vld [vmem:[%s2 + $0x8] sm:$0xff]
  %49 = vset.pattern.permute.xlu0 0
  %50 = vperm.xlu0 %49, %v46
  %v51 = vpop.permute.xlu0 %50
  %54 = vset.pattern.permute.xlu0 0
  %55 = vperm.xlu0 %54, %v47
  %v56 = vpop.permute.xlu0 %55
  %v60 = vunpack.c.l.b16 %v17
  %v61 = vunpack.c.h.b16 %v17
  %v62 = vunpack.c.l.b16 %v18
  %v63 = vunpack.c.h.b16 %v18
  %v64 = vpack.c.b16 %v62, %v60
  %v65 = vpack.c.b16 %v63, %v61
  %v94 = vunpack.c.l.b16 %v19
  %v95 = vunpack.c.l.b16 %v20
  %v96 = vunpack.c.l.b16 %v21
  %v97 = vunpack.c.l.b16 %v22
  %v98 = vunpack.c.l.b16 %v23
  %v99 = vunpack.c.l.b16 %v24
  %v100 = vunpack.c.l.b16 %v25
  %v101 = vunpack.c.l.b16 %v26
  %v102 = vunpack.c.l.b16 %v27
  %v103 = vunpack.c.l.b16 %v28
  %v104 = vunpack.c.l.b16 %v29
  %v105 = vunpack.c.l.b16 %v30
  %v106 = vunpack.c.l.b16 %v31
  %v107 = vunpack.c.l.b16 %v32
  %v108 = vunpack.c.l.b16 %v33
  %v109 = vunpack.c.l.b16 %v34
  %v110 = vunpack.c.l.b16 %v35
  %v111 = vunpack.c.l.b16 %v36
  %v112 = vunpack.c.l.b16 %v37
  %v113 = vunpack.c.l.b16 %v38
  %v114 = vunpack.c.l.b16 %v39
  %v115 = vunpack.c.l.b16 %v40
  %v116 = vunpack.c.l.b16 %v41
  %v117 = vunpack.c.l.b16 %v42
  %v118 = vunpack.c.l.b16 %v43
  %v119 = vunpack.c.l.b16 %v44
  %v120 = vunpack.c.l.b16 %v45
  %v121 = vpack.c.b16 %v95, %v94
  %v122 = vpack.c.b16 %v97, %v96
  %v123 = vpack.c.b16 %v99, %v98
  %v124 = vpack.c.b16 %v101, %v100
  %v125 = vpack.c.b16 %v103, %v102
  %v126 = vpack.c.b16 %v105, %v104
  %v127 = vpack.c.b16 %v107, %v106
  %v128 = vpack.c.b16 %v109, %v108
  %v129 = vpack.c.b16 %v111, %v110
  %v130 = vpack.c.b16 %v113, %v112
  %v131 = vpack.c.b16 %v115, %v114
  %v132 = vpack.c.b16 %v117, %v116
  %v133 = vpack.c.b16 %v119, %v118
  %v134 = vpack.c.b16 %v120, %v120
  %vm148 = vcmask 719872
  %v150 = vsel %vm148, %v65, 0
  %vm152 = vcmask 1043456
  %v154 = vsel %vm152, %v134, 0
  %156 = vmatprep.subr.bf16.mxu0 0
  %157 = vmatpush1.bf16.msra.mxu0 %v121
  %158 = vmatprep.subr.bf16.mxu0 0
  %159 = vmatpush1.bf16.msra.mxu0 %v122
  %160 = vmatprep.subr.bf16.mxu0 0
  %161 = vmatpush1.bf16.msra.mxu0 %v123
  %162 = vmatprep.subr.bf16.mxu0 0
  %163 = vmatpush1.bf16.msra.mxu0 %v124
  %164 = vmatprep.subr.bf16.mxu0 0
  %165 = vmatpush1.bf16.msra.mxu0 %v125
  %166 = vmatprep.subr.bf16.mxu0 0
  %167 = vmatpush1.bf16.msra.mxu0 %v126
  %168 = vmatprep.subr.bf16.mxu0 0
  %169 = vmatpush1.bf16.msra.mxu0 %v127
  %170 = vmatprep.subr.bf16.mxu0 0
  %171 = vmatpush1.bf16.msra.mxu0 %v128
  %172 = vmatprep.subr.bf16.mxu0 0
  %173 = vmatpush1.bf16.msra.mxu0 %v129
  %174 = vmatprep.subr.bf16.mxu0 0
  %175 = vmatpush1.bf16.msra.mxu0 %v130
  %176 = vmatprep.subr.bf16.mxu0 0
  %177 = vmatpush1.bf16.msra.mxu0 %v131
  %178 = vmatprep.subr.bf16.mxu0 0
  %179 = vmatpush1.bf16.msra.mxu0 %v132
  %180 = vmatprep.subr.bf16.mxu0 0
  %181 = vmatpush1.bf16.msra.mxu0 %v133
  %182 = vmatprep.subr.bf16.mxu0 0
  %183 = vmatpush1.bf16.msra.mxu0 %v154
  %184 = vmatprep.subr.bf16.mxu0 0
  %185 = vmatpush1.bf16.msra.mxu0 0
  %186 = vmatprep.subr.bf16.mxu0 0
  %187 = vmatpush1.bf16.msra.mxu0 0
  %188 = vmatprep.mubr.bf16.mxu0 %v150
  %189 = vmatmul.mubr.bf16.gmra.mrb[0].mxu0 %v64
  %v190 = vpop.f32.mrb[0].mxu0
  %v191 = vadd.f32 %v51, %v190
  %v192 = vpop.f32.mrb[0].mxu0
  %v193 = vpop.f32.mrb[0].mxu0
  %v194 = vadd.f32 %v56, %v193
  %v195 = vpop.f32.mrb[0].mxu0
  %196 = vdwg.mxu0
  %s197 = smul.u32 0, 128
  %v198 = vlaneseq
  %v199 = vand.u32 %v198, 127
  %v200 = vstv %s197
  %v201 = vadd.s32 %v199, %v200
  %vm202 = vcmp.lt.s32.totalorder %v201, 128
  %v203 = vsel %vm202, 1, 0
  %vm204 = vcmp.eq.s32.totalorder %v203, 1
  %v205 = vsel %vm204, %v191, 0.0
  %v206 = vsel %vm204, %v194, 0.0
  %207 = vadd.xlane.f32.xlu0 %v205
  %v208 = vpop.xlane.xlu0 %207
  %209 = vadd.xlane.f32.xlu0 %v206
  %v210 = vpop.xlane.xlu0 %209
  %v211 = vmul.f32 %v205, %v205
  %v212 = vmul.f32 %v206, %v206
  %213 = vadd.xlane.f32.xlu0 %v211
  %v214 = vpop.xlane.xlu0 %213
  %215 = vadd.xlane.f32.xlu0 %v212
  %v216 = vpop.xlane.xlu0 %215
  %218 = vset.pattern.permute.xlu0 0
  %219 = vperm.xlu0 %218, %v208
  %v220 = vpop.permute.xlu0 %219
  %223 = vset.pattern.permute.xlu0 0
  %224 = vperm.xlu0 %223, %v210
  %v225 = vpop.permute.xlu0 %224
  %228 = vset.pattern.permute.xlu0 0
  %229 = vperm.xlu0 %228, %v214
  %v230 = vpop.permute.xlu0 %229
  %233 = vset.pattern.permute.xlu0 0
  %234 = vperm.xlu0 %233, %v216
  %v235 = vpop.permute.xlu0 %234
  %237 = vst [vmem:[%s4] sm:$0xff] %v220
  %238 = vst [vmem:[%s4 + $0x8] sm:$0xff] %v225
  %239 = vst [vmem:[%s4 + $0x10] sm:$0xff] %v230
  %240 = vst [vmem:[%s4 + $0x18] sm:$0xff] %v235
  %241 = vst [vmem:[%s3] sm:$0xff] %v191
  %242 = vst [vmem:[%s3 + $0x8] sm:$0xff] %v194
  // Predicated region
  $region14: #{encoder_forward.24} parent=0 // pred_check
    _
  $region15: #{encoder_forward.24} parent=0 // pred_check_branch
    %244 = sbr.rel (0) target = $region17
  $region16: #{encoder_forward.24} parent=0 // pred_region
    _
  $region17: #{encoder_forward.24} parent=0 // pred_fallthru
    _
  // Predicated region
  $region18: #{encoder_forward.24} parent=0 // pred_check
    _
  $region19: #{encoder_forward.24} parent=0 // pred_check_branch
    %246 = sbr.rel (0) target = $region21
  $region20: #{encoder_forward.24} parent=0 // pred_region
    _
  $region21: #{encoder_forward.24} parent=0 // pred_fallthru
    _
  // Predicated region
  $region22: #{encoder_forward.24} parent=0 // pred_check
    _
  $region23: #{encoder_forward.24} parent=0 // pred_check_branch
    %248 = sbr.rel (0) target = $region25
  $region24: #{encoder_forward.24} parent=0 // pred_region
    _
  $region25: #{encoder_forward.24} parent=0 // pred_fallthru
    _
  // Predicated region
  $region26: #{encoder_forward.24} parent=0 // pred_check
    _
  $region27: #{encoder_forward.24} parent=0 // pred_check_branch
    %250 = sbr.rel (0) target = $region29
  $region28: #{encoder_forward.24} parent=0 // pred_region
    _
  $region29: #{encoder_forward.24} parent=0 // pred_fallthru
    _

// kernel: encoder_forward.22
$region0: #{encoder_forward.22}
  #allocation0 [shape = 'u32[]', space=smem, size = 0x4, offset = 0x4, fixed_abs, tag = 'smem constant byte address 0x4 - core index']
  #allocation1 [shape = 'u32[144,128]{1,0:T(1,128)}', space=vmem, size = 0x12000, scoped, tag = 'internal scratch']
  %s0 = inlined_call_operand.vmem [shape: f32[16,128], index: 0, kind: input, shape index: {}]
  %s1 = inlined_call_operand.vmem [shape: f32[16,128], index: 1, kind: input, shape index: {}]
  %s2 = inlined_call_operand.vmem [shape: f32[16,1], index: 2, kind: input, shape index: {}]
  %s3 = inlined_call_operand.vmem [shape: f32[16,1], index: 3, kind: input, shape index: {}]
  %s4 = inlined_call_operand.vmem [shape: f32[16,1], index: 4, kind: input, shape index: {}]
  %s5 = inlined_call_operand.vmem [shape: f32[16,1], index: 5, kind: input, shape index: {}]
  %s6 = inlined_call_operand.vmem [shape: f32[16,128], index: 6, kind: output, shape index: {}]
  %s7 = sld [smem:[#allocation0]]
  $region34: #{encoder_forward.22} parent=0
    _
  %s9 = ssub.s32 1, %s7
  %s10 = scalar_select 0, %s9, %s7
  // Predicated region
  $region2: #{encoder_forward.22} parent=0 // pred_check
    _
  $region3: #{encoder_forward.22} parent=0 // pred_check_branch
    %12 = sbr.rel (0) target = $region5
  $region4: #{encoder_forward.22} parent=0 // pred_region
    _
  $region5: #{encoder_forward.22} parent=0 // pred_fallthru
    _
  // Predicated region
  $region6: #{encoder_forward.22} parent=0 // pred_check
    _
  $region7: #{encoder_forward.22} parent=0 // pred_check_branch
    %14 = sbr.rel (0) target = $region9
  $region8: #{encoder_forward.22} parent=0 // pred_region
    _
  $region9: #{encoder_forward.22} parent=0 // pred_fallthru
    _
  // Predicated region
  $region10: #{encoder_forward.22} parent=0 // pred_check
    _
  $region11: #{encoder_forward.22} parent=0 // pred_check_branch
    %16 = sbr.rel (0) target = $region13
  $region12: #{encoder_forward.22} parent=0 // pred_region
    _
  $region13: #{encoder_forward.22} parent=0 // pred_fallthru
    _
  // Predicated region
  $region14: #{encoder_forward.22} parent=0 // pred_check
    _
  $region15: #{encoder_forward.22} parent=0 // pred_check_branch
    %18 = sbr.rel (0) target = $region17
  $region16: #{encoder_forward.22} parent=0 // pred_region
    _
  $region17: #{encoder_forward.22} parent=0 // pred_fallthru
    _
  // Predicated region
  $region18: #{encoder_forward.22} parent=0 // pred_check
    _
  $region19: #{encoder_forward.22} parent=0 // pred_check_branch
    %20 = sbr.rel (0) target = $region21
  $region20: #{encoder_forward.22} parent=0 // pred_region
    _
  $region21: #{encoder_forward.22} parent=0 // pred_fallthru
    _
  // Predicated region
  $region22: #{encoder_forward.22} parent=0 // pred_check
    _
  $region23: #{encoder_forward.22} parent=0 // pred_check_branch
    %22 = sbr.rel (0) target = $region25
  $region24: #{encoder_forward.22} parent=0 // pred_region
    _
  $region25: #{encoder_forward.22} parent=0 // pred_fallthru
    _
  %v23 = vld [vmem:[%s0] sm:$0xff]
  %v24 = vld [vmem:[%s0 + $0x8] sm:$0xff]
  %v25 = vld [vmem:[%s2] sm:$0xff]
  %v26 = vld [vmem:[%s2 + $0x8] sm:$0xff]
  %28 = vset.pattern.permute.xlu0 0
  %29 = vperm.xlu0 %28, %v25
  %v30 = vpop.permute.xlu0 %29
  %33 = vset.pattern.permute.xlu0 0
  %34 = vperm.xlu0 %33, %v26
  %v35 = vpop.permute.xlu0 %34
  %v37 = vmul.f32 %v23, %v30
  %v38 = vmul.f32 %v24, %v35
  %v39 = vld [vmem:[%s3] sm:$0xff]
  %v40 = vld [vmem:[%s3 + $0x8] sm:$0xff]
  %42 = vset.pattern.permute.xlu0 0
  %43 = vperm.xlu0 %42, %v39
  %v44 = vpop.permute.xlu0 %43
  %47 = vset.pattern.permute.xlu0 0
  %48 = vperm.xlu0 %47, %v40
  %v49 = vpop.permute.xlu0 %48
  %v51 = vadd.f32 %v37, %v44
  %v52 = vadd.f32 %v38, %v49
  %v53 = vld [vmem:[%s1] sm:$0xff]
  %v54 = vld [vmem:[%s1 + $0x8] sm:$0xff]
  %v55 = vld [vmem:[%s4] sm:$0xff]
  %v56 = vld [vmem:[%s4 + $0x8] sm:$0xff]
  %58 = vset.pattern.permute.xlu0 0
  %59 = vperm.xlu0 %58, %v55
  %v60 = vpop.permute.xlu0 %59
  %63 = vset.pattern.permute.xlu0 0
  %64 = vperm.xlu0 %63, %v56
  %v65 = vpop.permute.xlu0 %64
  %v67 = vmul.f32 %v53, %v60
  %v68 = vmul.f32 %v54, %v65
  %v69 = vld [vmem:[%s5] sm:$0xff]
  %v70 = vld [vmem:[%s5 + $0x8] sm:$0xff]
  %72 = vset.pattern.permute.xlu0 0
  %73 = vperm.xlu0 %72, %v69
  %v74 = vpop.permute.xlu0 %73
  %77 = vset.pattern.permute.xlu0 0
  %78 = vperm.xlu0 %77, %v70
  %v79 = vpop.permute.xlu0 %78
  %v81 = vadd.f32 %v67, %v74
  %v82 = vadd.f32 %v68, %v79
  %vm83 = vcmp.gt.f32.partialorder %v51, 0.0
  %vm84 = vcmp.gt.f32.partialorder %v52, 0.0
  %v85 = vmul.f32 %v51, 0.2
  %v86 = vmul.f32 %v52, 0.2
  %v87 = vsel %vm83, %v51, %v85
  %v88 = vsel %vm84, %v52, %v86
  %vm89 = vcmp.gt.f32.partialorder %v81, 0.0
  %vm90 = vcmp.gt.f32.partialorder %v82, 0.0
  %v91 = vmul.f32 %v81, 0.2
  %v92 = vmul.f32 %v82, 0.2
  %v93 = vsel %vm89, %v81, %v91
  %v94 = vsel %vm90, %v82, %v92
  %v95 = vadd.f32 %v87, %v93
  %v96 = vadd.f32 %v88, %v94
  %97 = vst [vmem:[%s6] sm:$0xff] %v95
  %98 = vst [vmem:[%s6 + $0x8] sm:$0xff] %v96
  // Predicated region
  $region26: #{encoder_forward.22} parent=0 // pred_check
    _
  $region27: #{encoder_forward.22} parent=0 // pred_check_branch
    %100 = sbr.rel (0) target = $region29
  $region28: #{encoder_forward.22} parent=0 // pred_region
    _
  $region29: #{encoder_forward.22} parent=0 // pred_fallthru
    _
  // Predicated region
  $region30: #{encoder_forward.22} parent=0 // pred_check
    _
  $region31: #{encoder_forward.22} parent=0 // pred_check_branch
    %102 = sbr.rel (0) target = $region33
  $region32: #{encoder_forward.22} parent=0 // pred_region
    _
  $region33: #{encoder_forward.22} parent=0 // pred_fallthru
    _

// kernel: encoder_forward.25
$region0: #{encoder_forward.25}
  #allocation0 [shape = 'u32[]', space=smem, size = 0x4, offset = 0x4, fixed_abs, tag = 'smem constant byte address 0x4 - core index']
  #allocation1 [shape = 'u32[144,128]{1,0:T(1,128)}', space=vmem, size = 0x12000, scoped, tag = 'internal scratch']
  %s0 = inlined_call_operand.vmem [shape: f32[16,128], index: 0, kind: input, shape index: {}]
  %s1 = inlined_call_operand.vmem [shape: f32[16,128], index: 1, kind: input, shape index: {}]
  %s2 = inlined_call_operand.vmem [shape: f32[16,128], index: 2, kind: input, shape index: {}]
  %s3 = inlined_call_operand.vmem [shape: f32[16,128], index: 3, kind: input, shape index: {}]
  %s4 = inlined_call_operand.vmem [shape: f32[16,1], index: 4, kind: input, shape index: {}]
  %s5 = inlined_call_operand.vmem [shape: f32[16,1], index: 5, kind: input, shape index: {}]
  %s6 = inlined_call_operand.vmem [shape: f32[16,1], index: 6, kind: input, shape index: {}]
  %s7 = inlined_call_operand.vmem [shape: f32[16,1], index: 7, kind: input, shape index: {}]
  %s8 = inlined_call_operand.vmem [shape: f32[16,128], index: 8, kind: output, shape index: {0}]
  %s9 = inlined_call_operand.vmem [shape: f32[16,128], index: 9, kind: output, shape index: {1}]
  %10 = xla_tuple %s8, %s9
  %s11 = sld [smem:[#allocation0]]
  $region50: #{encoder_forward.25} parent=0
    _
  %s13 = ssub.s32 1, %s11
  %s14 = scalar_select 0, %s13, %s11
  // Predicated region
  $region2: #{encoder_forward.25} parent=0 // pred_check
    _
  $region3: #{encoder_forward.25} parent=0 // pred_check_branch
    %16 = sbr.rel (0) target = $region5
  $region4: #{encoder_forward.25} parent=0 // pred_region
    _
  $region5: #{encoder_forward.25} parent=0 // pred_fallthru
    _
  // Predicated region
  $region6: #{encoder_forward.25} parent=0 // pred_check
    _
  $region7: #{encoder_forward.25} parent=0 // pred_check_branch
    %18 = sbr.rel (0) target = $region9
  $region8: #{encoder_forward.25} parent=0 // pred_region
    _
  $region9: #{encoder_forward.25} parent=0 // pred_fallthru
    _
  // Predicated region
  $region10: #{encoder_forward.25} parent=0 // pred_check
    _
  $region11: #{encoder_forward.25} parent=0 // pred_check_branch
    %20 = sbr.rel (0) target = $region13
  $region12: #{encoder_forward.25} parent=0 // pred_region
    _
  $region13: #{encoder_forward.25} parent=0 // pred_fallthru
    _
  // Predicated region
  $region14: #{encoder_forward.25} parent=0 // pred_check
    _
  $region15: #{encoder_forward.25} parent=0 // pred_check_branch
    %22 = sbr.rel (0) target = $region17
  $region16: #{encoder_forward.25} parent=0 // pred_region
    _
  $region17: #{encoder_forward.25} parent=0 // pred_fallthru
    _
  // Predicated region
  $region18: #{encoder_forward.25} parent=0 // pred_check
    _
  $region19: #{encoder_forward.25} parent=0 // pred_check_branch
    %24 = sbr.rel (0) target = $region21
  $region20: #{encoder_forward.25} parent=0 // pred_region
    _
  $region21: #{encoder_forward.25} parent=0 // pred_fallthru
    _
  // Predicated region
  $region22: #{encoder_forward.25} parent=0 // pred_check
    _
  $region23: #{encoder_forward.25} parent=0 // pred_check_branch
    %26 = sbr.rel (0) target = $region25
  $region24: #{encoder_forward.25} parent=0 // pred_region
    _
  $region25: #{encoder_forward.25} parent=0 // pred_fallthru
    _
  // Predicated region
  $region26: #{encoder_forward.25} parent=0 // pred_check
    _
  $region27: #{encoder_forward.25} parent=0 // pred_check_branch
    %28 = sbr.rel (0) target = $region29
  $region28: #{encoder_forward.25} parent=0 // pred_region
    _
  $region29: #{encoder_forward.25} parent=0 // pred_fallthru
    _
  // Predicated region
  $region30: #{encoder_forward.25} parent=0 // pred_check
    _
  $region31: #{encoder_forward.25} parent=0 // pred_check_branch
    %30 = sbr.rel (0) target = $region33
  $region32: #{encoder_forward.25} parent=0 // pred_region
    _
  $region33: #{encoder_forward.25} parent=0 // pred_fallthru
    _
  %v31 = vld [vmem:[%s0] sm:$0xff]
  %v32 = vld [vmem:[%s0 + $0x8] sm:$0xff]
  %v33 = vld [vmem:[%s4] sm:$0xff]
  %v34 = vld [vmem:[%s4 + $0x8] sm:$0xff]
  %36 = vset.pattern.permute.xlu0 0
  %37 = vperm.xlu0 %36, %v33
  %v38 = vpop.permute.xlu0 %37
  %41 = vset.pattern.permute.xlu0 0
  %42 = vperm.xlu0 %41, %v34
  %v43 = vpop.permute.xlu0 %42
  %v45 = vmul.f32 %v31, %v38
  %v46 = vmul.f32 %v32, %v43
  %v47 = vld [vmem:[%s5] sm:$0xff]
  %v48 = vld [vmem:[%s5 + $0x8] sm:$0xff]
  %50 = vset.pattern.permute.xlu0 0
  %51 = vperm.xlu0 %50, %v47
  %v52 = vpop.permute.xlu0 %51
  %55 = vset.pattern.permute.xlu0 0
  %56 = vperm.xlu0 %55, %v48
  %v57 = vpop.permute.xlu0 %56
  %v59 = vadd.f32 %v45, %v52
  %v60 = vadd.f32 %v46, %v57
  %v61 = vld [vmem:[%s1] sm:$0xff]
  %v62 = vld [vmem:[%s1 + $0x8] sm:$0xff]
  %v63 = vld [vmem:[%s6] sm:$0xff]
  %v64 = vld [vmem:[%s6 + $0x8] sm:$0xff]
  %66 = vset.pattern.permute.xlu0 0
  %67 = vperm.xlu0 %66, %v63
  %v68 = vpop.permute.xlu0 %67
  %71 = vset.pattern.permute.xlu0 0
  %72 = vperm.xlu0 %71, %v64
  %v73 = vpop.permute.xlu0 %72
  %v75 = vmul.f32 %v61, %v68
  %v76 = vmul.f32 %v62, %v73
  %v77 = vld [vmem:[%s7] sm:$0xff]
  %v78 = vld [vmem:[%s7 + $0x8] sm:$0xff]
  %80 = vset.pattern.permute.xlu0 0
  %81 = vperm.xlu0 %80, %v77
  %v82 = vpop.permute.xlu0 %81
  %85 = vset.pattern.permute.xlu0 0
  %86 = vperm.xlu0 %85, %v78
  %v87 = vpop.permute.xlu0 %86
  %v89 = vadd.f32 %v75, %v82
  %v90 = vadd.f32 %v76, %v87
  %v91 = vadd.f32 %v59, %v89
  %v92 = vadd.f32 %v60, %v90
  %93 = vst [vmem:[%s8] sm:$0xff] %v91
  %94 = vst [vmem:[%s8 + $0x8] sm:$0xff] %v92
  %v95 = vld [vmem:[%s2] sm:$0xff]
  %v96 = vld [vmem:[%s2 + $0x8] sm:$0xff]
  %v97 = vld [vmem:[%s3] sm:$0xff]
  %v98 = vld [vmem:[%s3 + $0x8] sm:$0xff]
  %v99 = vmul.f32 %v91, 1.442695
  %v100 = vpow.pop %v99
  %v101 = vmul.f32 %v92, 1.442695
  %v102 = vpow.pop %v101
  %v103 = vmul.f32 %v97, %v100
  %v104 = vmul.f32 %v98, %v102
  %v105 = vadd.f32 %v95, %v103
  %v106 = vadd.f32 %v96, %v104
  %107 = vst [vmem:[%s9] sm:$0xff] %v105
  %108 = vst [vmem:[%s9 + $0x8] sm:$0xff] %v106
  // Predicated region
  $region34: #{encoder_forward.25} parent=0 // pred_check
    _
  $region35: #{encoder_forward.25} parent=0 // pred_check_branch
    %110 = sbr.rel (0) target = $region37
  $region36: #{encoder_forward.25} parent=0 // pred_region
    _
  $region37: #{encoder_forward.25} parent=0 // pred_fallthru
    _
  // Predicated region
  $region38: #{encoder_forward.25} parent=0 // pred_check
    _
  $region39: #{encoder_forward.25} parent=0 // pred_check_branch
    %112 = sbr.rel (0) target = $region41
  $region40: #{encoder_forward.25} parent=0 // pred_region
    _
  $region41: #{encoder_forward.25} parent=0 // pred_fallthru
    _
  // Predicated region
  $region42: #{encoder_forward.25} parent=0 // pred_check
    _
  $region43: #{encoder_forward.25} parent=0 // pred_check_branch
    %114 = sbr.rel (0) target = $region45
  $region44: #{encoder_forward.25} parent=0 // pred_region
    _
  $region45: #{encoder_forward.25} parent=0 // pred_fallthru
    _
  // Predicated region
  $region46: #{encoder_forward.25} parent=0 // pred_check
    _
  $region47: #{encoder_forward.25} parent=0 // pred_check_branch
    %116 = sbr.rel (0) target = $region49
  $region48: #{encoder_forward.25} parent=0 // pred_region
    _
  $region49: #{encoder_forward.25} parent=0 // pred_fallthru
    _

</llo_original>
